<compile_context>
chip_gen: v7x
topology: tpu7x:2x2x1
jax: 0.10.0
libtpu: 0.0.40
codegen_flags: <defaults>
</compile_context>

<pallas_src>
import functools
import math

import jax
import jax.numpy as jnp
from jax.experimental import pallas as pl
from jax.experimental.pallas import tpu as pltpu


def _transformer_block_kernel(
    x_ref,        # (1, S, D)
    wq_ref,       # (H, D, Dh)   pre-transposed per head
    wk_ref,       # (H, D, Dh)
    wv_ref,       # (H, D, Dh)
    wo_ref,       # (H, Dh, D)   per-head slices of W_O, pre-transposed
    win_ref,      # (D, M)       W_in.T
    bin_ref,      # (1, M)
    wout_ref,     # (M, D)       W_out.T
    bout_ref,     # (1, D)
    o_ref,        # (1, S, D)
    *, num_heads: int, d_head: int, act_type: str):
    x = x_ref[0].astype(jnp.float32)                      # (S, D)
    s = x.shape[0]

    inv_sqrt_dh = jnp.float32(1.0 / math.sqrt(d_head))
    masked_fill = jnp.float32(-1e10) * inv_sqrt_dh        # tril zeroes, then -1e10, then /sqrt(Dh)

    # Causal mask (p <= q keeps the score).
    row = jax.lax.broadcasted_iota(jnp.int32, (s, s), 0)  # q index
    col = jax.lax.broadcasted_iota(jnp.int32, (s, s), 1)  # p index
    causal = col <= row

    attn_out = jnp.zeros(x.shape, jnp.float32)
    for i in range(num_heads):                            # small static head count -> unrolled
        q_i = jnp.dot(x, wq_ref[i], preferred_element_type=jnp.float32)   # (S, Dh)
        k_i = jnp.dot(x, wk_ref[i], preferred_element_type=jnp.float32)   # (S, Dh)
        v_i = jnp.dot(x, wv_ref[i], preferred_element_type=jnp.float32)   # (S, Dh)

        # scores[q, p] = sum_h q_i[q, h] * k_i[p, h]
        s_i = jax.lax.dot_general(q_i, k_i, (((1,), (1,)), ((), ())),
                                  preferred_element_type=jnp.float32)      # (S, S)
        s_i = jnp.where(causal, s_i * inv_sqrt_dh, masked_fill)

        # Row-wise softmax; reciprocal on the EUP, multiply on the VPU.
        m_i = jnp.max(s_i, axis=-1, keepdims=True)
        e_i = jnp.exp(s_i - m_i)
        p_i = e_i * pl.reciprocal(jnp.sum(e_i, axis=-1, keepdims=True), approx=False)

        z_i = jnp.dot(p_i, v_i, preferred_element_type=jnp.float32)        # (S, Dh)
        attn_out = attn_out + jnp.dot(z_i, wo_ref[i],
                                      preferred_element_type=jnp.float32)  # (S, D)

    r1 = x + attn_out                                                       # residual 1

    pre = jnp.dot(r1, win_ref[...], preferred_element_type=jnp.float32) + bin_ref[...]
    if act_type == "ReLU":
        h = jnp.maximum(pre, jnp.float32(0.0))
    else:  # GeLU — PyTorch F.gelu default is the exact erf form.
        h = jax.nn.gelu(pre, approximate=False)
    mlp_out = jnp.dot(h, wout_ref[...], preferred_element_type=jnp.float32) + bout_ref[...]

    o_ref[0] = (r1 + mlp_out).astype(o_ref.dtype)                           # residual 2


def transformer_block_pallas(x, W_Q, W_K, W_V, W_O, W_in, b_in, W_out, b_out,
                             *, act_type="ReLU"):
    """Fused TransformerBlock forward.

    x:     (B, S, d_model)
    W_Q/K/V: (num_heads, d_head, d_model)
    W_O:   (d_model, num_heads * d_head)
    W_in:  (d_mlp, d_model), b_in: (d_mlp,)
    W_out: (d_model, d_mlp), b_out: (d_model,)
    """
    B, S, D = x.shape
    H, Dh, _ = W_Q.shape
    M = W_in.shape[0]
    f32 = jnp.float32

    # Lane-dense, pre-transposed weight layouts (one-time wrapper-side plumbing).
    wq_h = jnp.transpose(W_Q, (0, 2, 1)).astype(f32)                     # (H, D, Dh)
    wk_h = jnp.transpose(W_K, (0, 2, 1)).astype(f32)                     # (H, D, Dh)
    wv_h = jnp.transpose(W_V, (0, 2, 1)).astype(f32)                     # (H, D, Dh)
    wo_h = jnp.transpose(W_O.reshape(D, H, Dh), (1, 2, 0)).astype(f32)   # (H, Dh, D)
    win_t = W_in.T.astype(f32)                                           # (D, M)
    wout_t = W_out.T.astype(f32)                                         # (M, D)
    b_in2 = b_in.reshape(1, M).astype(f32)
    b_out2 = b_out.reshape(1, D).astype(f32)

    kernel = functools.partial(_transformer_block_kernel,
                               num_heads=H, d_head=Dh, act_type=act_type)

    grid_spec = pltpu.PrefetchScalarGridSpec(
        num_scalar_prefetch=0,
        grid=(B,),   # one full-sequence block per step; "parallel" -> sharded across TCs (v7x)
        in_specs=[
            pl.BlockSpec((1, S, D), lambda b: (b, 0, 0)),     # x
            pl.BlockSpec((H, D, Dh), lambda b: (0, 0, 0)),    # W_Q (resident)
            pl.BlockSpec((H, D, Dh), lambda b: (0, 0, 0)),    # W_K
            pl.BlockSpec((H, D, Dh), lambda b: (0, 0, 0)),    # W_V
            pl.BlockSpec((H, Dh, D), lambda b: (0, 0, 0)),    # W_O
            pl.BlockSpec((D, M), lambda b: (0, 0)),           # W_in^T
            pl.BlockSpec((1, M), lambda b: (0, 0)),           # b_in
            pl.BlockSpec((M, D), lambda b: (0, 0)),           # W_out^T
            pl.BlockSpec((1, D), lambda b: (0, 0)),           # b_out
        ],
        out_specs=pl.BlockSpec((1, S, D), lambda b: (b, 0, 0)),
    )

    out = pl.pallas_call(
        kernel,
        out_shape=jax.ShapeDtypeStruct((B, S, D), x.dtype),
        grid_spec=grid_spec,
        compiler_params=pltpu.CompilerParams(
            dimension_semantics=("parallel",),
            vmem_limit_bytes=32 * 1024 * 1024,   # explicit; safe on v5e/v6e/v7x, footprint ~2 MiB
        ),
    )(x, wq_h, wk_h, wv_h, wo_h, win_t, b_in2, wout_t, b_out2)
    return out


def _reference_transformer_block(x, W_Q, W_K, W_V, W_O, W_in, b_in, W_out, b_out,
                                 *, act_type="ReLU"):
    """Pure-JAX reference mirroring the PyTorch forward exactly."""
    B, S, D = x.shape
    H, Dh, _ = W_Q.shape
    k = jnp.einsum('ihd,bpd->biph', W_K, x)
    q = jnp.einsum('ihd,bpd->biph', W_Q, x)
    v = jnp.einsum('ihd,bpd->biph', W_V, x)
    scores = jnp.einsum('biph,biqh->biqp', k, q)
    causal = jnp.tril(jnp.ones((S, S), jnp.float32))
    masked = scores * causal[None, None] - 1e10 * (1.0 - causal)[None, None]
    attn = jax.nn.softmax(masked / math.sqrt(Dh), axis=-1)
    z = jnp.einsum('biph,biqp->biqh', v, attn)                     # (B, H, S, Dh)
    z_flat = jnp.transpose(z, (0, 2, 1, 3)).reshape(B, S, H * Dh)  # 'b i q h -> b q (i h)'
    attn_out = jnp.einsum('df,bqf->bqd', W_O, z_flat)
    x1 = x + attn_out
    pre = jnp.einsum('md,bpd->bpm', W_in, x1) + b_in
    if act_type == "ReLU":
        h = jnp.maximum(pre, 0.0)
    else:
        h = jax.nn.gelu(pre, approximate=False)
    mlp_out = jnp.einsum('dm,bpm->bpd', W_out, h) + b_out
    return x1 + mlp_out


if __name__ == "__main__":
    # Small, TPU-friendly shapes consistent with the grokking transformer config.
    B, S = 4, 8                      # 4 grid steps -> 2 per TensorCore on v7x
    d_model, num_heads, d_head, d_mlp = 128, 4, 32, 512
    act_type = "ReLU"

    key = jax.random.PRNGKey(0)
    keys = jax.random.split(key, 9)
    scale = 1.0 / math.sqrt(d_model)

    x = jax.random.normal(keys[0], (B, S, d_model), jnp.float32)
    W_Q = jax.random.normal(keys[1], (num_heads, d_head, d_model), jnp.float32) * scale
    W_K = jax.random.normal(keys[2], (num_heads, d_head, d_model), jnp.float32) * scale
    W_V = jax.random.normal(keys[3], (num_heads, d_head, d_model), jnp.float32) * scale
    W_O = jax.random.normal(keys[4], (d_model, num_heads * d_head), jnp.float32) * scale
    W_in = jax.random.normal(keys[5], (d_mlp, d_model), jnp.float32) * scale
    W_out = jax.random.normal(keys[6], (d_model, d_mlp), jnp.float32) * scale
    # Module init is zeros; perturb slightly so the bias-add path is actually exercised.
    b_in = 0.01 * jax.random.normal(keys[7], (d_mlp,), jnp.float32)
    b_out = 0.01 * jax.random.normal(keys[8], (d_model,), jnp.float32)

    out = transformer_block_pallas(x, W_Q, W_K, W_V, W_O, W_in, b_in, W_out, b_out,
                                   act_type=act_type)
    out = jax.block_until_ready(out)

    ref = _reference_transformer_block(x, W_Q, W_K, W_V, W_O, W_in, b_in, W_out, b_out,
                                       act_type=act_type)
    assert out.shape == x.shape and out.dtype == x.dtype
    max_err = float(jnp.max(jnp.abs(out - ref)))
    assert jnp.allclose(out, ref, atol=1e-4, rtol=1e-4), f"mismatch vs reference, max_err={max_err}"

    # TODO(synk): HookPoint fwd/bwd hooks are Python-level side effects (identity in forward);
    # they are not representable inside the fused Pallas kernel.

    print("KERNEL_OK")
</pallas_src>

<mosaic_0001>
module attributes {stable_mosaic.version = 11 : i64} {
  func.func @_transformer_block_kernel(%arg0: i32, %arg1: memref<1x8x128xf32, #tpu.memory_space<vmem>>, %arg2: memref<4x128x32xf32, #tpu.memory_space<vmem>>, %arg3: memref<4x128x32xf32, #tpu.memory_space<vmem>>, %arg4: memref<4x128x32xf32, #tpu.memory_space<vmem>>, %arg5: memref<4x32x128xf32, #tpu.memory_space<vmem>>, %arg6: memref<128x512xf32, #tpu.memory_space<vmem>>, %arg7: memref<1x512xf32, #tpu.memory_space<vmem>>, %arg8: memref<512x128xf32, #tpu.memory_space<vmem>>, %arg9: memref<1x128xf32, #tpu.memory_space<vmem>>, %arg10: memref<1x8x128xf32, #tpu.memory_space<vmem>>) attributes {dimension_semantics = [#tpu.dimension_semantics<parallel>], iteration_bounds = array<i64: 4>, scalar_prefetch = 0 : i64, scratch_operands = 0 : i64, tpu.core_type = #tpu.core_type<tc>, window_params = [{transform_indices = @transform_0, window_bounds = array<i64: 1, 8, 128>}, {pipeline_mode = #tpu.pipeline_mode<synchronous>, transform_indices = @transform_1, window_bounds = array<i64: 4, 128, 32>}, {pipeline_mode = #tpu.pipeline_mode<synchronous>, transform_indices = @transform_2, window_bounds = array<i64: 4, 128, 32>}, {pipeline_mode = #tpu.pipeline_mode<synchronous>, transform_indices = @transform_3, window_bounds = array<i64: 4, 128, 32>}, {pipeline_mode = #tpu.pipeline_mode<synchronous>, transform_indices = @transform_4, window_bounds = array<i64: 4, 32, 128>}, {pipeline_mode = #tpu.pipeline_mode<synchronous>, transform_indices = @transform_5, window_bounds = array<i64: 128, 512>}, {pipeline_mode = #tpu.pipeline_mode<synchronous>, transform_indices = @transform_6, window_bounds = array<i64: 1, 512>}, {pipeline_mode = #tpu.pipeline_mode<synchronous>, transform_indices = @transform_7, window_bounds = array<i64: 512, 128>}, {pipeline_mode = #tpu.pipeline_mode<synchronous>, transform_indices = @transform_8, window_bounds = array<i64: 1, 128>}, {transform_indices = @transform_9, window_bounds = array<i64: 1, 8, 128>}]} {
    %c0 = arith.constant 0 : index
    %c0_0 = arith.constant 0 : index
    %c0_1 = arith.constant 0 : index
    %0 = vector.load %arg1[%c0, %c0_0, %c0_1] : memref<1x8x128xf32, #tpu.memory_space<vmem>>, vector<1x8x128xf32>
    %1 = vector.shape_cast %0 : vector<1x8x128xf32> to vector<8x128xf32>
    %cst = arith.constant -1.000000e+10 : f32
    %cst_2 = arith.constant 0.176776692 : f32
    %2 = arith.mulf %cst, %cst_2 : f32
    %3 = tpu.iota {dimensions = array<i32: 0>} : vector<8x8xi32>
    %4 = tpu.iota {dimensions = array<i32: 1>} : vector<8x8xi32>
    %5 = arith.cmpi sle, %4, %3 : vector<8x8xi32>
    %cst_3 = arith.constant 0.000000e+00 : f32
    %6 = vector.broadcast %cst_3 : f32 to vector<8x128xf32>
    %c0_4 = arith.constant 0 : index
    %c0_5 = arith.constant 0 : index
    %c0_6 = arith.constant 0 : index
    %7 = vector.load %arg2[%c0_4, %c0_5, %c0_6] : memref<4x128x32xf32, #tpu.memory_space<vmem>>, vector<1x128x32xf32>
    %8 = vector.shape_cast %7 : vector<1x128x32xf32> to vector<128x32xf32>
    %cst_7 = arith.constant dense<0.000000e+00> : vector<8x32xf32>
    %9 = tpu.matmul %1, %8, %cst_7 {dimension_numbers = #tpu.dot_dimension_numbers<[1], [0], [0], [1], [0, 0, 1, 1], [], []>} : vector<8x128xf32>, vector<128x32xf32>, vector<8x32xf32> -> vector<8x32xf32>
    %c0_8 = arith.constant 0 : index
    %c0_9 = arith.constant 0 : index
    %c0_10 = arith.constant 0 : index
    %10 = vector.load %arg3[%c0_8, %c0_9, %c0_10] : memref<4x128x32xf32, #tpu.memory_space<vmem>>, vector<1x128x32xf32>
    %11 = vector.shape_cast %10 : vector<1x128x32xf32> to vector<128x32xf32>
    %cst_11 = arith.constant dense<0.000000e+00> : vector<8x32xf32>
    %12 = tpu.matmul %1, %11, %cst_11 {dimension_numbers = #tpu.dot_dimension_numbers<[1], [0], [0], [1], [0, 0, 1, 1], [], []>} : vector<8x128xf32>, vector<128x32xf32>, vector<8x32xf32> -> vector<8x32xf32>
    %c0_12 = arith.constant 0 : index
    %c0_13 = arith.constant 0 : index
    %c0_14 = arith.constant 0 : index
    %13 = vector.load %arg4[%c0_12, %c0_13, %c0_14] : memref<4x128x32xf32, #tpu.memory_space<vmem>>, vector<1x128x32xf32>
    %14 = vector.shape_cast %13 : vector<1x128x32xf32> to vector<128x32xf32>
    %cst_15 = arith.constant dense<0.000000e+00> : vector<8x32xf32>
    %15 = tpu.matmul %1, %14, %cst_15 {dimension_numbers = #tpu.dot_dimension_numbers<[1], [0], [0], [1], [0, 0, 1, 1], [], []>} : vector<8x128xf32>, vector<128x32xf32>, vector<8x32xf32> -> vector<8x32xf32>
    %cst_16 = arith.constant dense<0.000000e+00> : vector<8x8xf32>
    %16 = tpu.matmul %9, %12, %cst_16 {dimension_numbers = #tpu.dot_dimension_numbers<[1], [1], [0], [0], [0, 0, 1, 0], [], []>} : vector<8x32xf32>, vector<8x32xf32>, vector<8x8xf32> -> vector<8x8xf32>
    %cst_17 = arith.constant 0.176776692 : f32
    %17 = vector.broadcast %cst_17 : f32 to vector<8x8xf32>
    %18 = arith.mulf %16, %17 : vector<8x8xf32>
    %19 = vector.broadcast %2 : f32 to vector<8x8xf32>
    %20 = arith.select %5, %18, %19 : vector<8x8xi1>, vector<8x8xf32>
    %cst_18 = arith.constant dense<0xFF800000> : vector<8xf32>
    %21 = vector.multi_reduction <maximumf>, %20, %cst_18 [1] : vector<8x8xf32> to vector<8xf32>
    %22 = vector.shape_cast %21 : vector<8xf32> to vector<8x1xf32>
    %23 = vector.broadcast %22 : vector<8x1xf32> to vector<8x8xf32>
    %24 = arith.subf %20, %23 : vector<8x8xf32>
    %25 = math.exp %24 : vector<8x8xf32>
    %cst_19 = arith.constant dense<0.000000e+00> : vector<8xf32>
    %26 = vector.multi_reduction <add>, %25, %cst_19 [1] : vector<8x8xf32> to vector<8xf32>
    %27 = vector.shape_cast %26 : vector<8xf32> to vector<8x1xf32>
    %28 = tpu.reciprocal %27 : vector<8x1xf32> -> vector<8x1xf32>
    %29 = vector.broadcast %28 : vector<8x1xf32> to vector<8x8xf32>
    %30 = arith.mulf %25, %29 : vector<8x8xf32>
    %cst_20 = arith.constant dense<0.000000e+00> : vector<8x32xf32>
    %31 = tpu.matmul %30, %15, %cst_20 {dimension_numbers = #tpu.dot_dimension_numbers<[1], [0], [0], [1], [0, 0, 1, 1], [], []>} : vector<8x8xf32>, vector<8x32xf32>, vector<8x32xf32> -> vector<8x32xf32>
    %c0_21 = arith.constant 0 : index
    %c0_22 = arith.constant 0 : index
    %c0_23 = arith.constant 0 : index
    %32 = vector.load %arg5[%c0_21, %c0_22, %c0_23] : memref<4x32x128xf32, #tpu.memory_space<vmem>>, vector<1x32x128xf32>
    %33 = vector.shape_cast %32 : vector<1x32x128xf32> to vector<32x128xf32>
    %cst_24 = arith.constant dense<0.000000e+00> : vector<8x128xf32>
    %34 = tpu.matmul %31, %33, %cst_24 {dimension_numbers = #tpu.dot_dimension_numbers<[1], [0], [0], [1], [0, 0, 1, 1], [], []>} : vector<8x32xf32>, vector<32x128xf32>, vector<8x128xf32> -> vector<8x128xf32>
    %35 = arith.addf %6, %34 : vector<8x128xf32>
    %c1 = arith.constant 1 : index
    %c0_25 = arith.constant 0 : index
    %c0_26 = arith.constant 0 : index
    %36 = vector.load %arg2[%c1, %c0_25, %c0_26] : memref<4x128x32xf32, #tpu.memory_space<vmem>>, vector<1x128x32xf32>
    %37 = vector.shape_cast %36 : vector<1x128x32xf32> to vector<128x32xf32>
    %cst_27 = arith.constant dense<0.000000e+00> : vector<8x32xf32>
    %38 = tpu.matmul %1, %37, %cst_27 {dimension_numbers = #tpu.dot_dimension_numbers<[1], [0], [0], [1], [0, 0, 1, 1], [], []>} : vector<8x128xf32>, vector<128x32xf32>, vector<8x32xf32> -> vector<8x32xf32>
    %c1_28 = arith.constant 1 : index
    %c0_29 = arith.constant 0 : index
    %c0_30 = arith.constant 0 : index
    %39 = vector.load %arg3[%c1_28, %c0_29, %c0_30] : memref<4x128x32xf32, #tpu.memory_space<vmem>>, vector<1x128x32xf32>
    %40 = vector.shape_cast %39 : vector<1x128x32xf32> to vector<128x32xf32>
    %cst_31 = arith.constant dense<0.000000e+00> : vector<8x32xf32>
    %41 = tpu.matmul %1, %40, %cst_31 {dimension_numbers = #tpu.dot_dimension_numbers<[1], [0], [0], [1], [0, 0, 1, 1], [], []>} : vector<8x128xf32>, vector<128x32xf32>, vector<8x32xf32> -> vector<8x32xf32>
    %c1_32 = arith.constant 1 : index
    %c0_33 = arith.constant 0 : index
    %c0_34 = arith.constant 0 : index
    %42 = vector.load %arg4[%c1_32, %c0_33, %c0_34] : memref<4x128x32xf32, #tpu.memory_space<vmem>>, vector<1x128x32xf32>
    %43 = vector.shape_cast %42 : vector<1x128x32xf32> to vector<128x32xf32>
    %cst_35 = arith.constant dense<0.000000e+00> : vector<8x32xf32>
    %44 = tpu.matmul %1, %43, %cst_35 {dimension_numbers = #tpu.dot_dimension_numbers<[1], [0], [0], [1], [0, 0, 1, 1], [], []>} : vector<8x128xf32>, vector<128x32xf32>, vector<8x32xf32> -> vector<8x32xf32>
    %cst_36 = arith.constant dense<0.000000e+00> : vector<8x8xf32>
    %45 = tpu.matmul %38, %41, %cst_36 {dimension_numbers = #tpu.dot_dimension_numbers<[1], [1], [0], [0], [0, 0, 1, 0], [], []>} : vector<8x32xf32>, vector<8x32xf32>, vector<8x8xf32> -> vector<8x8xf32>
    %cst_37 = arith.constant 0.176776692 : f32
    %46 = vector.broadcast %cst_37 : f32 to vector<8x8xf32>
    %47 = arith.mulf %45, %46 : vector<8x8xf32>
    %48 = vector.broadcast %2 : f32 to vector<8x8xf32>
    %49 = arith.select %5, %47, %48 : vector<8x8xi1>, vector<8x8xf32>
    %cst_38 = arith.constant dense<0xFF800000> : vector<8xf32>
    %50 = vector.multi_reduction <maximumf>, %49, %cst_38 [1] : vector<8x8xf32> to vector<8xf32>
    %51 = vector.shape_cast %50 : vector<8xf32> to vector<8x1xf32>
    %52 = vector.broadcast %51 : vector<8x1xf32> to vector<8x8xf32>
    %53 = arith.subf %49, %52 : vector<8x8xf32>
    %54 = math.exp %53 : vector<8x8xf32>
    %cst_39 = arith.constant dense<0.000000e+00> : vector<8xf32>
    %55 = vector.multi_reduction <add>, %54, %cst_39 [1] : vector<8x8xf32> to vector<8xf32>
    %56 = vector.shape_cast %55 : vector<8xf32> to vector<8x1xf32>
    %57 = tpu.reciprocal %56 : vector<8x1xf32> -> vector<8x1xf32>
    %58 = vector.broadcast %57 : vector<8x1xf32> to vector<8x8xf32>
    %59 = arith.mulf %54, %58 : vector<8x8xf32>
    %cst_40 = arith.constant dense<0.000000e+00> : vector<8x32xf32>
    %60 = tpu.matmul %59, %44, %cst_40 {dimension_numbers = #tpu.dot_dimension_numbers<[1], [0], [0], [1], [0, 0, 1, 1], [], []>} : vector<8x8xf32>, vector<8x32xf32>, vector<8x32xf32> -> vector<8x32xf32>
    %c1_41 = arith.constant 1 : index
    %c0_42 = arith.constant 0 : index
    %c0_43 = arith.constant 0 : index
    %61 = vector.load %arg5[%c1_41, %c0_42, %c0_43] : memref<4x32x128xf32, #tpu.memory_space<vmem>>, vector<1x32x128xf32>
    %62 = vector.shape_cast %61 : vector<1x32x128xf32> to vector<32x128xf32>
    %cst_44 = arith.constant dense<0.000000e+00> : vector<8x128xf32>
    %63 = tpu.matmul %60, %62, %cst_44 {dimension_numbers = #tpu.dot_dimension_numbers<[1], [0], [0], [1], [0, 0, 1, 1], [], []>} : vector<8x32xf32>, vector<32x128xf32>, vector<8x128xf32> -> vector<8x128xf32>
    %64 = arith.addf %35, %63 : vector<8x128xf32>
    %c2 = arith.constant 2 : index
    %c0_45 = arith.constant 0 : index
    %c0_46 = arith.constant 0 : index
    %65 = vector.load %arg2[%c2, %c0_45, %c0_46] : memref<4x128x32xf32, #tpu.memory_space<vmem>>, vector<1x128x32xf32>
    %66 = vector.shape_cast %65 : vector<1x128x32xf32> to vector<128x32xf32>
    %cst_47 = arith.constant dense<0.000000e+00> : vector<8x32xf32>
    %67 = tpu.matmul %1, %66, %cst_47 {dimension_numbers = #tpu.dot_dimension_numbers<[1], [0], [0], [1], [0, 0, 1, 1], [], []>} : vector<8x128xf32>, vector<128x32xf32>, vector<8x32xf32> -> vector<8x32xf32>
    %c2_48 = arith.constant 2 : index
    %c0_49 = arith.constant 0 : index
    %c0_50 = arith.constant 0 : index
    %68 = vector.load %arg3[%c2_48, %c0_49, %c0_50] : memref<4x128x32xf32, #tpu.memory_space<vmem>>, vector<1x128x32xf32>
    %69 = vector.shape_cast %68 : vector<1x128x32xf32> to vector<128x32xf32>
    %cst_51 = arith.constant dense<0.000000e+00> : vector<8x32xf32>
    %70 = tpu.matmul %1, %69, %cst_51 {dimension_numbers = #tpu.dot_dimension_numbers<[1], [0], [0], [1], [0, 0, 1, 1], [], []>} : vector<8x128xf32>, vector<128x32xf32>, vector<8x32xf32> -> vector<8x32xf32>
    %c2_52 = arith.constant 2 : index
    %c0_53 = arith.constant 0 : index
    %c0_54 = arith.constant 0 : index
    %71 = vector.load %arg4[%c2_52, %c0_53, %c0_54] : memref<4x128x32xf32, #tpu.memory_space<vmem>>, vector<1x128x32xf32>
    %72 = vector.shape_cast %71 : vector<1x128x32xf32> to vector<128x32xf32>
    %cst_55 = arith.constant dense<0.000000e+00> : vector<8x32xf32>
    %73 = tpu.matmul %1, %72, %cst_55 {dimension_numbers = #tpu.dot_dimension_numbers<[1], [0], [0], [1], [0, 0, 1, 1], [], []>} : vector<8x128xf32>, vector<128x32xf32>, vector<8x32xf32> -> vector<8x32xf32>
    %cst_56 = arith.constant dense<0.000000e+00> : vector<8x8xf32>
    %74 = tpu.matmul %67, %70, %cst_56 {dimension_numbers = #tpu.dot_dimension_numbers<[1], [1], [0], [0], [0, 0, 1, 0], [], []>} : vector<8x32xf32>, vector<8x32xf32>, vector<8x8xf32> -> vector<8x8xf32>
    %cst_57 = arith.constant 0.176776692 : f32
    %75 = vector.broadcast %cst_57 : f32 to vector<8x8xf32>
    %76 = arith.mulf %74, %75 : vector<8x8xf32>
    %77 = vector.broadcast %2 : f32 to vector<8x8xf32>
    %78 = arith.select %5, %76, %77 : vector<8x8xi1>, vector<8x8xf32>
    %cst_58 = arith.constant dense<0xFF800000> : vector<8xf32>
    %79 = vector.multi_reduction <maximumf>, %78, %cst_58 [1] : vector<8x8xf32> to vector<8xf32>
    %80 = vector.shape_cast %79 : vector<8xf32> to vector<8x1xf32>
    %81 = vector.broadcast %80 : vector<8x1xf32> to vector<8x8xf32>
    %82 = arith.subf %78, %81 : vector<8x8xf32>
    %83 = math.exp %82 : vector<8x8xf32>
    %cst_59 = arith.constant dense<0.000000e+00> : vector<8xf32>
    %84 = vector.multi_reduction <add>, %83, %cst_59 [1] : vector<8x8xf32> to vector<8xf32>
    %85 = vector.shape_cast %84 : vector<8xf32> to vector<8x1xf32>
    %86 = tpu.reciprocal %85 : vector<8x1xf32> -> vector<8x1xf32>
    %87 = vector.broadcast %86 : vector<8x1xf32> to vector<8x8xf32>
    %88 = arith.mulf %83, %87 : vector<8x8xf32>
    %cst_60 = arith.constant dense<0.000000e+00> : vector<8x32xf32>
    %89 = tpu.matmul %88, %73, %cst_60 {dimension_numbers = #tpu.dot_dimension_numbers<[1], [0], [0], [1], [0, 0, 1, 1], [], []>} : vector<8x8xf32>, vector<8x32xf32>, vector<8x32xf32> -> vector<8x32xf32>
    %c2_61 = arith.constant 2 : index
    %c0_62 = arith.constant 0 : index
    %c0_63 = arith.constant 0 : index
    %90 = vector.load %arg5[%c2_61, %c0_62, %c0_63] : memref<4x32x128xf32, #tpu.memory_space<vmem>>, vector<1x32x128xf32>
    %91 = vector.shape_cast %90 : vector<1x32x128xf32> to vector<32x128xf32>
    %cst_64 = arith.constant dense<0.000000e+00> : vector<8x128xf32>
    %92 = tpu.matmul %89, %91, %cst_64 {dimension_numbers = #tpu.dot_dimension_numbers<[1], [0], [0], [1], [0, 0, 1, 1], [], []>} : vector<8x32xf32>, vector<32x128xf32>, vector<8x128xf32> -> vector<8x128xf32>
    %93 = arith.addf %64, %92 : vector<8x128xf32>
    %c3 = arith.constant 3 : index
    %c0_65 = arith.constant 0 : index
    %c0_66 = arith.constant 0 : index
    %94 = vector.load %arg2[%c3, %c0_65, %c0_66] : memref<4x128x32xf32, #tpu.memory_space<vmem>>, vector<1x128x32xf32>
    %95 = vector.shape_cast %94 : vector<1x128x32xf32> to vector<128x32xf32>
    %cst_67 = arith.constant dense<0.000000e+00> : vector<8x32xf32>
    %96 = tpu.matmul %1, %95, %cst_67 {dimension_numbers = #tpu.dot_dimension_numbers<[1], [0], [0], [1], [0, 0, 1, 1], [], []>} : vector<8x128xf32>, vector<128x32xf32>, vector<8x32xf32> -> vector<8x32xf32>
    %c3_68 = arith.constant 3 : index
    %c0_69 = arith.constant 0 : index
    %c0_70 = arith.constant 0 : index
    %97 = vector.load %arg3[%c3_68, %c0_69, %c0_70] : memref<4x128x32xf32, #tpu.memory_space<vmem>>, vector<1x128x32xf32>
    %98 = vector.shape_cast %97 : vector<1x128x32xf32> to vector<128x32xf32>
    %cst_71 = arith.constant dense<0.000000e+00> : vector<8x32xf32>
    %99 = tpu.matmul %1, %98, %cst_71 {dimension_numbers = #tpu.dot_dimension_numbers<[1], [0], [0], [1], [0, 0, 1, 1], [], []>} : vector<8x128xf32>, vector<128x32xf32>, vector<8x32xf32> -> vector<8x32xf32>
    %c3_72 = arith.constant 3 : index
    %c0_73 = arith.constant 0 : index
    %c0_74 = arith.constant 0 : index
    %100 = vector.load %arg4[%c3_72, %c0_73, %c0_74] : memref<4x128x32xf32, #tpu.memory_space<vmem>>, vector<1x128x32xf32>
    %101 = vector.shape_cast %100 : vector<1x128x32xf32> to vector<128x32xf32>
    %cst_75 = arith.constant dense<0.000000e+00> : vector<8x32xf32>
    %102 = tpu.matmul %1, %101, %cst_75 {dimension_numbers = #tpu.dot_dimension_numbers<[1], [0], [0], [1], [0, 0, 1, 1], [], []>} : vector<8x128xf32>, vector<128x32xf32>, vector<8x32xf32> -> vector<8x32xf32>
    %cst_76 = arith.constant dense<0.000000e+00> : vector<8x8xf32>
    %103 = tpu.matmul %96, %99, %cst_76 {dimension_numbers = #tpu.dot_dimension_numbers<[1], [1], [0], [0], [0, 0, 1, 0], [], []>} : vector<8x32xf32>, vector<8x32xf32>, vector<8x8xf32> -> vector<8x8xf32>
    %cst_77 = arith.constant 0.176776692 : f32
    %104 = vector.broadcast %cst_77 : f32 to vector<8x8xf32>
    %105 = arith.mulf %103, %104 : vector<8x8xf32>
    %106 = vector.broadcast %2 : f32 to vector<8x8xf32>
    %107 = arith.select %5, %105, %106 : vector<8x8xi1>, vector<8x8xf32>
    %cst_78 = arith.constant dense<0xFF800000> : vector<8xf32>
    %108 = vector.multi_reduction <maximumf>, %107, %cst_78 [1] : vector<8x8xf32> to vector<8xf32>
    %109 = vector.shape_cast %108 : vector<8xf32> to vector<8x1xf32>
    %110 = vector.broadcast %109 : vector<8x1xf32> to vector<8x8xf32>
    %111 = arith.subf %107, %110 : vector<8x8xf32>
    %112 = math.exp %111 : vector<8x8xf32>
    %cst_79 = arith.constant dense<0.000000e+00> : vector<8xf32>
    %113 = vector.multi_reduction <add>, %112, %cst_79 [1] : vector<8x8xf32> to vector<8xf32>
    %114 = vector.shape_cast %113 : vector<8xf32> to vector<8x1xf32>
    %115 = tpu.reciprocal %114 : vector<8x1xf32> -> vector<8x1xf32>
    %116 = vector.broadcast %115 : vector<8x1xf32> to vector<8x8xf32>
    %117 = arith.mulf %112, %116 : vector<8x8xf32>
    %cst_80 = arith.constant dense<0.000000e+00> : vector<8x32xf32>
    %118 = tpu.matmul %117, %102, %cst_80 {dimension_numbers = #tpu.dot_dimension_numbers<[1], [0], [0], [1], [0, 0, 1, 1], [], []>} : vector<8x8xf32>, vector<8x32xf32>, vector<8x32xf32> -> vector<8x32xf32>
    %c3_81 = arith.constant 3 : index
    %c0_82 = arith.constant 0 : index
    %c0_83 = arith.constant 0 : index
    %119 = vector.load %arg5[%c3_81, %c0_82, %c0_83] : memref<4x32x128xf32, #tpu.memory_space<vmem>>, vector<1x32x128xf32>
    %120 = vector.shape_cast %119 : vector<1x32x128xf32> to vector<32x128xf32>
    %cst_84 = arith.constant dense<0.000000e+00> : vector<8x128xf32>
    %121 = tpu.matmul %118, %120, %cst_84 {dimension_numbers = #tpu.dot_dimension_numbers<[1], [0], [0], [1], [0, 0, 1, 1], [], []>} : vector<8x32xf32>, vector<32x128xf32>, vector<8x128xf32> -> vector<8x128xf32>
    %122 = arith.addf %93, %121 : vector<8x128xf32>
    %123 = arith.addf %1, %122 : vector<8x128xf32>
    %c0_85 = arith.constant 0 : index
    %c0_86 = arith.constant 0 : index
    %124 = vector.load %arg6[%c0_85, %c0_86] : memref<128x512xf32, #tpu.memory_space<vmem>>, vector<128x512xf32>
    %cst_87 = arith.constant dense<0.000000e+00> : vector<8x512xf32>
    %125 = tpu.matmul %123, %124, %cst_87 {dimension_numbers = #tpu.dot_dimension_numbers<[1], [0], [0], [1], [0, 0, 1, 1], [], []>} : vector<8x128xf32>, vector<128x512xf32>, vector<8x512xf32> -> vector<8x512xf32>
    %c0_88 = arith.constant 0 : index
    %c0_89 = arith.constant 0 : index
    %126 = vector.load %arg7[%c0_88, %c0_89] : memref<1x512xf32, #tpu.memory_space<vmem>>, vector<1x512xf32>
    %127 = vector.broadcast %126 : vector<1x512xf32> to vector<8x512xf32>
    %128 = arith.addf %125, %127 : vector<8x512xf32>
    %cst_90 = arith.constant 0.000000e+00 : f32
    %129 = vector.broadcast %cst_90 : f32 to vector<8x512xf32>
    %130 = arith.maximumf %128, %129 : vector<8x512xf32>
    %c0_91 = arith.constant 0 : index
    %c0_92 = arith.constant 0 : index
    %131 = vector.load %arg8[%c0_91, %c0_92] : memref<512x128xf32, #tpu.memory_space<vmem>>, vector<512x128xf32>
    %cst_93 = arith.constant dense<0.000000e+00> : vector<8x128xf32>
    %132 = tpu.matmul %130, %131, %cst_93 {dimension_numbers = #tpu.dot_dimension_numbers<[1], [0], [0], [1], [0, 0, 1, 1], [], []>} : vector<8x512xf32>, vector<512x128xf32>, vector<8x128xf32> -> vector<8x128xf32>
    %c0_94 = arith.constant 0 : index
    %c0_95 = arith.constant 0 : index
    %133 = vector.load %arg9[%c0_94, %c0_95] : memref<1x128xf32, #tpu.memory_space<vmem>>, vector<1x128xf32>
    %134 = vector.broadcast %133 : vector<1x128xf32> to vector<8x128xf32>
    %135 = arith.addf %132, %134 : vector<8x128xf32>
    %136 = arith.addf %123, %135 : vector<8x128xf32>
    %c0_96 = arith.constant 0 : index
    %c0_97 = arith.constant 0 : index
    %c0_98 = arith.constant 0 : index
    %137 = vector.load %arg10[%c0_96, %c0_97, %c0_98] : memref<1x8x128xf32, #tpu.memory_space<vmem>>, vector<1x8x128xf32>
    %138 = vector.shape_cast %137 : vector<1x8x128xf32> to vector<8x128xf32>
    %139 = vector.shape_cast %136 : vector<8x128xf32> to vector<1x8x128xf32>
    tpu.vector_store %arg10[%c0_96, %c0_97, %c0_98], %139 {strides = array<i32>} : memref<1x8x128xf32, #tpu.memory_space<vmem>>, vector<1x8x128xf32>,
    return
  }
  func.func @transform_0(%arg0: i32) -> (i32, i32, i32) {
    %c0_i32 = arith.constant 0 : i32
    %c0_i32_0 = arith.constant 0 : i32
    %c0_i32_1 = arith.constant 0 : i32
    return %arg0, %c0_i32, %c0_i32_0 : i32, i32, i32
  }
  func.func @transform_1(%arg0: i32) -> (i32, i32, i32) {
    %c0_i32 = arith.constant 0 : i32
    %c0_i32_0 = arith.constant 0 : i32
    %c0_i32_1 = arith.constant 0 : i32
    %c0_i32_2 = arith.constant 0 : i32
    return %c0_i32, %c0_i32_0, %c0_i32_1 : i32, i32, i32
  }
  func.func @transform_2(%arg0: i32) -> (i32, i32, i32) {
    %c0_i32 = arith.constant 0 : i32
    %c0_i32_0 = arith.constant 0 : i32
    %c0_i32_1 = arith.constant 0 : i32
    %c0_i32_2 = arith.constant 0 : i32
    return %c0_i32, %c0_i32_0, %c0_i32_1 : i32, i32, i32
  }
  func.func @transform_3(%arg0: i32) -> (i32, i32, i32) {
    %c0_i32 = arith.constant 0 : i32
    %c0_i32_0 = arith.constant 0 : i32
    %c0_i32_1 = arith.constant 0 : i32
    %c0_i32_2 = arith.constant 0 : i32
    return %c0_i32, %c0_i32_0, %c0_i32_1 : i32, i32, i32
  }
  func.func @transform_4(%arg0: i32) -> (i32, i32, i32) {
    %c0_i32 = arith.constant 0 : i32
    %c0_i32_0 = arith.constant 0 : i32
    %c0_i32_1 = arith.constant 0 : i32
    %c0_i32_2 = arith.constant 0 : i32
    return %c0_i32, %c0_i32_0, %c0_i32_1 : i32, i32, i32
  }
  func.func @transform_5(%arg0: i32) -> (i32, i32) {
    %c0_i32 = arith.constant 0 : i32
    %c0_i32_0 = arith.constant 0 : i32
    %c0_i32_1 = arith.constant 0 : i32
    return %c0_i32, %c0_i32_0 : i32, i32
  }
  func.func @transform_6(%arg0: i32) -> (i32, i32) {
    %c0_i32 = arith.constant 0 : i32
    %c0_i32_0 = arith.constant 0 : i32
    %c0_i32_1 = arith.constant 0 : i32
    return %c0_i32, %c0_i32_0 : i32, i32
  }
  func.func @transform_7(%arg0: i32) -> (i32, i32) {
    %c0_i32 = arith.constant 0 : i32
    %c0_i32_0 = arith.constant 0 : i32
    %c0_i32_1 = arith.constant 0 : i32
    return %c0_i32, %c0_i32_0 : i32, i32
  }
  func.func @transform_8(%arg0: i32) -> (i32, i32) {
    %c0_i32 = arith.constant 0 : i32
    %c0_i32_0 = arith.constant 0 : i32
    %c0_i32_1 = arith.constant 0 : i32
    return %c0_i32, %c0_i32_0 : i32, i32
  }
  func.func @transform_9(%arg0: i32) -> (i32, i32, i32) {
    %c0_i32 = arith.constant 0 : i32
    %c0_i32_0 = arith.constant 0 : i32
    %c0_i32_1 = arith.constant 0 : i32
    return %arg0, %c0_i32, %c0_i32_0 : i32, i32, i32
  }
}

</mosaic_0001>

<llo_original>
// kernel: tpu_custom_call.1
$region0: #{tpu_custom_call.1}
  #allocation0 [shape = 'u32[]', space=smem, size = 0x4, offset = 0x4, fixed_abs, tag = 'smem constant byte address 0x4 - core index']
  #allocation1 [shape = 'u32[144,128]{1,0:T(1,128)}', space=vmem, size = 0x12000, scoped, tag = 'internal scratch']
  %s0 = inlined_call_operand.vmem [shape: f32[4,8,128], index: 0, kind: input, shape index: {}]
  %s1 = inlined_call_operand.vmem [shape: f32[4,128,32], index: 1, kind: input, shape index: {}]
  %s2 = inlined_call_operand.vmem [shape: f32[4,128,32], index: 2, kind: input, shape index: {}]
  %s3 = inlined_call_operand.vmem [shape: f32[4,128,32], index: 3, kind: input, shape index: {}]
  %s4 = inlined_call_operand.vmem [shape: f32[4,32,128], index: 4, kind: input, shape index: {}]
  %s5 = inlined_call_operand.vmem [shape: f32[128,512], index: 5, kind: input, shape index: {}]
  %s6 = inlined_call_operand.vmem [shape: f32[1,512], index: 6, kind: input, shape index: {}]
  %s7 = inlined_call_operand.vmem [shape: f32[512,128], index: 7, kind: input, shape index: {}]
  %s8 = inlined_call_operand.vmem [shape: f32[1,128], index: 8, kind: input, shape index: {}]
  %s9 = inlined_call_operand.hbm [shape: f32[4,8,128], index: 9, kind: output, shape index: {}]
  %s10 = sld [smem:[#allocation0]]
  $region69: #{tpu_custom_call.1} parent=0
    _
  %s12 = ssub.s32 1, %s10
  %s13 = scalar_select 0, %s12, %s10
  $region1: #{tpu_custom_call.1} parent=0
    #allocation2 [shape = 'u8[8192]{0}', space=vmem, size = 0x2000, scoped, tag = 'output window, operand 0']
    #allocation3 [shape = 's32[2]{0}', space=sflag, size = 0x8, scoped, tag = 'scoped memory for tpu_custom_call.1']
    %14 = vsyncpa [#allocation3], 0
    %s15 = scalar_lea.sflag [#allocation3], 1
    %16 = vsyncpa %s15, 0
    loop: start=0, step=1, limit=6
    $region2: #{tpu_custom_call.1} parent=1 // loop_pre_header
      _
    $region3: #{tpu_custom_call.1} parent=1 // loop_header
      %s18 = sphi 0, %s22
      %p19 = scmp.ge.s32.totalorder %s18, 6
      %s28 = sphi 0, %s30
      %s31 = sphi 0, %s28
      %s32 = sphi 0, %s31
      %s48 = sphi 0, %s32
      %s52 = sphi 0, %s52
      %s54 = sphi 0, %s52
      %s55 = sphi 0, %s54
      %s69 = sphi 0, %s55
      %s73 = sphi 0, %s73
      %s75 = sphi 0, %s73
      %s76 = sphi 0, %s75
      %s90 = sphi 0, %s76
      %s94 = sphi 0, %s94
      %s96 = sphi 0, %s94
      %s97 = sphi 0, %s96
      %s111 = sphi 0, %s97
      %s115 = sphi 0, %s115
      %s117 = sphi 0, %s115
      %s118 = sphi 0, %s117
      %s132 = sphi 0, %s118
      %s136 = sphi 0, %s136
      %s138 = sphi 0, %s136
      %s139 = sphi 0, %s138
      %s153 = sphi 0, %s139
      %s157 = sphi 0, %s157
      %s159 = sphi 0, %s157
      %s160 = sphi 0, %s159
      %s174 = sphi 0, %s160
      %s178 = sphi 0, %s178
      %s180 = sphi 0, %s178
      %s181 = sphi 0, %s180
      %s195 = sphi 0, %s181
      %s199 = sphi 0, %s199
      %s201 = sphi 0, %s199
      %s202 = sphi 0, %s201
      %s216 = sphi 0, %s202
      %s222 = sphi 0, %s224
      %s225 = sphi 0, %s222
      %s226 = sphi 0, %s225
      %s242 = sphi 0, %s226
    $region4: #{tpu_custom_call.1} parent=1 // loop_header_branch
      %21 = sbr.rel (%p19) target = $region8
    $region5: #{tpu_custom_call.1} parent=1 // loop_body
      %s23 = ssub.s32 %s18, 1
      %s24 = ssub.s32 %s18, 2
      %s25 = sadd.s32 %s18, 1
      %s26 = ssub.s32 %s18, %s25
      %p27 = scmp.eq.s32.totalorder %s26, 0
      %s29 = sadd.s32 %s28, 1
      %s30 = scalar_select %p27, %s28, %s29
      %p33 = pneg %p27
      %p34 = scmp.eq.s32.totalorder %s18, 3
      %p35 = por %p33, %p34
      %p36 = scmp.ne.s32.totalorder %s28, %s31
      %p37 = scmp.eq.s32.totalorder %s18, 0
      %p38 = por %p36, %p37
      %p39 = scmp.ne.s32.totalorder %s28, %s31
      %p40 = scmp.eq.s32.totalorder %s23, 3
      %p41 = por %p39, %p40
      %p42 = scmp.ne.s32.totalorder %s31, %s32
      %p43 = scmp.eq.s32.totalorder %s23, 0
      %p44 = por %p42, %p43
      %p45 = scmp.ne.s32.totalorder %s31, %s32
      %p46 = scmp.eq.s32.totalorder %s24, 3
      %p47 = por %p45, %p46
      %p49 = scmp.ne.s32.totalorder %s32, %s48
      %p50 = scmp.eq.s32.totalorder %s24, 0
      %p51 = por %p49, %p50
      %s53 = sadd.s32 %s52, 1
      %p56 = scmp.eq.s32.totalorder %s18, 3
      %p57 = scmp.ne.s32.totalorder %s52, %s54
      %p58 = scmp.eq.s32.totalorder %s18, 0
      %p59 = por %p57, %p58
      %p60 = scmp.ne.s32.totalorder %s52, %s54
      %p61 = scmp.eq.s32.totalorder %s23, 3
      %p62 = por %p60, %p61
      %p63 = scmp.ne.s32.totalorder %s54, %s55
      %p64 = scmp.eq.s32.totalorder %s23, 0
      %p65 = por %p63, %p64
      %p66 = scmp.ne.s32.totalorder %s54, %s55
      %p67 = scmp.eq.s32.totalorder %s24, 3
      %p68 = por %p66, %p67
      %p70 = scmp.ne.s32.totalorder %s55, %s69
      %p71 = scmp.eq.s32.totalorder %s24, 0
      %p72 = por %p70, %p71
      %s74 = sadd.s32 %s73, 1
      %p77 = scmp.eq.s32.totalorder %s18, 3
      %p78 = scmp.ne.s32.totalorder %s73, %s75
      %p79 = scmp.eq.s32.totalorder %s18, 0
      %p80 = por %p78, %p79
      %p81 = scmp.ne.s32.totalorder %s73, %s75
      %p82 = scmp.eq.s32.totalorder %s23, 3
      %p83 = por %p81, %p82
      %p84 = scmp.ne.s32.totalorder %s75, %s76
      %p85 = scmp.eq.s32.totalorder %s23, 0
      %p86 = por %p84, %p85
      %p87 = scmp.ne.s32.totalorder %s75, %s76
      %p88 = scmp.eq.s32.totalorder %s24, 3
      %p89 = por %p87, %p88
      %p91 = scmp.ne.s32.totalorder %s76, %s90
      %p92 = scmp.eq.s32.totalorder %s24, 0
      %p93 = por %p91, %p92
      %s95 = sadd.s32 %s94, 1
      %p98 = scmp.eq.s32.totalorder %s18, 3
      %p99 = scmp.ne.s32.totalorder %s94, %s96
      %p100 = scmp.eq.s32.totalorder %s18, 0
      %p101 = por %p99, %p100
      %p102 = scmp.ne.s32.totalorder %s94, %s96
      %p103 = scmp.eq.s32.totalorder %s23, 3
      %p104 = por %p102, %p103
      %p105 = scmp.ne.s32.totalorder %s96, %s97
      %p106 = scmp.eq.s32.totalorder %s23, 0
      %p107 = por %p105, %p106
      %p108 = scmp.ne.s32.totalorder %s96, %s97
      %p109 = scmp.eq.s32.totalorder %s24, 3
      %p110 = por %p108, %p109
      %p112 = scmp.ne.s32.totalorder %s97, %s111
      %p113 = scmp.eq.s32.totalorder %s24, 0
      %p114 = por %p112, %p113
      %s116 = sadd.s32 %s115, 1
      %p119 = scmp.eq.s32.totalorder %s18, 3
      %p120 = scmp.ne.s32.totalorder %s115, %s117
      %p121 = scmp.eq.s32.totalorder %s18, 0
      %p122 = por %p120, %p121
      %p123 = scmp.ne.s32.totalorder %s115, %s117
      %p124 = scmp.eq.s32.totalorder %s23, 3
      %p125 = por %p123, %p124
      %p126 = scmp.ne.s32.totalorder %s117, %s118
      %p127 = scmp.eq.s32.totalorder %s23, 0
      %p128 = por %p126, %p127
      %p129 = scmp.ne.s32.totalorder %s117, %s118
      %p130 = scmp.eq.s32.totalorder %s24, 3
      %p131 = por %p129, %p130
      %p133 = scmp.ne.s32.totalorder %s118, %s132
      %p134 = scmp.eq.s32.totalorder %s24, 0
      %p135 = por %p133, %p134
      %s137 = sadd.s32 %s136, 1
      %p140 = scmp.eq.s32.totalorder %s18, 3
      %p141 = scmp.ne.s32.totalorder %s136, %s138
      %p142 = scmp.eq.s32.totalorder %s18, 0
      %p143 = por %p141, %p142
      %p144 = scmp.ne.s32.totalorder %s136, %s138
      %p145 = scmp.eq.s32.totalorder %s23, 3
      %p146 = por %p144, %p145
      %p147 = scmp.ne.s32.totalorder %s138, %s139
      %p148 = scmp.eq.s32.totalorder %s23, 0
      %p149 = por %p147, %p148
      %p150 = scmp.ne.s32.totalorder %s138, %s139
      %p151 = scmp.eq.s32.totalorder %s24, 3
      %p152 = por %p150, %p151
      %p154 = scmp.ne.s32.totalorder %s139, %s153
      %p155 = scmp.eq.s32.totalorder %s24, 0
      %p156 = por %p154, %p155
      %s158 = sadd.s32 %s157, 1
      %p161 = scmp.eq.s32.totalorder %s18, 3
      %p162 = scmp.ne.s32.totalorder %s157, %s159
      %p163 = scmp.eq.s32.totalorder %s18, 0
      %p164 = por %p162, %p163
      %p165 = scmp.ne.s32.totalorder %s157, %s159
      %p166 = scmp.eq.s32.totalorder %s23, 3
      %p167 = por %p165, %p166
      %p168 = scmp.ne.s32.totalorder %s159, %s160
      %p169 = scmp.eq.s32.totalorder %s23, 0
      %p170 = por %p168, %p169
      %p171 = scmp.ne.s32.totalorder %s159, %s160
      %p172 = scmp.eq.s32.totalorder %s24, 3
      %p173 = por %p171, %p172
      %p175 = scmp.ne.s32.totalorder %s160, %s174
      %p176 = scmp.eq.s32.totalorder %s24, 0
      %p177 = por %p175, %p176
      %s179 = sadd.s32 %s178, 1
      %p182 = scmp.eq.s32.totalorder %s18, 3
      %p183 = scmp.ne.s32.totalorder %s178, %s180
      %p184 = scmp.eq.s32.totalorder %s18, 0
      %p185 = por %p183, %p184
      %p186 = scmp.ne.s32.totalorder %s178, %s180
      %p187 = scmp.eq.s32.totalorder %s23, 3
      %p188 = por %p186, %p187
      %p189 = scmp.ne.s32.totalorder %s180, %s181
      %p190 = scmp.eq.s32.totalorder %s23, 0
      %p191 = por %p189, %p190
      %p192 = scmp.ne.s32.totalorder %s180, %s181
      %p193 = scmp.eq.s32.totalorder %s24, 3
      %p194 = por %p192, %p193
      %p196 = scmp.ne.s32.totalorder %s181, %s195
      %p197 = scmp.eq.s32.totalorder %s24, 0
      %p198 = por %p196, %p197
      %s200 = sadd.s32 %s199, 1
      %p203 = scmp.eq.s32.totalorder %s18, 3
      %p204 = scmp.ne.s32.totalorder %s199, %s201
      %p205 = scmp.eq.s32.totalorder %s18, 0
      %p206 = por %p204, %p205
      %p207 = scmp.ne.s32.totalorder %s199, %s201
      %p208 = scmp.eq.s32.totalorder %s23, 3
      %p209 = por %p207, %p208
      %p210 = scmp.ne.s32.totalorder %s201, %s202
      %p211 = scmp.eq.s32.totalorder %s23, 0
      %p212 = por %p210, %p211
      %p213 = scmp.ne.s32.totalorder %s201, %s202
      %p214 = scmp.eq.s32.totalorder %s24, 3
      %p215 = por %p213, %p214
      %p217 = scmp.ne.s32.totalorder %s202, %s216
      %p218 = scmp.eq.s32.totalorder %s24, 0
      %p219 = por %p217, %p218
      %s220 = ssub.s32 %s18, %s25
      %p221 = scmp.eq.s32.totalorder %s220, 0
      %s223 = sadd.s32 %s222, 1
      %s224 = scalar_select %p221, %s222, %s223
      %p227 = pneg %p221
      %p228 = scmp.eq.s32.totalorder %s18, 3
      %p229 = por %p227, %p228
      %p230 = scmp.ne.s32.totalorder %s222, %s225
      %p231 = scmp.eq.s32.totalorder %s18, 0
      %p232 = por %p230, %p231
      %p233 = scmp.ne.s32.totalorder %s222, %s225
      %p234 = scmp.eq.s32.totalorder %s23, 3
      %p235 = por %p233, %p234
      %p236 = scmp.ne.s32.totalorder %s225, %s226
      %p237 = scmp.eq.s32.totalorder %s23, 0
      %p238 = por %p236, %p237
      %p239 = scmp.ne.s32.totalorder %s225, %s226
      %p240 = scmp.eq.s32.totalorder %s24, 3
      %p241 = por %p239, %p240
      %p243 = scmp.ne.s32.totalorder %s226, %s242
      %p244 = scmp.eq.s32.totalorder %s24, 0
      %p245 = por %p243, %p244
      %p246 = scmp.le.s32.totalorder 1, %s18
      %p247 = scmp.lt.s32.totalorder %s18, 5
      %p248 = pnand %p246, %p247
      %p249 = pneg %p248
      // Predicated region
      $region9: #{tpu_custom_call.1} parent=5 // pred_check
        _
      $region10: #{tpu_custom_call.1} parent=5 // pred_check_branch
        %251 = sbr.rel (%p248) target = $region12
      $region11: #{tpu_custom_call.1} parent=5 // pred_region
        %s252 = ssub.s32 %s18, 1
        // Predicated region
        $region13: #{tpu_custom_call.1} parent=11 // pred_check
          %p253 = pneg %p65
        $region14: #{tpu_custom_call.1} parent=11 // pred_check_branch
          %255 = sbr.rel (%p253) target = $region16
        $region15: #{tpu_custom_call.1} parent=11 // pred_region
          _
        $region16: #{tpu_custom_call.1} parent=11 // pred_fallthru
          _
        // Predicated region
        $region17: #{tpu_custom_call.1} parent=11 // pred_check
          %p256 = pneg %p86
        $region18: #{tpu_custom_call.1} parent=11 // pred_check_branch
          %258 = sbr.rel (%p256) target = $region20
        $region19: #{tpu_custom_call.1} parent=11 // pred_region
          _
        $region20: #{tpu_custom_call.1} parent=11 // pred_fallthru
          _
        // Predicated region
        $region21: #{tpu_custom_call.1} parent=11 // pred_check
          %p259 = pneg %p107
        $region22: #{tpu_custom_call.1} parent=11 // pred_check_branch
          %261 = sbr.rel (%p259) target = $region24
        $region23: #{tpu_custom_call.1} parent=11 // pred_region
          _
        $region24: #{tpu_custom_call.1} parent=11 // pred_fallthru
          _
        // Predicated region
        $region25: #{tpu_custom_call.1} parent=11 // pred_check
          %p262 = pneg %p128
        $region26: #{tpu_custom_call.1} parent=11 // pred_check_branch
          %264 = sbr.rel (%p262) target = $region28
        $region27: #{tpu_custom_call.1} parent=11 // pred_region
          _
        $region28: #{tpu_custom_call.1} parent=11 // pred_fallthru
          _
        // Predicated region
        $region29: #{tpu_custom_call.1} parent=11 // pred_check
          %p265 = pneg %p149
        $region30: #{tpu_custom_call.1} parent=11 // pred_check_branch
          %267 = sbr.rel (%p265) target = $region32
        $region31: #{tpu_custom_call.1} parent=11 // pred_region
          _
        $region32: #{tpu_custom_call.1} parent=11 // pred_fallthru
          _
        // Predicated region
        $region33: #{tpu_custom_call.1} parent=11 // pred_check
          %p268 = pneg %p170
        $region34: #{tpu_custom_call.1} parent=11 // pred_check_branch
          %270 = sbr.rel (%p268) target = $region36
        $region35: #{tpu_custom_call.1} parent=11 // pred_region
          _
        $region36: #{tpu_custom_call.1} parent=11 // pred_fallthru
          _
        // Predicated region
        $region37: #{tpu_custom_call.1} parent=11 // pred_check
          %p271 = pneg %p191
        $region38: #{tpu_custom_call.1} parent=11 // pred_check_branch
          %273 = sbr.rel (%p271) target = $region40
        $region39: #{tpu_custom_call.1} parent=11 // pred_region
          _
        $region40: #{tpu_custom_call.1} parent=11 // pred_fallthru
          _
        // Predicated region
        $region41: #{tpu_custom_call.1} parent=11 // pred_check
          %p274 = pneg %p212
        $region42: #{tpu_custom_call.1} parent=11 // pred_check_branch
          %276 = sbr.rel (%p274) target = $region44
        $region43: #{tpu_custom_call.1} parent=11 // pred_region
          _
        $region44: #{tpu_custom_call.1} parent=11 // pred_fallthru
          _
      $region12: #{tpu_custom_call.1} parent=5 // pred_fallthru
        _
      %p277 = scmp.lt.s32.totalorder %s18, 4
      // Predicated region
      $region45: #{tpu_custom_call.1} parent=5 // pred_check
        %p278 = pneg %p277
      $region46: #{tpu_custom_call.1} parent=5 // pred_check_branch
        %280 = sbr.rel (%p278) target = $region48
      $region47: #{tpu_custom_call.1} parent=5 // pred_region
        // Predicated region
        $region49: #{tpu_custom_call.1} parent=47 // pred_check
          %p281 = pneg %p38
        $region50: #{tpu_custom_call.1} parent=47 // pred_check_branch
          %283 = sbr.rel (%p281) target = $region52
        $region51: #{tpu_custom_call.1} parent=47 // pred_region
          %p284 = scmp.lt.s32.totalorder %s18, 3
          %s285 = scalar_select %p284, %s18, 3
          %s286 = smul.addr %s285, 8
          %s287 = scalar_lea.vmem %s0, %s286
        $region52: #{tpu_custom_call.1} parent=47 // pred_fallthru
          _
      $region48: #{tpu_custom_call.1} parent=5 // pred_fallthru
        _
      %p288 = scmp.le.s32.totalorder 1, %s18
      %p289 = scmp.lt.s32.totalorder %s18, 5
      %p290 = pnand %p288, %p289
      %p291 = pneg %p290
      // Predicated region
      $region53: #{tpu_custom_call.1} parent=5 // pred_check
        _
      $region54: #{tpu_custom_call.1} parent=5 // pred_check_branch
        %293 = sbr.rel (%p290) target = $region56
      $region55: #{tpu_custom_call.1} parent=5 // pred_region
        %s294 = ssub.s32 %s18, 1
        %p295 = scmp.lt.s32.totalorder %s23, 3
        %s296 = scalar_select %p295, %s23, 3
        %s297 = smul.addr %s296, 8
        %s298 = scalar_lea.vmem %s0, %s297
        %p299 = pneg %p44
        %p300 = pneg %p41
        %p301 = pneg %p65
        %p302 = pneg %p62
        %p303 = pneg %p86
        %p304 = pneg %p83
        %p305 = pneg %p107
        %p306 = pneg %p104
        %p307 = pneg %p128
        %p308 = pneg %p125
        %p309 = pneg %p149
        %p310 = pneg %p146
        %p311 = pneg %p170
        %p312 = pneg %p167
        %p313 = pneg %p191
        %p314 = pneg %p188
        %p315 = pneg %p212
        %p316 = pneg %p209
        %p317 = pneg %p238
        %p318 = pneg %p235
        %s319 = sand.u32 %s225, 1
        %s320 = scalar_lea.sflag [#allocation3], %s319
        %s321 = sand.u32 %s225, 1
        %s322 = smul.addr %s321, 8
        %s323 = scalar_lea.vmem [#allocation2], %s322
        %p324 = scmp.lt.s32.totalorder %s23, 3
        %s325 = scalar_select %p324, %s23, 3
        %s326 = smul.addr %s325, 8
        %s327 = scalar_lea.vmem %s0, %s326
        %v328 = vld [vmem:[%s327] sm:$0xff]
        %v329 = vlaneseq
        %v330 = vshrl.u32 %v329, 7
        %v331 = vlaneseq
        %v332 = vand.u32 %v331, 127
        %vm333 = vcmp.le.s32.totalorder %v332, %v330
        %v334 = vld [vmem:[%s1] sm:$0xff]
        %v335 = vld [vmem:[%s1 + $0x8] sm:$0xff]
        %v336 = vld [vmem:[%s1 + $0x10] sm:$0xff]
        %v337 = vld [vmem:[%s1 + $0x18] sm:$0xff]
        %v338 = vld [vmem:[%s1 + $0x20] sm:$0xff]
        %v339 = vld [vmem:[%s1 + $0x28] sm:$0xff]
        %v340 = vld [vmem:[%s1 + $0x30] sm:$0xff]
        %v341 = vld [vmem:[%s1 + $0x38] sm:$0xff]
        %v342 = vld [vmem:[%s1 + $0x40] sm:$0xff]
        %v343 = vld [vmem:[%s1 + $0x48] sm:$0xff]
        %v344 = vld [vmem:[%s1 + $0x50] sm:$0xff]
        %v345 = vld [vmem:[%s1 + $0x58] sm:$0xff]
        %v346 = vld [vmem:[%s1 + $0x60] sm:$0xff]
        %v347 = vld [vmem:[%s1 + $0x68] sm:$0xff]
        %v348 = vld [vmem:[%s1 + $0x70] sm:$0xff]
        %v349 = vld [vmem:[%s1 + $0x78] sm:$0xff]
        %350 = vmatprep.subr.mxu0 0.0
        %351 = vmatpush1.msra.mxu0 %v334
        %352 = vmatprep.subr.mxu0 0.0
        %353 = vmatpush1.msra.mxu0 %v335
        %354 = vmatprep.subr.mxu0 0.0
        %355 = vmatpush1.msra.mxu0 %v336
        %356 = vmatprep.subr.mxu0 0.0
        %357 = vmatpush1.msra.mxu0 %v337
        %358 = vmatprep.subr.mxu0 0.0
        %359 = vmatpush1.msra.mxu0 %v338
        %360 = vmatprep.subr.mxu0 0.0
        %361 = vmatpush1.msra.mxu0 %v339
        %362 = vmatprep.subr.mxu0 0.0
        %363 = vmatpush1.msra.mxu0 %v340
        %364 = vmatprep.subr.mxu0 0.0
        %365 = vmatpush1.msra.mxu0 %v341
        %366 = vmatprep.subr.mxu0 0.0
        %367 = vmatpush1.msra.mxu0 %v342
        %368 = vmatprep.subr.mxu0 0.0
        %369 = vmatpush1.msra.mxu0 %v343
        %370 = vmatprep.subr.mxu0 0.0
        %371 = vmatpush1.msra.mxu0 %v344
        %372 = vmatprep.subr.mxu0 0.0
        %373 = vmatpush1.msra.mxu0 %v345
        %374 = vmatprep.subr.mxu0 0.0
        %375 = vmatpush1.msra.mxu0 %v346
        %376 = vmatprep.subr.mxu0 0.0
        %377 = vmatpush1.msra.mxu0 %v347
        %378 = vmatprep.subr.mxu0 0.0
        %379 = vmatpush1.msra.mxu0 %v348
        %380 = vmatprep.subr.mxu0 0.0
        %381 = vmatpush1.msra.mxu0 %v349
        %382 = vmatprep.subr.mxu0 0.0
        %383 = vmatpush1.msra.mxu0 0.0
        %384 = vmatprep.subr.mxu0 0.0
        %385 = vmatpush1.msra.mxu0 0.0
        %386 = vmatprep.subr.mxu0 0.0
        %387 = vmatpush1.msra.mxu0 0.0
        %388 = vmatprep.subr.mxu0 0.0
        %389 = vmatpush1.msra.mxu0 0.0
        %390 = vmatprep.subr.mxu0 0.0
        %391 = vmatpush1.msra.mxu0 0.0
        %392 = vmatprep.subr.mxu0 0.0
        %393 = vmatpush1.msra.mxu0 0.0
        %394 = vmatprep.subr.mxu0 0.0
        %395 = vmatpush1.msra.mxu0 0.0
        %396 = vmatprep.subr.mxu0 0.0
        %397 = vmatpush1.msra.mxu0 0.0
        %398 = vmatprep.subr.mxu0 0.0
        %399 = vmatpush1.msra.mxu0 0.0
        %400 = vmatprep.subr.mxu0 0.0
        %401 = vmatpush1.msra.mxu0 0.0
        %402 = vmatprep.subr.mxu0 0.0
        %403 = vmatpush1.msra.mxu0 0.0
        %404 = vmatprep.subr.mxu0 0.0
        %405 = vmatpush1.msra.mxu0 0.0
        %406 = vmatprep.subr.mxu0 0.0
        %407 = vmatpush1.msra.mxu0 0.0
        %408 = vmatprep.subr.mxu0 0.0
        %409 = vmatpush1.msra.mxu0 0.0
        %410 = vmatprep.subr.mxu0 0.0
        %411 = vmatpush1.msra.mxu0 0.0
        %412 = vmatprep.subr.mxu0 0.0
        %413 = vmatpush1.msra.mxu0 0.0
        %414 = vmatprep.mubr.f32.mxu0 0.0
        %415 = vmatmul.mubr.f32.gmra.mrb[0].mxu0 %v328
        %v416 = vpop.f32.mrb[0].mxu0
        %v417 = vadd.f32 0.0, %v416
        %v418 = vpop.f32.mrb[0].mxu0
        %419 = vdwg.mxu0
        %v420 = vld [vmem:[%s2] sm:$0xff]
        %v421 = vld [vmem:[%s2 + $0x8] sm:$0xff]
        %v422 = vld [vmem:[%s2 + $0x10] sm:$0xff]
        %v423 = vld [vmem:[%s2 + $0x18] sm:$0xff]
        %v424 = vld [vmem:[%s2 + $0x20] sm:$0xff]
        %v425 = vld [vmem:[%s2 + $0x28] sm:$0xff]
        %v426 = vld [vmem:[%s2 + $0x30] sm:$0xff]
        %v427 = vld [vmem:[%s2 + $0x38] sm:$0xff]
        %v428 = vld [vmem:[%s2 + $0x40] sm:$0xff]
        %v429 = vld [vmem:[%s2 + $0x48] sm:$0xff]
        %v430 = vld [vmem:[%s2 + $0x50] sm:$0xff]
        %v431 = vld [vmem:[%s2 + $0x58] sm:$0xff]
        %v432 = vld [vmem:[%s2 + $0x60] sm:$0xff]
        %v433 = vld [vmem:[%s2 + $0x68] sm:$0xff]
        %v434 = vld [vmem:[%s2 + $0x70] sm:$0xff]
        %v435 = vld [vmem:[%s2 + $0x78] sm:$0xff]
        %436 = vmatprep.subr.mxu0 0.0
        %437 = vmatpush1.msra.mxu0 %v420
        %438 = vmatprep.subr.mxu0 0.0
        %439 = vmatpush1.msra.mxu0 %v421
        %440 = vmatprep.subr.mxu0 0.0
        %441 = vmatpush1.msra.mxu0 %v422
        %442 = vmatprep.subr.mxu0 0.0
        %443 = vmatpush1.msra.mxu0 %v423
        %444 = vmatprep.subr.mxu0 0.0
        %445 = vmatpush1.msra.mxu0 %v424
        %446 = vmatprep.subr.mxu0 0.0
        %447 = vmatpush1.msra.mxu0 %v425
        %448 = vmatprep.subr.mxu0 0.0
        %449 = vmatpush1.msra.mxu0 %v426
        %450 = vmatprep.subr.mxu0 0.0
        %451 = vmatpush1.msra.mxu0 %v427
        %452 = vmatprep.subr.mxu0 0.0
        %453 = vmatpush1.msra.mxu0 %v428
        %454 = vmatprep.subr.mxu0 0.0
        %455 = vmatpush1.msra.mxu0 %v429
        %456 = vmatprep.subr.mxu0 0.0
        %457 = vmatpush1.msra.mxu0 %v430
        %458 = vmatprep.subr.mxu0 0.0
        %459 = vmatpush1.msra.mxu0 %v431
        %460 = vmatprep.subr.mxu0 0.0
        %461 = vmatpush1.msra.mxu0 %v432
        %462 = vmatprep.subr.mxu0 0.0
        %463 = vmatpush1.msra.mxu0 %v433
        %464 = vmatprep.subr.mxu0 0.0
        %465 = vmatpush1.msra.mxu0 %v434
        %466 = vmatprep.subr.mxu0 0.0
        %467 = vmatpush1.msra.mxu0 %v435
        %468 = vmatprep.subr.mxu0 0.0
        %469 = vmatpush1.msra.mxu0 0.0
        %470 = vmatprep.subr.mxu0 0.0
        %471 = vmatpush1.msra.mxu0 0.0
        %472 = vmatprep.subr.mxu0 0.0
        %473 = vmatpush1.msra.mxu0 0.0
        %474 = vmatprep.subr.mxu0 0.0
        %475 = vmatpush1.msra.mxu0 0.0
        %476 = vmatprep.subr.mxu0 0.0
        %477 = vmatpush1.msra.mxu0 0.0
        %478 = vmatprep.subr.mxu0 0.0
        %479 = vmatpush1.msra.mxu0 0.0
        %480 = vmatprep.subr.mxu0 0.0
        %481 = vmatpush1.msra.mxu0 0.0
        %482 = vmatprep.subr.mxu0 0.0
        %483 = vmatpush1.msra.mxu0 0.0
        %484 = vmatprep.subr.mxu0 0.0
        %485 = vmatpush1.msra.mxu0 0.0
        %486 = vmatprep.subr.mxu0 0.0
        %487 = vmatpush1.msra.mxu0 0.0
        %488 = vmatprep.subr.mxu0 0.0
        %489 = vmatpush1.msra.mxu0 0.0
        %490 = vmatprep.subr.mxu0 0.0
        %491 = vmatpush1.msra.mxu0 0.0
        %492 = vmatprep.subr.mxu0 0.0
        %493 = vmatpush1.msra.mxu0 0.0
        %494 = vmatprep.subr.mxu0 0.0
        %495 = vmatpush1.msra.mxu0 0.0
        %496 = vmatprep.subr.mxu0 0.0
        %497 = vmatpush1.msra.mxu0 0.0
        %498 = vmatprep.subr.mxu0 0.0
        %499 = vmatpush1.msra.mxu0 0.0
        %500 = vmatprep.mubr.f32.mxu0 0.0
        %501 = vmatmul.mubr.f32.gmra.mrb[0].mxu0 %v328
        %v502 = vpop.f32.mrb[0].mxu0
        %v503 = vadd.f32 0.0, %v502
        %v504 = vpop.f32.mrb[0].mxu0
        %505 = vdwg.mxu0
        %v506 = vld [vmem:[%s3] sm:$0xff]
        %v507 = vld [vmem:[%s3 + $0x8] sm:$0xff]
        %v508 = vld [vmem:[%s3 + $0x10] sm:$0xff]
        %v509 = vld [vmem:[%s3 + $0x18] sm:$0xff]
        %v510 = vld [vmem:[%s3 + $0x20] sm:$0xff]
        %v511 = vld [vmem:[%s3 + $0x28] sm:$0xff]
        %v512 = vld [vmem:[%s3 + $0x30] sm:$0xff]
        %v513 = vld [vmem:[%s3 + $0x38] sm:$0xff]
        %v514 = vld [vmem:[%s3 + $0x40] sm:$0xff]
        %v515 = vld [vmem:[%s3 + $0x48] sm:$0xff]
        %v516 = vld [vmem:[%s3 + $0x50] sm:$0xff]
        %v517 = vld [vmem:[%s3 + $0x58] sm:$0xff]
        %v518 = vld [vmem:[%s3 + $0x60] sm:$0xff]
        %v519 = vld [vmem:[%s3 + $0x68] sm:$0xff]
        %v520 = vld [vmem:[%s3 + $0x70] sm:$0xff]
        %v521 = vld [vmem:[%s3 + $0x78] sm:$0xff]
        %522 = vmatprep.subr.mxu0 0.0
        %523 = vmatpush1.msra.mxu0 %v506
        %524 = vmatprep.subr.mxu0 0.0
        %525 = vmatpush1.msra.mxu0 %v507
        %526 = vmatprep.subr.mxu0 0.0
        %527 = vmatpush1.msra.mxu0 %v508
        %528 = vmatprep.subr.mxu0 0.0
        %529 = vmatpush1.msra.mxu0 %v509
        %530 = vmatprep.subr.mxu0 0.0
        %531 = vmatpush1.msra.mxu0 %v510
        %532 = vmatprep.subr.mxu0 0.0
        %533 = vmatpush1.msra.mxu0 %v511
        %534 = vmatprep.subr.mxu0 0.0
        %535 = vmatpush1.msra.mxu0 %v512
        %536 = vmatprep.subr.mxu0 0.0
        %537 = vmatpush1.msra.mxu0 %v513
        %538 = vmatprep.subr.mxu0 0.0
        %539 = vmatpush1.msra.mxu0 %v514
        %540 = vmatprep.subr.mxu0 0.0
        %541 = vmatpush1.msra.mxu0 %v515
        %542 = vmatprep.subr.mxu0 0.0
        %543 = vmatpush1.msra.mxu0 %v516
        %544 = vmatprep.subr.mxu0 0.0
        %545 = vmatpush1.msra.mxu0 %v517
        %546 = vmatprep.subr.mxu0 0.0
        %547 = vmatpush1.msra.mxu0 %v518
        %548 = vmatprep.subr.mxu0 0.0
        %549 = vmatpush1.msra.mxu0 %v519
        %550 = vmatprep.subr.mxu0 0.0
        %551 = vmatpush1.msra.mxu0 %v520
        %552 = vmatprep.subr.mxu0 0.0
        %553 = vmatpush1.msra.mxu0 %v521
        %554 = vmatprep.subr.mxu0 0.0
        %555 = vmatpush1.msra.mxu0 0.0
        %556 = vmatprep.subr.mxu0 0.0
        %557 = vmatpush1.msra.mxu0 0.0
        %558 = vmatprep.subr.mxu0 0.0
        %559 = vmatpush1.msra.mxu0 0.0
        %560 = vmatprep.subr.mxu0 0.0
        %561 = vmatpush1.msra.mxu0 0.0
        %562 = vmatprep.subr.mxu0 0.0
        %563 = vmatpush1.msra.mxu0 0.0
        %564 = vmatprep.subr.mxu0 0.0
        %565 = vmatpush1.msra.mxu0 0.0
        %566 = vmatprep.subr.mxu0 0.0
        %567 = vmatpush1.msra.mxu0 0.0
        %568 = vmatprep.subr.mxu0 0.0
        %569 = vmatpush1.msra.mxu0 0.0
        %570 = vmatprep.subr.mxu0 0.0
        %571 = vmatpush1.msra.mxu0 0.0
        %572 = vmatprep.subr.mxu0 0.0
        %573 = vmatpush1.msra.mxu0 0.0
        %574 = vmatprep.subr.mxu0 0.0
        %575 = vmatpush1.msra.mxu0 0.0
        %576 = vmatprep.subr.mxu0 0.0
        %577 = vmatpush1.msra.mxu0 0.0
        %578 = vmatprep.subr.mxu0 0.0
        %579 = vmatpush1.msra.mxu0 0.0
        %580 = vmatprep.subr.mxu0 0.0
        %581 = vmatpush1.msra.mxu0 0.0
        %582 = vmatprep.subr.mxu0 0.0
        %583 = vmatpush1.msra.mxu0 0.0
        %584 = vmatprep.subr.mxu0 0.0
        %585 = vmatpush1.msra.mxu0 0.0
        %586 = vmatprep.mubr.f32.mxu0 0.0
        %587 = vmatmul.mubr.f32.gmra.mrb[0].mxu0 %v328
        %v588 = vpop.f32.mrb[0].mxu0
        %v589 = vadd.f32 0.0, %v588
        %v590 = vpop.f32.mrb[0].mxu0
        %591 = vdwg.mxu0
        %vm592 = vcmask 261120
        %v594 = vsel %vm592, %v417, 0
        %v597 = vsel %vm592, %v503, 0
        %599 = vmatprep.subr.mxu0 0.0
        %600 = vmatpush1.xpose.msra.mxu0 %v597
        %601 = vmatprep.subr.mxu0 0.0
        %602 = vmatpush1.xpose.msra.mxu0 0.0
        %603 = vmatprep.subr.mxu0 0.0
        %604 = vmatpush1.xpose.msra.mxu0 0.0
        %605 = vmatprep.subr.mxu0 0.0
        %606 = vmatpush1.xpose.msra.mxu0 0.0
        %607 = vmatprep.subr.mxu0 0.0
        %608 = vmatpush1.xpose.msra.mxu0 0.0
        %609 = vmatprep.subr.mxu0 0.0
        %610 = vmatpush1.xpose.msra.mxu0 0.0
        %611 = vmatprep.subr.mxu0 0.0
        %612 = vmatpush1.xpose.msra.mxu0 0.0
        %613 = vmatprep.subr.mxu0 0.0
        %614 = vmatpush1.xpose.msra.mxu0 0.0
        %615 = vmatprep.subr.mxu0 0.0
        %616 = vmatpush1.xpose.msra.mxu0 0.0
        %617 = vmatprep.subr.mxu0 0.0
        %618 = vmatpush1.xpose.msra.mxu0 0.0
        %619 = vmatprep.subr.mxu0 0.0
        %620 = vmatpush1.xpose.msra.mxu0 0.0
        %621 = vmatprep.subr.mxu0 0.0
        %622 = vmatpush1.xpose.msra.mxu0 0.0
        %623 = vmatprep.subr.mxu0 0.0
        %624 = vmatpush1.xpose.msra.mxu0 0.0
        %625 = vmatprep.subr.mxu0 0.0
        %626 = vmatpush1.xpose.msra.mxu0 0.0
        %627 = vmatprep.subr.mxu0 0.0
        %628 = vmatpush1.xpose.msra.mxu0 0.0
        %629 = vmatprep.subr.mxu0 0.0
        %630 = vmatpush1.xpose.msra.mxu0 0.0
        %631 = vmatprep.subr.mxu0 0.0
        %632 = vmatpush1.xpose.msra.mxu0 0.0
        %633 = vmatprep.subr.mxu0 0.0
        %634 = vmatpush1.xpose.msra.mxu0 0.0
        %635 = vmatprep.subr.mxu0 0.0
        %636 = vmatpush1.xpose.msra.mxu0 0.0
        %637 = vmatprep.subr.mxu0 0.0
        %638 = vmatpush1.xpose.msra.mxu0 0.0
        %639 = vmatprep.subr.mxu0 0.0
        %640 = vmatpush1.xpose.msra.mxu0 0.0
        %641 = vmatprep.subr.mxu0 0.0
        %642 = vmatpush1.xpose.msra.mxu0 0.0
        %643 = vmatprep.subr.mxu0 0.0
        %644 = vmatpush1.xpose.msra.mxu0 0.0
        %645 = vmatprep.subr.mxu0 0.0
        %646 = vmatpush1.xpose.msra.mxu0 0.0
        %647 = vmatprep.subr.mxu0 0.0
        %648 = vmatpush1.xpose.msra.mxu0 0.0
        %649 = vmatprep.subr.mxu0 0.0
        %650 = vmatpush1.xpose.msra.mxu0 0.0
        %651 = vmatprep.subr.mxu0 0.0
        %652 = vmatpush1.xpose.msra.mxu0 0.0
        %653 = vmatprep.subr.mxu0 0.0
        %654 = vmatpush1.xpose.msra.mxu0 0.0
        %655 = vmatprep.subr.mxu0 0.0
        %656 = vmatpush1.xpose.msra.mxu0 0.0
        %657 = vmatprep.subr.mxu0 0.0
        %658 = vmatpush1.xpose.msra.mxu0 0.0
        %659 = vmatprep.subr.mxu0 0.0
        %660 = vmatpush1.xpose.msra.mxu0 0.0
        %661 = vmatprep.subr.mxu0 0.0
        %662 = vmatpush1.xpose.msra.mxu0 0.0
        %663 = vmatprep.mubr.f32.mxu0 0.0
        %664 = vmatmul.mubr.f32.gmra.mrb[0].mxu0 %v594
        %v665 = vpop.f32.mrb[0].mxu0
        %v666 = vadd.f32 0.0, %v665
        %v667 = vpop.f32.mrb[0].mxu0
        %668 = vdwg.mxu0
        %v669 = vmul.f32 %v666, 0.17677669
        %v670 = vsel %vm333, %v669, -1.7677669e+09
        %vm671 = vcmask 64512
        %v672 = vsel %vm671, %v670, -inf
        %673 = vmax.xlane.f32.xlu0 %v672
        %v674 = vpop.xlane.xlu0 %673
        %v675 = vsub.f32 %v670, %v674
        %v676 = vmul.f32 %v675, 1.442695
        %v677 = vpow.pop %v676
        %v678 = vsel %vm671, %v677, 0.0
        %679 = vadd.xlane.f32.xlu0 %v678
        %v680 = vpop.xlane.xlu0 %679
        %v681 = vrcp.pop %v680
        %v682 = vmul.f32 %v677, %v681
        %v684 = vsel %vm671, %v682, 0
        %686 = vmatprep.subr.mxu0 0.0
        %687 = vmatpush1.msra.mxu0 %v589
        %688 = vmatprep.subr.mxu0 0.0
        %689 = vmatpush1.msra.mxu0 0.0
        %690 = vmatprep.subr.mxu0 0.0
        %691 = vmatpush1.msra.mxu0 0.0
        %692 = vmatprep.subr.mxu0 0.0
        %693 = vmatpush1.msra.mxu0 0.0
        %694 = vmatprep.subr.mxu0 0.0
        %695 = vmatpush1.msra.mxu0 0.0
        %696 = vmatprep.subr.mxu0 0.0
        %697 = vmatpush1.msra.mxu0 0.0
        %698 = vmatprep.subr.mxu0 0.0
        %699 = vmatpush1.msra.mxu0 0.0
        %700 = vmatprep.subr.mxu0 0.0
        %701 = vmatpush1.msra.mxu0 0.0
        %702 = vmatprep.subr.mxu0 0.0
        %703 = vmatpush1.msra.mxu0 0.0
        %704 = vmatprep.subr.mxu0 0.0
        %705 = vmatpush1.msra.mxu0 0.0
        %706 = vmatprep.subr.mxu0 0.0
        %707 = vmatpush1.msra.mxu0 0.0
        %708 = vmatprep.subr.mxu0 0.0
        %709 = vmatpush1.msra.mxu0 0.0
        %710 = vmatprep.subr.mxu0 0.0
        %711 = vmatpush1.msra.mxu0 0.0
        %712 = vmatprep.subr.mxu0 0.0
        %713 = vmatpush1.msra.mxu0 0.0
        %714 = vmatprep.subr.mxu0 0.0
        %715 = vmatpush1.msra.mxu0 0.0
        %716 = vmatprep.subr.mxu0 0.0
        %717 = vmatpush1.msra.mxu0 0.0
        %718 = vmatprep.subr.mxu0 0.0
        %719 = vmatpush1.msra.mxu0 0.0
        %720 = vmatprep.subr.mxu0 0.0
        %721 = vmatpush1.msra.mxu0 0.0
        %722 = vmatprep.subr.mxu0 0.0
        %723 = vmatpush1.msra.mxu0 0.0
        %724 = vmatprep.subr.mxu0 0.0
        %725 = vmatpush1.msra.mxu0 0.0
        %726 = vmatprep.subr.mxu0 0.0
        %727 = vmatpush1.msra.mxu0 0.0
        %728 = vmatprep.subr.mxu0 0.0
        %729 = vmatpush1.msra.mxu0 0.0
        %730 = vmatprep.subr.mxu0 0.0
        %731 = vmatpush1.msra.mxu0 0.0
        %732 = vmatprep.subr.mxu0 0.0
        %733 = vmatpush1.msra.mxu0 0.0
        %734 = vmatprep.subr.mxu0 0.0
        %735 = vmatpush1.msra.mxu0 0.0
        %736 = vmatprep.subr.mxu0 0.0
        %737 = vmatpush1.msra.mxu0 0.0
        %738 = vmatprep.subr.mxu0 0.0
        %739 = vmatpush1.msra.mxu0 0.0
        %740 = vmatprep.subr.mxu0 0.0
        %741 = vmatpush1.msra.mxu0 0.0
        %742 = vmatprep.subr.mxu0 0.0
        %743 = vmatpush1.msra.mxu0 0.0
        %744 = vmatprep.subr.mxu0 0.0
        %745 = vmatpush1.msra.mxu0 0.0
        %746 = vmatprep.subr.mxu0 0.0
        %747 = vmatpush1.msra.mxu0 0.0
        %748 = vmatprep.subr.mxu0 0.0
        %749 = vmatpush1.msra.mxu0 0.0
        %750 = vmatprep.mubr.f32.mxu0 0.0
        %751 = vmatmul.mubr.f32.gmra.mrb[0].mxu0 %v684
        %v752 = vpop.f32.mrb[0].mxu0
        %v753 = vadd.f32 0.0, %v752
        %v754 = vpop.f32.mrb[0].mxu0
        %755 = vdwg.mxu0
        %v756 = vld [vmem:[%s4] sm:$0xff]
        %v757 = vld [vmem:[%s4 + $0x8] sm:$0xff]
        %v758 = vld [vmem:[%s4 + $0x10] sm:$0xff]
        %v759 = vld [vmem:[%s4 + $0x18] sm:$0xff]
        %s760 = scalar_lea.vmem %s1, 128
        %v761 = vld [vmem:[%s760] sm:$0xff]
        %v762 = vld [vmem:[%s760 + $0x8] sm:$0xff]
        %v763 = vld [vmem:[%s760 + $0x10] sm:$0xff]
        %v764 = vld [vmem:[%s760 + $0x18] sm:$0xff]
        %v765 = vld [vmem:[%s760 + $0x20] sm:$0xff]
        %v766 = vld [vmem:[%s760 + $0x28] sm:$0xff]
        %v767 = vld [vmem:[%s760 + $0x30] sm:$0xff]
        %v768 = vld [vmem:[%s760 + $0x38] sm:$0xff]
        %v769 = vld [vmem:[%s760 + $0x40] sm:$0xff]
        %v770 = vld [vmem:[%s760 + $0x48] sm:$0xff]
        %v771 = vld [vmem:[%s760 + $0x50] sm:$0xff]
        %v772 = vld [vmem:[%s760 + $0x58] sm:$0xff]
        %v773 = vld [vmem:[%s760 + $0x60] sm:$0xff]
        %v774 = vld [vmem:[%s760 + $0x68] sm:$0xff]
        %v775 = vld [vmem:[%s760 + $0x70] sm:$0xff]
        %v776 = vld [vmem:[%s760 + $0x78] sm:$0xff]
        %777 = vmatprep.subr.mxu0 0.0
        %778 = vmatpush1.msra.mxu0 %v761
        %779 = vmatprep.subr.mxu0 0.0
        %780 = vmatpush1.msra.mxu0 %v762
        %781 = vmatprep.subr.mxu0 0.0
        %782 = vmatpush1.msra.mxu0 %v763
        %783 = vmatprep.subr.mxu0 0.0
        %784 = vmatpush1.msra.mxu0 %v764
        %785 = vmatprep.subr.mxu0 0.0
        %786 = vmatpush1.msra.mxu0 %v765
        %787 = vmatprep.subr.mxu0 0.0
        %788 = vmatpush1.msra.mxu0 %v766
        %789 = vmatprep.subr.mxu0 0.0
        %790 = vmatpush1.msra.mxu0 %v767
        %791 = vmatprep.subr.mxu0 0.0
        %792 = vmatpush1.msra.mxu0 %v768
        %793 = vmatprep.subr.mxu0 0.0
        %794 = vmatpush1.msra.mxu0 %v769
        %795 = vmatprep.subr.mxu0 0.0
        %796 = vmatpush1.msra.mxu0 %v770
        %797 = vmatprep.subr.mxu0 0.0
        %798 = vmatpush1.msra.mxu0 %v771
        %799 = vmatprep.subr.mxu0 0.0
        %800 = vmatpush1.msra.mxu0 %v772
        %801 = vmatprep.subr.mxu0 0.0
        %802 = vmatpush1.msra.mxu0 %v773
        %803 = vmatprep.subr.mxu0 0.0
        %804 = vmatpush1.msra.mxu0 %v774
        %805 = vmatprep.subr.mxu0 0.0
        %806 = vmatpush1.msra.mxu0 %v775
        %807 = vmatprep.subr.mxu0 0.0
        %808 = vmatpush1.msra.mxu0 %v776
        %809 = vmatprep.subr.mxu0 0.0
        %810 = vmatpush1.msra.mxu0 0.0
        %811 = vmatprep.subr.mxu0 0.0
        %812 = vmatpush1.msra.mxu0 0.0
        %813 = vmatprep.subr.mxu0 0.0
        %814 = vmatpush1.msra.mxu0 0.0
        %815 = vmatprep.subr.mxu0 0.0
        %816 = vmatpush1.msra.mxu0 0.0
        %817 = vmatprep.subr.mxu0 0.0
        %818 = vmatpush1.msra.mxu0 0.0
        %819 = vmatprep.subr.mxu0 0.0
        %820 = vmatpush1.msra.mxu0 0.0
        %821 = vmatprep.subr.mxu0 0.0
        %822 = vmatpush1.msra.mxu0 0.0
        %823 = vmatprep.subr.mxu0 0.0
        %824 = vmatpush1.msra.mxu0 0.0
        %825 = vmatprep.subr.mxu0 0.0
        %826 = vmatpush1.msra.mxu0 0.0
        %827 = vmatprep.subr.mxu0 0.0
        %828 = vmatpush1.msra.mxu0 0.0
        %829 = vmatprep.subr.mxu0 0.0
        %830 = vmatpush1.msra.mxu0 0.0
        %831 = vmatprep.subr.mxu0 0.0
        %832 = vmatpush1.msra.mxu0 0.0
        %833 = vmatprep.subr.mxu0 0.0
        %834 = vmatpush1.msra.mxu0 0.0
        %835 = vmatprep.subr.mxu0 0.0
        %836 = vmatpush1.msra.mxu0 0.0
        %837 = vmatprep.subr.mxu0 0.0
        %838 = vmatpush1.msra.mxu0 0.0
        %839 = vmatprep.subr.mxu0 0.0
        %840 = vmatpush1.msra.mxu0 0.0
        %841 = vmatprep.mubr.f32.mxu0 0.0
        %842 = vmatmul.mubr.f32.gmra.mrb[0].mxu0 %v328
        %v843 = vpop.f32.mrb[0].mxu0
        %v844 = vadd.f32 0.0, %v843
        %v845 = vpop.f32.mrb[0].mxu0
        %846 = vdwg.mxu0
        %s847 = scalar_lea.vmem %s2, 128
        %v848 = vld [vmem:[%s847] sm:$0xff]
        %v849 = vld [vmem:[%s847 + $0x8] sm:$0xff]
        %v850 = vld [vmem:[%s847 + $0x10] sm:$0xff]
        %v851 = vld [vmem:[%s847 + $0x18] sm:$0xff]
        %v852 = vld [vmem:[%s847 + $0x20] sm:$0xff]
        %v853 = vld [vmem:[%s847 + $0x28] sm:$0xff]
        %v854 = vld [vmem:[%s847 + $0x30] sm:$0xff]
        %v855 = vld [vmem:[%s847 + $0x38] sm:$0xff]
        %v856 = vld [vmem:[%s847 + $0x40] sm:$0xff]
        %v857 = vld [vmem:[%s847 + $0x48] sm:$0xff]
        %v858 = vld [vmem:[%s847 + $0x50] sm:$0xff]
        %v859 = vld [vmem:[%s847 + $0x58] sm:$0xff]
        %v860 = vld [vmem:[%s847 + $0x60] sm:$0xff]
        %v861 = vld [vmem:[%s847 + $0x68] sm:$0xff]
        %v862 = vld [vmem:[%s847 + $0x70] sm:$0xff]
        %v863 = vld [vmem:[%s847 + $0x78] sm:$0xff]
        %864 = vmatprep.subr.mxu0 0.0
        %865 = vmatpush1.msra.mxu0 %v848
        %866 = vmatprep.subr.mxu0 0.0
        %867 = vmatpush1.msra.mxu0 %v849
        %868 = vmatprep.subr.mxu0 0.0
        %869 = vmatpush1.msra.mxu0 %v850
        %870 = vmatprep.subr.mxu0 0.0
        %871 = vmatpush1.msra.mxu0 %v851
        %872 = vmatprep.subr.mxu0 0.0
        %873 = vmatpush1.msra.mxu0 %v852
        %874 = vmatprep.subr.mxu0 0.0
        %875 = vmatpush1.msra.mxu0 %v853
        %876 = vmatprep.subr.mxu0 0.0
        %877 = vmatpush1.msra.mxu0 %v854
        %878 = vmatprep.subr.mxu0 0.0
        %879 = vmatpush1.msra.mxu0 %v855
        %880 = vmatprep.subr.mxu0 0.0
        %881 = vmatpush1.msra.mxu0 %v856
        %882 = vmatprep.subr.mxu0 0.0
        %883 = vmatpush1.msra.mxu0 %v857
        %884 = vmatprep.subr.mxu0 0.0
        %885 = vmatpush1.msra.mxu0 %v858
        %886 = vmatprep.subr.mxu0 0.0
        %887 = vmatpush1.msra.mxu0 %v859
        %888 = vmatprep.subr.mxu0 0.0
        %889 = vmatpush1.msra.mxu0 %v860
        %890 = vmatprep.subr.mxu0 0.0
        %891 = vmatpush1.msra.mxu0 %v861
        %892 = vmatprep.subr.mxu0 0.0
        %893 = vmatpush1.msra.mxu0 %v862
        %894 = vmatprep.subr.mxu0 0.0
        %895 = vmatpush1.msra.mxu0 %v863
        %896 = vmatprep.subr.mxu0 0.0
        %897 = vmatpush1.msra.mxu0 0.0
        %898 = vmatprep.subr.mxu0 0.0
        %899 = vmatpush1.msra.mxu0 0.0
        %900 = vmatprep.subr.mxu0 0.0
        %901 = vmatpush1.msra.mxu0 0.0
        %902 = vmatprep.subr.mxu0 0.0
        %903 = vmatpush1.msra.mxu0 0.0
        %904 = vmatprep.subr.mxu0 0.0
        %905 = vmatpush1.msra.mxu0 0.0
        %906 = vmatprep.subr.mxu0 0.0
        %907 = vmatpush1.msra.mxu0 0.0
        %908 = vmatprep.subr.mxu0 0.0
        %909 = vmatpush1.msra.mxu0 0.0
        %910 = vmatprep.subr.mxu0 0.0
        %911 = vmatpush1.msra.mxu0 0.0
        %912 = vmatprep.subr.mxu0 0.0
        %913 = vmatpush1.msra.mxu0 0.0
        %914 = vmatprep.subr.mxu0 0.0
        %915 = vmatpush1.msra.mxu0 0.0
        %916 = vmatprep.subr.mxu0 0.0
        %917 = vmatpush1.msra.mxu0 0.0
        %918 = vmatprep.subr.mxu0 0.0
        %919 = vmatpush1.msra.mxu0 0.0
        %920 = vmatprep.subr.mxu0 0.0
        %921 = vmatpush1.msra.mxu0 0.0
        %922 = vmatprep.subr.mxu0 0.0
        %923 = vmatpush1.msra.mxu0 0.0
        %924 = vmatprep.subr.mxu0 0.0
        %925 = vmatpush1.msra.mxu0 0.0
        %926 = vmatprep.subr.mxu0 0.0
        %927 = vmatpush1.msra.mxu0 0.0
        %928 = vmatprep.mubr.f32.mxu0 0.0
        %929 = vmatmul.mubr.f32.gmra.mrb[0].mxu0 %v328
        %v930 = vpop.f32.mrb[0].mxu0
        %v931 = vadd.f32 0.0, %v930
        %v932 = vpop.f32.mrb[0].mxu0
        %933 = vdwg.mxu0
        %s934 = scalar_lea.vmem %s3, 128
        %v935 = vld [vmem:[%s934] sm:$0xff]
        %v936 = vld [vmem:[%s934 + $0x8] sm:$0xff]
        %v937 = vld [vmem:[%s934 + $0x10] sm:$0xff]
        %v938 = vld [vmem:[%s934 + $0x18] sm:$0xff]
        %v939 = vld [vmem:[%s934 + $0x20] sm:$0xff]
        %v940 = vld [vmem:[%s934 + $0x28] sm:$0xff]
        %v941 = vld [vmem:[%s934 + $0x30] sm:$0xff]
        %v942 = vld [vmem:[%s934 + $0x38] sm:$0xff]
        %v943 = vld [vmem:[%s934 + $0x40] sm:$0xff]
        %v944 = vld [vmem:[%s934 + $0x48] sm:$0xff]
        %v945 = vld [vmem:[%s934 + $0x50] sm:$0xff]
        %v946 = vld [vmem:[%s934 + $0x58] sm:$0xff]
        %v947 = vld [vmem:[%s934 + $0x60] sm:$0xff]
        %v948 = vld [vmem:[%s934 + $0x68] sm:$0xff]
        %v949 = vld [vmem:[%s934 + $0x70] sm:$0xff]
        %v950 = vld [vmem:[%s934 + $0x78] sm:$0xff]
        %951 = vmatprep.subr.mxu0 0.0
        %952 = vmatpush1.msra.mxu0 %v935
        %953 = vmatprep.subr.mxu0 0.0
        %954 = vmatpush1.msra.mxu0 %v936
        %955 = vmatprep.subr.mxu0 0.0
        %956 = vmatpush1.msra.mxu0 %v937
        %957 = vmatprep.subr.mxu0 0.0
        %958 = vmatpush1.msra.mxu0 %v938
        %959 = vmatprep.subr.mxu0 0.0
        %960 = vmatpush1.msra.mxu0 %v939
        %961 = vmatprep.subr.mxu0 0.0
        %962 = vmatpush1.msra.mxu0 %v940
        %963 = vmatprep.subr.mxu0 0.0
        %964 = vmatpush1.msra.mxu0 %v941
        %965 = vmatprep.subr.mxu0 0.0
        %966 = vmatpush1.msra.mxu0 %v942
        %967 = vmatprep.subr.mxu0 0.0
        %968 = vmatpush1.msra.mxu0 %v943
        %969 = vmatprep.subr.mxu0 0.0
        %970 = vmatpush1.msra.mxu0 %v944
        %971 = vmatprep.subr.mxu0 0.0
        %972 = vmatpush1.msra.mxu0 %v945
        %973 = vmatprep.subr.mxu0 0.0
        %974 = vmatpush1.msra.mxu0 %v946
        %975 = vmatprep.subr.mxu0 0.0
        %976 = vmatpush1.msra.mxu0 %v947
        %977 = vmatprep.subr.mxu0 0.0
        %978 = vmatpush1.msra.mxu0 %v948
        %979 = vmatprep.subr.mxu0 0.0
        %980 = vmatpush1.msra.mxu0 %v949
        %981 = vmatprep.subr.mxu0 0.0
        %982 = vmatpush1.msra.mxu0 %v950
        %983 = vmatprep.subr.mxu0 0.0
        %984 = vmatpush1.msra.mxu0 0.0
        %985 = vmatprep.subr.mxu0 0.0
        %986 = vmatpush1.msra.mxu0 0.0
        %987 = vmatprep.subr.mxu0 0.0
        %988 = vmatpush1.msra.mxu0 0.0
        %989 = vmatprep.subr.mxu0 0.0
        %990 = vmatpush1.msra.mxu0 0.0
        %991 = vmatprep.subr.mxu0 0.0
        %992 = vmatpush1.msra.mxu0 0.0
        %993 = vmatprep.subr.mxu0 0.0
        %994 = vmatpush1.msra.mxu0 0.0
        %995 = vmatprep.subr.mxu0 0.0
        %996 = vmatpush1.msra.mxu0 0.0
        %997 = vmatprep.subr.mxu0 0.0
        %998 = vmatpush1.msra.mxu0 0.0
        %999 = vmatprep.subr.mxu0 0.0
        %1000 = vmatpush1.msra.mxu0 0.0
        %1001 = vmatprep.subr.mxu0 0.0
        %1002 = vmatpush1.msra.mxu0 0.0
        %1003 = vmatprep.subr.mxu0 0.0
        %1004 = vmatpush1.msra.mxu0 0.0
        %1005 = vmatprep.subr.mxu0 0.0
        %1006 = vmatpush1.msra.mxu0 0.0
        %1007 = vmatprep.subr.mxu0 0.0
        %1008 = vmatpush1.msra.mxu0 0.0
        %1009 = vmatprep.subr.mxu0 0.0
        %1010 = vmatpush1.msra.mxu0 0.0
        %1011 = vmatprep.subr.mxu0 0.0
        %1012 = vmatpush1.msra.mxu0 0.0
        %1013 = vmatprep.subr.mxu0 0.0
        %1014 = vmatpush1.msra.mxu0 0.0
        %1015 = vmatprep.mubr.f32.mxu0 0.0
        %1016 = vmatmul.mubr.f32.gmra.mrb[0].mxu0 %v328
        %v1017 = vpop.f32.mrb[0].mxu0
        %v1018 = vadd.f32 0.0, %v1017
        %v1019 = vpop.f32.mrb[0].mxu0
        %1020 = vdwg.mxu0
        %v1022 = vsel %vm592, %v844, 0
        %v1025 = vsel %vm592, %v931, 0
        %1027 = vmatprep.subr.mxu0 0.0
        %1028 = vmatpush1.xpose.msra.mxu0 %v1025
        %1029 = vmatprep.subr.mxu0 0.0
        %1030 = vmatpush1.xpose.msra.mxu0 0.0
        %1031 = vmatprep.subr.mxu0 0.0
        %1032 = vmatpush1.xpose.msra.mxu0 0.0
        %1033 = vmatprep.subr.mxu0 0.0
        %1034 = vmatpush1.xpose.msra.mxu0 0.0
        %1035 = vmatprep.subr.mxu0 0.0
        %1036 = vmatpush1.xpose.msra.mxu0 0.0
        %1037 = vmatprep.subr.mxu0 0.0
        %1038 = vmatpush1.xpose.msra.mxu0 0.0
        %1039 = vmatprep.subr.mxu0 0.0
        %1040 = vmatpush1.xpose.msra.mxu0 0.0
        %1041 = vmatprep.subr.mxu0 0.0
        %1042 = vmatpush1.xpose.msra.mxu0 0.0
        %1043 = vmatprep.subr.mxu0 0.0
        %1044 = vmatpush1.xpose.msra.mxu0 0.0
        %1045 = vmatprep.subr.mxu0 0.0
        %1046 = vmatpush1.xpose.msra.mxu0 0.0
        %1047 = vmatprep.subr.mxu0 0.0
        %1048 = vmatpush1.xpose.msra.mxu0 0.0
        %1049 = vmatprep.subr.mxu0 0.0
        %1050 = vmatpush1.xpose.msra.mxu0 0.0
        %1051 = vmatprep.subr.mxu0 0.0
        %1052 = vmatpush1.xpose.msra.mxu0 0.0
        %1053 = vmatprep.subr.mxu0 0.0
        %1054 = vmatpush1.xpose.msra.mxu0 0.0
        %1055 = vmatprep.subr.mxu0 0.0
        %1056 = vmatpush1.xpose.msra.mxu0 0.0
        %1057 = vmatprep.subr.mxu0 0.0
        %1058 = vmatpush1.xpose.msra.mxu0 0.0
        %1059 = vmatprep.subr.mxu0 0.0
        %1060 = vmatpush1.xpose.msra.mxu0 0.0
        %1061 = vmatprep.subr.mxu0 0.0
        %1062 = vmatpush1.xpose.msra.mxu0 0.0
        %1063 = vmatprep.subr.mxu0 0.0
        %1064 = vmatpush1.xpose.msra.mxu0 0.0
        %1065 = vmatprep.subr.mxu0 0.0
        %1066 = vmatpush1.xpose.msra.mxu0 0.0
        %1067 = vmatprep.subr.mxu0 0.0
        %1068 = vmatpush1.xpose.msra.mxu0 0.0
        %1069 = vmatprep.subr.mxu0 0.0
        %1070 = vmatpush1.xpose.msra.mxu0 0.0
        %1071 = vmatprep.subr.mxu0 0.0
        %1072 = vmatpush1.xpose.msra.mxu0 0.0
        %1073 = vmatprep.subr.mxu0 0.0
        %1074 = vmatpush1.xpose.msra.mxu0 0.0
        %1075 = vmatprep.subr.mxu0 0.0
        %1076 = vmatpush1.xpose.msra.mxu0 0.0
        %1077 = vmatprep.subr.mxu0 0.0
        %1078 = vmatpush1.xpose.msra.mxu0 0.0
        %1079 = vmatprep.subr.mxu0 0.0
        %1080 = vmatpush1.xpose.msra.mxu0 0.0
        %1081 = vmatprep.subr.mxu0 0.0
        %1082 = vmatpush1.xpose.msra.mxu0 0.0
        %1083 = vmatprep.subr.mxu0 0.0
        %1084 = vmatpush1.xpose.msra.mxu0 0.0
        %1085 = vmatprep.subr.mxu0 0.0
        %1086 = vmatpush1.xpose.msra.mxu0 0.0
        %1087 = vmatprep.subr.mxu0 0.0
        %1088 = vmatpush1.xpose.msra.mxu0 0.0
        %1089 = vmatprep.subr.mxu0 0.0
        %1090 = vmatpush1.xpose.msra.mxu0 0.0
        %1091 = vmatprep.mubr.f32.mxu0 0.0
        %1092 = vmatmul.mubr.f32.gmra.mrb[0].mxu0 %v1022
        %v1093 = vpop.f32.mrb[0].mxu0
        %v1094 = vadd.f32 0.0, %v1093
        %v1095 = vpop.f32.mrb[0].mxu0
        %1096 = vdwg.mxu0
        %v1097 = vmul.f32 %v1094, 0.17677669
        %v1098 = vsel %vm333, %v1097, -1.7677669e+09
        %v1099 = vsel %vm671, %v1098, -inf
        %1100 = vmax.xlane.f32.xlu0 %v1099
        %v1101 = vpop.xlane.xlu0 %1100
        %v1102 = vsub.f32 %v1098, %v1101
        %v1103 = vmul.f32 %v1102, 1.442695
        %v1104 = vpow.pop %v1103
        %v1105 = vsel %vm671, %v1104, 0.0
        %1106 = vadd.xlane.f32.xlu0 %v1105
        %v1107 = vpop.xlane.xlu0 %1106
        %v1108 = vrcp.pop %v1107
        %v1109 = vmul.f32 %v1104, %v1108
        %v1111 = vsel %vm671, %v1109, 0
        %1113 = vmatprep.subr.mxu0 0.0
        %1114 = vmatpush1.msra.mxu0 %v1018
        %1115 = vmatprep.subr.mxu0 0.0
        %1116 = vmatpush1.msra.mxu0 0.0
        %1117 = vmatprep.subr.mxu0 0.0
        %1118 = vmatpush1.msra.mxu0 0.0
        %1119 = vmatprep.subr.mxu0 0.0
        %1120 = vmatpush1.msra.mxu0 0.0
        %1121 = vmatprep.subr.mxu0 0.0
        %1122 = vmatpush1.msra.mxu0 0.0
        %1123 = vmatprep.subr.mxu0 0.0
        %1124 = vmatpush1.msra.mxu0 0.0
        %1125 = vmatprep.subr.mxu0 0.0
        %1126 = vmatpush1.msra.mxu0 0.0
        %1127 = vmatprep.subr.mxu0 0.0
        %1128 = vmatpush1.msra.mxu0 0.0
        %1129 = vmatprep.subr.mxu0 0.0
        %1130 = vmatpush1.msra.mxu0 0.0
        %1131 = vmatprep.subr.mxu0 0.0
        %1132 = vmatpush1.msra.mxu0 0.0
        %1133 = vmatprep.subr.mxu0 0.0
        %1134 = vmatpush1.msra.mxu0 0.0
        %1135 = vmatprep.subr.mxu0 0.0
        %1136 = vmatpush1.msra.mxu0 0.0
        %1137 = vmatprep.subr.mxu0 0.0
        %1138 = vmatpush1.msra.mxu0 0.0
        %1139 = vmatprep.subr.mxu0 0.0
        %1140 = vmatpush1.msra.mxu0 0.0
        %1141 = vmatprep.subr.mxu0 0.0
        %1142 = vmatpush1.msra.mxu0 0.0
        %1143 = vmatprep.subr.mxu0 0.0
        %1144 = vmatpush1.msra.mxu0 0.0
        %1145 = vmatprep.subr.mxu0 0.0
        %1146 = vmatpush1.msra.mxu0 0.0
        %1147 = vmatprep.subr.mxu0 0.0
        %1148 = vmatpush1.msra.mxu0 0.0
        %1149 = vmatprep.subr.mxu0 0.0
        %1150 = vmatpush1.msra.mxu0 0.0
        %1151 = vmatprep.subr.mxu0 0.0
        %1152 = vmatpush1.msra.mxu0 0.0
        %1153 = vmatprep.subr.mxu0 0.0
        %1154 = vmatpush1.msra.mxu0 0.0
        %1155 = vmatprep.subr.mxu0 0.0
        %1156 = vmatpush1.msra.mxu0 0.0
        %1157 = vmatprep.subr.mxu0 0.0
        %1158 = vmatpush1.msra.mxu0 0.0
        %1159 = vmatprep.subr.mxu0 0.0
        %1160 = vmatpush1.msra.mxu0 0.0
        %1161 = vmatprep.subr.mxu0 0.0
        %1162 = vmatpush1.msra.mxu0 0.0
        %1163 = vmatprep.subr.mxu0 0.0
        %1164 = vmatpush1.msra.mxu0 0.0
        %1165 = vmatprep.subr.mxu0 0.0
        %1166 = vmatpush1.msra.mxu0 0.0
        %1167 = vmatprep.subr.mxu0 0.0
        %1168 = vmatpush1.msra.mxu0 0.0
        %1169 = vmatprep.subr.mxu0 0.0
        %1170 = vmatpush1.msra.mxu0 0.0
        %1171 = vmatprep.subr.mxu0 0.0
        %1172 = vmatpush1.msra.mxu0 0.0
        %1173 = vmatprep.subr.mxu0 0.0
        %1174 = vmatpush1.msra.mxu0 0.0
        %1175 = vmatprep.subr.mxu0 0.0
        %1176 = vmatpush1.msra.mxu0 0.0
        %1177 = vmatprep.mubr.f32.mxu0 0.0
        %1178 = vmatmul.mubr.f32.gmra.mrb[0].mxu0 %v1111
        %v1179 = vpop.f32.mrb[0].mxu0
        %v1180 = vadd.f32 0.0, %v1179
        %v1181 = vpop.f32.mrb[0].mxu0
        %1182 = vdwg.mxu0
        %s1183 = scalar_lea.vmem %s4, 32
        %v1184 = vld [vmem:[%s1183] sm:$0xff]
        %v1185 = vld [vmem:[%s1183 + $0x8] sm:$0xff]
        %v1186 = vld [vmem:[%s1183 + $0x10] sm:$0xff]
        %v1187 = vld [vmem:[%s1183 + $0x18] sm:$0xff]
        %v1189 = vsel %vm592, %v1180, 0
        %1191 = vmatprep.subr.mxu0 0.0
        %1192 = vmatpush1.msra.mxu0 %v1184
        %1193 = vmatprep.subr.mxu0 0.0
        %1194 = vmatpush1.msra.mxu0 %v1185
        %1195 = vmatprep.subr.mxu0 0.0
        %1196 = vmatpush1.msra.mxu0 %v1186
        %1197 = vmatprep.subr.mxu0 0.0
        %1198 = vmatpush1.msra.mxu0 %v1187
        %1199 = vmatprep.subr.mxu0 0.0
        %1200 = vmatpush1.msra.mxu0 0.0
        %1201 = vmatprep.subr.mxu0 0.0
        %1202 = vmatpush1.msra.mxu0 0.0
        %1203 = vmatprep.subr.mxu0 0.0
        %1204 = vmatpush1.msra.mxu0 0.0
        %1205 = vmatprep.subr.mxu0 0.0
        %1206 = vmatpush1.msra.mxu0 0.0
        %1207 = vmatprep.subr.mxu0 0.0
        %1208 = vmatpush1.msra.mxu0 0.0
        %1209 = vmatprep.subr.mxu0 0.0
        %1210 = vmatpush1.msra.mxu0 0.0
        %1211 = vmatprep.subr.mxu0 0.0
        %1212 = vmatpush1.msra.mxu0 0.0
        %1213 = vmatprep.subr.mxu0 0.0
        %1214 = vmatpush1.msra.mxu0 0.0
        %1215 = vmatprep.subr.mxu0 0.0
        %1216 = vmatpush1.msra.mxu0 0.0
        %1217 = vmatprep.subr.mxu0 0.0
        %1218 = vmatpush1.msra.mxu0 0.0
        %1219 = vmatprep.subr.mxu0 0.0
        %1220 = vmatpush1.msra.mxu0 0.0
        %1221 = vmatprep.subr.mxu0 0.0
        %1222 = vmatpush1.msra.mxu0 0.0
        %1223 = vmatprep.subr.mxu0 0.0
        %1224 = vmatpush1.msra.mxu0 0.0
        %1225 = vmatprep.subr.mxu0 0.0
        %1226 = vmatpush1.msra.mxu0 0.0
        %1227 = vmatprep.subr.mxu0 0.0
        %1228 = vmatpush1.msra.mxu0 0.0
        %1229 = vmatprep.subr.mxu0 0.0
        %1230 = vmatpush1.msra.mxu0 0.0
        %1231 = vmatprep.subr.mxu0 0.0
        %1232 = vmatpush1.msra.mxu0 0.0
        %1233 = vmatprep.subr.mxu0 0.0
        %1234 = vmatpush1.msra.mxu0 0.0
        %1235 = vmatprep.subr.mxu0 0.0
        %1236 = vmatpush1.msra.mxu0 0.0
        %1237 = vmatprep.subr.mxu0 0.0
        %1238 = vmatpush1.msra.mxu0 0.0
        %1239 = vmatprep.subr.mxu0 0.0
        %1240 = vmatpush1.msra.mxu0 0.0
        %1241 = vmatprep.subr.mxu0 0.0
        %1242 = vmatpush1.msra.mxu0 0.0
        %1243 = vmatprep.subr.mxu0 0.0
        %1244 = vmatpush1.msra.mxu0 0.0
        %1245 = vmatprep.subr.mxu0 0.0
        %1246 = vmatpush1.msra.mxu0 0.0
        %1247 = vmatprep.subr.mxu0 0.0
        %1248 = vmatpush1.msra.mxu0 0.0
        %1249 = vmatprep.subr.mxu0 0.0
        %1250 = vmatpush1.msra.mxu0 0.0
        %1251 = vmatprep.subr.mxu0 0.0
        %1252 = vmatpush1.msra.mxu0 0.0
        %1253 = vmatprep.subr.mxu0 0.0
        %1254 = vmatpush1.msra.mxu0 0.0
        %1255 = vmatprep.mubr.f32.mxu0 0.0
        %1256 = vmatmul.mubr.f32.gmra.mrb[0].mxu0 %v1189
        %v1257 = vpop.f32.mrb[0].mxu0
        %v1258 = vadd.f32 0.0, %v1257
        %v1259 = vpop.f32.mrb[0].mxu0
        %1260 = vdwg.mxu0
        %v1262 = vsel %vm592, %v753, 0
        %1264 = vmatprep.subr.mxu0 0.0
        %1265 = vmatpush1.msra.mxu0 %v756
        %1266 = vmatprep.subr.mxu0 0.0
        %1267 = vmatpush1.msra.mxu0 %v757
        %1268 = vmatprep.subr.mxu0 0.0
        %1269 = vmatpush1.msra.mxu0 %v758
        %1270 = vmatprep.subr.mxu0 0.0
        %1271 = vmatpush1.msra.mxu0 %v759
        %1272 = vmatprep.subr.mxu0 0.0
        %1273 = vmatpush1.msra.mxu0 0.0
        %1274 = vmatprep.subr.mxu0 0.0
        %1275 = vmatpush1.msra.mxu0 0.0
        %1276 = vmatprep.subr.mxu0 0.0
        %1277 = vmatpush1.msra.mxu0 0.0
        %1278 = vmatprep.subr.mxu0 0.0
        %1279 = vmatpush1.msra.mxu0 0.0
        %1280 = vmatprep.subr.mxu0 0.0
        %1281 = vmatpush1.msra.mxu0 0.0
        %1282 = vmatprep.subr.mxu0 0.0
        %1283 = vmatpush1.msra.mxu0 0.0
        %1284 = vmatprep.subr.mxu0 0.0
        %1285 = vmatpush1.msra.mxu0 0.0
        %1286 = vmatprep.subr.mxu0 0.0
        %1287 = vmatpush1.msra.mxu0 0.0
        %1288 = vmatprep.subr.mxu0 0.0
        %1289 = vmatpush1.msra.mxu0 0.0
        %1290 = vmatprep.subr.mxu0 0.0
        %1291 = vmatpush1.msra.mxu0 0.0
        %1292 = vmatprep.subr.mxu0 0.0
        %1293 = vmatpush1.msra.mxu0 0.0
        %1294 = vmatprep.subr.mxu0 0.0
        %1295 = vmatpush1.msra.mxu0 0.0
        %1296 = vmatprep.subr.mxu0 0.0
        %1297 = vmatpush1.msra.mxu0 0.0
        %1298 = vmatprep.subr.mxu0 0.0
        %1299 = vmatpush1.msra.mxu0 0.0
        %1300 = vmatprep.subr.mxu0 0.0
        %1301 = vmatpush1.msra.mxu0 0.0
        %1302 = vmatprep.subr.mxu0 0.0
        %1303 = vmatpush1.msra.mxu0 0.0
        %1304 = vmatprep.subr.mxu0 0.0
        %1305 = vmatpush1.msra.mxu0 0.0
        %1306 = vmatprep.subr.mxu0 0.0
        %1307 = vmatpush1.msra.mxu0 0.0
        %1308 = vmatprep.subr.mxu0 0.0
        %1309 = vmatpush1.msra.mxu0 0.0
        %1310 = vmatprep.subr.mxu0 0.0
        %1311 = vmatpush1.msra.mxu0 0.0
        %1312 = vmatprep.subr.mxu0 0.0
        %1313 = vmatpush1.msra.mxu0 0.0
        %1314 = vmatprep.subr.mxu0 0.0
        %1315 = vmatpush1.msra.mxu0 0.0
        %1316 = vmatprep.subr.mxu0 0.0
        %1317 = vmatpush1.msra.mxu0 0.0
        %1318 = vmatprep.subr.mxu0 0.0
        %1319 = vmatpush1.msra.mxu0 0.0
        %1320 = vmatprep.subr.mxu0 0.0
        %1321 = vmatpush1.msra.mxu0 0.0
        %1322 = vmatprep.subr.mxu0 0.0
        %1323 = vmatpush1.msra.mxu0 0.0
        %1324 = vmatprep.subr.mxu0 0.0
        %1325 = vmatpush1.msra.mxu0 0.0
        %1326 = vmatprep.subr.mxu0 0.0
        %1327 = vmatpush1.msra.mxu0 0.0
        %1328 = vmatprep.mubr.f32.mxu0 0.0
        %1329 = vmatmul.mubr.f32.gmra.mrb[0].mxu0 %v1262
        %v1330 = vpop.f32.mrb[0].mxu0
        %v1331 = vadd.f32 %v1258, %v1330
        %v1332 = vpop.f32.mrb[0].mxu0
        %1333 = vdwg.mxu0
        %s1334 = scalar_lea.vmem %s1, 256
        %v1335 = vld [vmem:[%s1334] sm:$0xff]
        %v1336 = vld [vmem:[%s1334 + $0x8] sm:$0xff]
        %v1337 = vld [vmem:[%s1334 + $0x10] sm:$0xff]
        %v1338 = vld [vmem:[%s1334 + $0x18] sm:$0xff]
        %v1339 = vld [vmem:[%s1334 + $0x20] sm:$0xff]
        %v1340 = vld [vmem:[%s1334 + $0x28] sm:$0xff]
        %v1341 = vld [vmem:[%s1334 + $0x30] sm:$0xff]
        %v1342 = vld [vmem:[%s1334 + $0x38] sm:$0xff]
        %v1343 = vld [vmem:[%s1334 + $0x40] sm:$0xff]
        %v1344 = vld [vmem:[%s1334 + $0x48] sm:$0xff]
        %v1345 = vld [vmem:[%s1334 + $0x50] sm:$0xff]
        %v1346 = vld [vmem:[%s1334 + $0x58] sm:$0xff]
        %v1347 = vld [vmem:[%s1334 + $0x60] sm:$0xff]
        %v1348 = vld [vmem:[%s1334 + $0x68] sm:$0xff]
        %v1349 = vld [vmem:[%s1334 + $0x70] sm:$0xff]
        %v1350 = vld [vmem:[%s1334 + $0x78] sm:$0xff]
        %1351 = vmatprep.subr.mxu0 0.0
        %1352 = vmatpush1.msra.mxu0 %v1335
        %1353 = vmatprep.subr.mxu0 0.0
        %1354 = vmatpush1.msra.mxu0 %v1336
        %1355 = vmatprep.subr.mxu0 0.0
        %1356 = vmatpush1.msra.mxu0 %v1337
        %1357 = vmatprep.subr.mxu0 0.0
        %1358 = vmatpush1.msra.mxu0 %v1338
        %1359 = vmatprep.subr.mxu0 0.0
        %1360 = vmatpush1.msra.mxu0 %v1339
        %1361 = vmatprep.subr.mxu0 0.0
        %1362 = vmatpush1.msra.mxu0 %v1340
        %1363 = vmatprep.subr.mxu0 0.0
        %1364 = vmatpush1.msra.mxu0 %v1341
        %1365 = vmatprep.subr.mxu0 0.0
        %1366 = vmatpush1.msra.mxu0 %v1342
        %1367 = vmatprep.subr.mxu0 0.0
        %1368 = vmatpush1.msra.mxu0 %v1343
        %1369 = vmatprep.subr.mxu0 0.0
        %1370 = vmatpush1.msra.mxu0 %v1344
        %1371 = vmatprep.subr.mxu0 0.0
        %1372 = vmatpush1.msra.mxu0 %v1345
        %1373 = vmatprep.subr.mxu0 0.0
        %1374 = vmatpush1.msra.mxu0 %v1346
        %1375 = vmatprep.subr.mxu0 0.0
        %1376 = vmatpush1.msra.mxu0 %v1347
        %1377 = vmatprep.subr.mxu0 0.0
        %1378 = vmatpush1.msra.mxu0 %v1348
        %1379 = vmatprep.subr.mxu0 0.0
        %1380 = vmatpush1.msra.mxu0 %v1349
        %1381 = vmatprep.subr.mxu0 0.0
        %1382 = vmatpush1.msra.mxu0 %v1350
        %1383 = vmatprep.subr.mxu0 0.0
        %1384 = vmatpush1.msra.mxu0 0.0
        %1385 = vmatprep.subr.mxu0 0.0
        %1386 = vmatpush1.msra.mxu0 0.0
        %1387 = vmatprep.subr.mxu0 0.0
        %1388 = vmatpush1.msra.mxu0 0.0
        %1389 = vmatprep.subr.mxu0 0.0
        %1390 = vmatpush1.msra.mxu0 0.0
        %1391 = vmatprep.subr.mxu0 0.0
        %1392 = vmatpush1.msra.mxu0 0.0
        %1393 = vmatprep.subr.mxu0 0.0
        %1394 = vmatpush1.msra.mxu0 0.0
        %1395 = vmatprep.subr.mxu0 0.0
        %1396 = vmatpush1.msra.mxu0 0.0
        %1397 = vmatprep.subr.mxu0 0.0
        %1398 = vmatpush1.msra.mxu0 0.0
        %1399 = vmatprep.subr.mxu0 0.0
        %1400 = vmatpush1.msra.mxu0 0.0
        %1401 = vmatprep.subr.mxu0 0.0
        %1402 = vmatpush1.msra.mxu0 0.0
        %1403 = vmatprep.subr.mxu0 0.0
        %1404 = vmatpush1.msra.mxu0 0.0
        %1405 = vmatprep.subr.mxu0 0.0
        %1406 = vmatpush1.msra.mxu0 0.0
        %1407 = vmatprep.subr.mxu0 0.0
        %1408 = vmatpush1.msra.mxu0 0.0
        %1409 = vmatprep.subr.mxu0 0.0
        %1410 = vmatpush1.msra.mxu0 0.0
        %1411 = vmatprep.subr.mxu0 0.0
        %1412 = vmatpush1.msra.mxu0 0.0
        %1413 = vmatprep.subr.mxu0 0.0
        %1414 = vmatpush1.msra.mxu0 0.0
        %1415 = vmatprep.mubr.f32.mxu0 0.0
        %1416 = vmatmul.mubr.f32.gmra.mrb[0].mxu0 %v328
        %v1417 = vpop.f32.mrb[0].mxu0
        %v1418 = vadd.f32 0.0, %v1417
        %v1419 = vpop.f32.mrb[0].mxu0
        %1420 = vdwg.mxu0
        %s1421 = scalar_lea.vmem %s2, 256
        %v1422 = vld [vmem:[%s1421] sm:$0xff]
        %v1423 = vld [vmem:[%s1421 + $0x8] sm:$0xff]
        %v1424 = vld [vmem:[%s1421 + $0x10] sm:$0xff]
        %v1425 = vld [vmem:[%s1421 + $0x18] sm:$0xff]
        %v1426 = vld [vmem:[%s1421 + $0x20] sm:$0xff]
        %v1427 = vld [vmem:[%s1421 + $0x28] sm:$0xff]
        %v1428 = vld [vmem:[%s1421 + $0x30] sm:$0xff]
        %v1429 = vld [vmem:[%s1421 + $0x38] sm:$0xff]
        %v1430 = vld [vmem:[%s1421 + $0x40] sm:$0xff]
        %v1431 = vld [vmem:[%s1421 + $0x48] sm:$0xff]
        %v1432 = vld [vmem:[%s1421 + $0x50] sm:$0xff]
        %v1433 = vld [vmem:[%s1421 + $0x58] sm:$0xff]
        %v1434 = vld [vmem:[%s1421 + $0x60] sm:$0xff]
        %v1435 = vld [vmem:[%s1421 + $0x68] sm:$0xff]
        %v1436 = vld [vmem:[%s1421 + $0x70] sm:$0xff]
        %v1437 = vld [vmem:[%s1421 + $0x78] sm:$0xff]
        %1438 = vmatprep.subr.mxu0 0.0
        %1439 = vmatpush1.msra.mxu0 %v1422
        %1440 = vmatprep.subr.mxu0 0.0
        %1441 = vmatpush1.msra.mxu0 %v1423
        %1442 = vmatprep.subr.mxu0 0.0
        %1443 = vmatpush1.msra.mxu0 %v1424
        %1444 = vmatprep.subr.mxu0 0.0
        %1445 = vmatpush1.msra.mxu0 %v1425
        %1446 = vmatprep.subr.mxu0 0.0
        %1447 = vmatpush1.msra.mxu0 %v1426
        %1448 = vmatprep.subr.mxu0 0.0
        %1449 = vmatpush1.msra.mxu0 %v1427
        %1450 = vmatprep.subr.mxu0 0.0
        %1451 = vmatpush1.msra.mxu0 %v1428
        %1452 = vmatprep.subr.mxu0 0.0
        %1453 = vmatpush1.msra.mxu0 %v1429
        %1454 = vmatprep.subr.mxu0 0.0
        %1455 = vmatpush1.msra.mxu0 %v1430
        %1456 = vmatprep.subr.mxu0 0.0
        %1457 = vmatpush1.msra.mxu0 %v1431
        %1458 = vmatprep.subr.mxu0 0.0
        %1459 = vmatpush1.msra.mxu0 %v1432
        %1460 = vmatprep.subr.mxu0 0.0
        %1461 = vmatpush1.msra.mxu0 %v1433
        %1462 = vmatprep.subr.mxu0 0.0
        %1463 = vmatpush1.msra.mxu0 %v1434
        %1464 = vmatprep.subr.mxu0 0.0
        %1465 = vmatpush1.msra.mxu0 %v1435
        %1466 = vmatprep.subr.mxu0 0.0
        %1467 = vmatpush1.msra.mxu0 %v1436
        %1468 = vmatprep.subr.mxu0 0.0
        %1469 = vmatpush1.msra.mxu0 %v1437
        %1470 = vmatprep.subr.mxu0 0.0
        %1471 = vmatpush1.msra.mxu0 0.0
        %1472 = vmatprep.subr.mxu0 0.0
        %1473 = vmatpush1.msra.mxu0 0.0
        %1474 = vmatprep.subr.mxu0 0.0
        %1475 = vmatpush1.msra.mxu0 0.0
        %1476 = vmatprep.subr.mxu0 0.0
        %1477 = vmatpush1.msra.mxu0 0.0
        %1478 = vmatprep.subr.mxu0 0.0
        %1479 = vmatpush1.msra.mxu0 0.0
        %1480 = vmatprep.subr.mxu0 0.0
        %1481 = vmatpush1.msra.mxu0 0.0
        %1482 = vmatprep.subr.mxu0 0.0
        %1483 = vmatpush1.msra.mxu0 0.0
        %1484 = vmatprep.subr.mxu0 0.0
        %1485 = vmatpush1.msra.mxu0 0.0
        %1486 = vmatprep.subr.mxu0 0.0
        %1487 = vmatpush1.msra.mxu0 0.0
        %1488 = vmatprep.subr.mxu0 0.0
        %1489 = vmatpush1.msra.mxu0 0.0
        %1490 = vmatprep.subr.mxu0 0.0
        %1491 = vmatpush1.msra.mxu0 0.0
        %1492 = vmatprep.subr.mxu0 0.0
        %1493 = vmatpush1.msra.mxu0 0.0
        %1494 = vmatprep.subr.mxu0 0.0
        %1495 = vmatpush1.msra.mxu0 0.0
        %1496 = vmatprep.subr.mxu0 0.0
        %1497 = vmatpush1.msra.mxu0 0.0
        %1498 = vmatprep.subr.mxu0 0.0
        %1499 = vmatpush1.msra.mxu0 0.0
        %1500 = vmatprep.subr.mxu0 0.0
        %1501 = vmatpush1.msra.mxu0 0.0
        %1502 = vmatprep.mubr.f32.mxu0 0.0
        %1503 = vmatmul.mubr.f32.gmra.mrb[0].mxu0 %v328
        %v1504 = vpop.f32.mrb[0].mxu0
        %v1505 = vadd.f32 0.0, %v1504
        %v1506 = vpop.f32.mrb[0].mxu0
        %1507 = vdwg.mxu0
        %s1508 = scalar_lea.vmem %s3, 256
        %v1509 = vld [vmem:[%s1508] sm:$0xff]
        %v1510 = vld [vmem:[%s1508 + $0x8] sm:$0xff]
        %v1511 = vld [vmem:[%s1508 + $0x10] sm:$0xff]
        %v1512 = vld [vmem:[%s1508 + $0x18] sm:$0xff]
        %v1513 = vld [vmem:[%s1508 + $0x20] sm:$0xff]
        %v1514 = vld [vmem:[%s1508 + $0x28] sm:$0xff]
        %v1515 = vld [vmem:[%s1508 + $0x30] sm:$0xff]
        %v1516 = vld [vmem:[%s1508 + $0x38] sm:$0xff]
        %v1517 = vld [vmem:[%s1508 + $0x40] sm:$0xff]
        %v1518 = vld [vmem:[%s1508 + $0x48] sm:$0xff]
        %v1519 = vld [vmem:[%s1508 + $0x50] sm:$0xff]
        %v1520 = vld [vmem:[%s1508 + $0x58] sm:$0xff]
        %v1521 = vld [vmem:[%s1508 + $0x60] sm:$0xff]
        %v1522 = vld [vmem:[%s1508 + $0x68] sm:$0xff]
        %v1523 = vld [vmem:[%s1508 + $0x70] sm:$0xff]
        %v1524 = vld [vmem:[%s1508 + $0x78] sm:$0xff]
        %1525 = vmatprep.subr.mxu0 0.0
        %1526 = vmatpush1.msra.mxu0 %v1509
        %1527 = vmatprep.subr.mxu0 0.0
        %1528 = vmatpush1.msra.mxu0 %v1510
        %1529 = vmatprep.subr.mxu0 0.0
        %1530 = vmatpush1.msra.mxu0 %v1511
        %1531 = vmatprep.subr.mxu0 0.0
        %1532 = vmatpush1.msra.mxu0 %v1512
        %1533 = vmatprep.subr.mxu0 0.0
        %1534 = vmatpush1.msra.mxu0 %v1513
        %1535 = vmatprep.subr.mxu0 0.0
        %1536 = vmatpush1.msra.mxu0 %v1514
        %1537 = vmatprep.subr.mxu0 0.0
        %1538 = vmatpush1.msra.mxu0 %v1515
        %1539 = vmatprep.subr.mxu0 0.0
        %1540 = vmatpush1.msra.mxu0 %v1516
        %1541 = vmatprep.subr.mxu0 0.0
        %1542 = vmatpush1.msra.mxu0 %v1517
        %1543 = vmatprep.subr.mxu0 0.0
        %1544 = vmatpush1.msra.mxu0 %v1518
        %1545 = vmatprep.subr.mxu0 0.0
        %1546 = vmatpush1.msra.mxu0 %v1519
        %1547 = vmatprep.subr.mxu0 0.0
        %1548 = vmatpush1.msra.mxu0 %v1520
        %1549 = vmatprep.subr.mxu0 0.0
        %1550 = vmatpush1.msra.mxu0 %v1521
        %1551 = vmatprep.subr.mxu0 0.0
        %1552 = vmatpush1.msra.mxu0 %v1522
        %1553 = vmatprep.subr.mxu0 0.0
        %1554 = vmatpush1.msra.mxu0 %v1523
        %1555 = vmatprep.subr.mxu0 0.0
        %1556 = vmatpush1.msra.mxu0 %v1524
        %1557 = vmatprep.subr.mxu0 0.0
        %1558 = vmatpush1.msra.mxu0 0.0
        %1559 = vmatprep.subr.mxu0 0.0
        %1560 = vmatpush1.msra.mxu0 0.0
        %1561 = vmatprep.subr.mxu0 0.0
        %1562 = vmatpush1.msra.mxu0 0.0
        %1563 = vmatprep.subr.mxu0 0.0
        %1564 = vmatpush1.msra.mxu0 0.0
        %1565 = vmatprep.subr.mxu0 0.0
        %1566 = vmatpush1.msra.mxu0 0.0
        %1567 = vmatprep.subr.mxu0 0.0
        %1568 = vmatpush1.msra.mxu0 0.0
        %1569 = vmatprep.subr.mxu0 0.0
        %1570 = vmatpush1.msra.mxu0 0.0
        %1571 = vmatprep.subr.mxu0 0.0
        %1572 = vmatpush1.msra.mxu0 0.0
        %1573 = vmatprep.subr.mxu0 0.0
        %1574 = vmatpush1.msra.mxu0 0.0
        %1575 = vmatprep.subr.mxu0 0.0
        %1576 = vmatpush1.msra.mxu0 0.0
        %1577 = vmatprep.subr.mxu0 0.0
        %1578 = vmatpush1.msra.mxu0 0.0
        %1579 = vmatprep.subr.mxu0 0.0
        %1580 = vmatpush1.msra.mxu0 0.0
        %1581 = vmatprep.subr.mxu0 0.0
        %1582 = vmatpush1.msra.mxu0 0.0
        %1583 = vmatprep.subr.mxu0 0.0
        %1584 = vmatpush1.msra.mxu0 0.0
        %1585 = vmatprep.subr.mxu0 0.0
        %1586 = vmatpush1.msra.mxu0 0.0
        %1587 = vmatprep.subr.mxu0 0.0
        %1588 = vmatpush1.msra.mxu0 0.0
        %1589 = vmatprep.mubr.f32.mxu0 0.0
        %1590 = vmatmul.mubr.f32.gmra.mrb[0].mxu0 %v328
        %v1591 = vpop.f32.mrb[0].mxu0
        %v1592 = vadd.f32 0.0, %v1591
        %v1593 = vpop.f32.mrb[0].mxu0
        %1594 = vdwg.mxu0
        %v1596 = vsel %vm592, %v1418, 0
        %v1599 = vsel %vm592, %v1505, 0
        %1601 = vmatprep.subr.mxu0 0.0
        %1602 = vmatpush1.xpose.msra.mxu0 %v1599
        %1603 = vmatprep.subr.mxu0 0.0
        %1604 = vmatpush1.xpose.msra.mxu0 0.0
        %1605 = vmatprep.subr.mxu0 0.0
        %1606 = vmatpush1.xpose.msra.mxu0 0.0
        %1607 = vmatprep.subr.mxu0 0.0
        %1608 = vmatpush1.xpose.msra.mxu0 0.0
        %1609 = vmatprep.subr.mxu0 0.0
        %1610 = vmatpush1.xpose.msra.mxu0 0.0
        %1611 = vmatprep.subr.mxu0 0.0
        %1612 = vmatpush1.xpose.msra.mxu0 0.0
        %1613 = vmatprep.subr.mxu0 0.0
        %1614 = vmatpush1.xpose.msra.mxu0 0.0
        %1615 = vmatprep.subr.mxu0 0.0
        %1616 = vmatpush1.xpose.msra.mxu0 0.0
        %1617 = vmatprep.subr.mxu0 0.0
        %1618 = vmatpush1.xpose.msra.mxu0 0.0
        %1619 = vmatprep.subr.mxu0 0.0
        %1620 = vmatpush1.xpose.msra.mxu0 0.0
        %1621 = vmatprep.subr.mxu0 0.0
        %1622 = vmatpush1.xpose.msra.mxu0 0.0
        %1623 = vmatprep.subr.mxu0 0.0
        %1624 = vmatpush1.xpose.msra.mxu0 0.0
        %1625 = vmatprep.subr.mxu0 0.0
        %1626 = vmatpush1.xpose.msra.mxu0 0.0
        %1627 = vmatprep.subr.mxu0 0.0
        %1628 = vmatpush1.xpose.msra.mxu0 0.0
        %1629 = vmatprep.subr.mxu0 0.0
        %1630 = vmatpush1.xpose.msra.mxu0 0.0
        %1631 = vmatprep.subr.mxu0 0.0
        %1632 = vmatpush1.xpose.msra.mxu0 0.0
        %1633 = vmatprep.subr.mxu0 0.0
        %1634 = vmatpush1.xpose.msra.mxu0 0.0
        %1635 = vmatprep.subr.mxu0 0.0
        %1636 = vmatpush1.xpose.msra.mxu0 0.0
        %1637 = vmatprep.subr.mxu0 0.0
        %1638 = vmatpush1.xpose.msra.mxu0 0.0
        %1639 = vmatprep.subr.mxu0 0.0
        %1640 = vmatpush1.xpose.msra.mxu0 0.0
        %1641 = vmatprep.subr.mxu0 0.0
        %1642 = vmatpush1.xpose.msra.mxu0 0.0
        %1643 = vmatprep.subr.mxu0 0.0
        %1644 = vmatpush1.xpose.msra.mxu0 0.0
        %1645 = vmatprep.subr.mxu0 0.0
        %1646 = vmatpush1.xpose.msra.mxu0 0.0
        %1647 = vmatprep.subr.mxu0 0.0
        %1648 = vmatpush1.xpose.msra.mxu0 0.0
        %1649 = vmatprep.subr.mxu0 0.0
        %1650 = vmatpush1.xpose.msra.mxu0 0.0
        %1651 = vmatprep.subr.mxu0 0.0
        %1652 = vmatpush1.xpose.msra.mxu0 0.0
        %1653 = vmatprep.subr.mxu0 0.0
        %1654 = vmatpush1.xpose.msra.mxu0 0.0
        %1655 = vmatprep.subr.mxu0 0.0
        %1656 = vmatpush1.xpose.msra.mxu0 0.0
        %1657 = vmatprep.subr.mxu0 0.0
        %1658 = vmatpush1.xpose.msra.mxu0 0.0
        %1659 = vmatprep.subr.mxu0 0.0
        %1660 = vmatpush1.xpose.msra.mxu0 0.0
        %1661 = vmatprep.subr.mxu0 0.0
        %1662 = vmatpush1.xpose.msra.mxu0 0.0
        %1663 = vmatprep.subr.mxu0 0.0
        %1664 = vmatpush1.xpose.msra.mxu0 0.0
        %1665 = vmatprep.mubr.f32.mxu0 0.0
        %1666 = vmatmul.mubr.f32.gmra.mrb[0].mxu0 %v1596
        %v1667 = vpop.f32.mrb[0].mxu0
        %v1668 = vadd.f32 0.0, %v1667
        %v1669 = vpop.f32.mrb[0].mxu0
        %1670 = vdwg.mxu0
        %v1671 = vmul.f32 %v1668, 0.17677669
        %v1672 = vsel %vm333, %v1671, -1.7677669e+09
        %v1673 = vsel %vm671, %v1672, -inf
        %1674 = vmax.xlane.f32.xlu0 %v1673
        %v1675 = vpop.xlane.xlu0 %1674
        %v1676 = vsub.f32 %v1672, %v1675
        %v1677 = vmul.f32 %v1676, 1.442695
        %v1678 = vpow.pop %v1677
        %v1679 = vsel %vm671, %v1678, 0.0
        %1680 = vadd.xlane.f32.xlu0 %v1679
        %v1681 = vpop.xlane.xlu0 %1680
        %v1682 = vrcp.pop %v1681
        %v1683 = vmul.f32 %v1678, %v1682
        %v1685 = vsel %vm671, %v1683, 0
        %1687 = vmatprep.subr.mxu0 0.0
        %1688 = vmatpush1.msra.mxu0 %v1592
        %1689 = vmatprep.subr.mxu0 0.0
        %1690 = vmatpush1.msra.mxu0 0.0
        %1691 = vmatprep.subr.mxu0 0.0
        %1692 = vmatpush1.msra.mxu0 0.0
        %1693 = vmatprep.subr.mxu0 0.0
        %1694 = vmatpush1.msra.mxu0 0.0
        %1695 = vmatprep.subr.mxu0 0.0
        %1696 = vmatpush1.msra.mxu0 0.0
        %1697 = vmatprep.subr.mxu0 0.0
        %1698 = vmatpush1.msra.mxu0 0.0
        %1699 = vmatprep.subr.mxu0 0.0
        %1700 = vmatpush1.msra.mxu0 0.0
        %1701 = vmatprep.subr.mxu0 0.0
        %1702 = vmatpush1.msra.mxu0 0.0
        %1703 = vmatprep.subr.mxu0 0.0
        %1704 = vmatpush1.msra.mxu0 0.0
        %1705 = vmatprep.subr.mxu0 0.0
        %1706 = vmatpush1.msra.mxu0 0.0
        %1707 = vmatprep.subr.mxu0 0.0
        %1708 = vmatpush1.msra.mxu0 0.0
        %1709 = vmatprep.subr.mxu0 0.0
        %1710 = vmatpush1.msra.mxu0 0.0
        %1711 = vmatprep.subr.mxu0 0.0
        %1712 = vmatpush1.msra.mxu0 0.0
        %1713 = vmatprep.subr.mxu0 0.0
        %1714 = vmatpush1.msra.mxu0 0.0
        %1715 = vmatprep.subr.mxu0 0.0
        %1716 = vmatpush1.msra.mxu0 0.0
        %1717 = vmatprep.subr.mxu0 0.0
        %1718 = vmatpush1.msra.mxu0 0.0
        %1719 = vmatprep.subr.mxu0 0.0
        %1720 = vmatpush1.msra.mxu0 0.0
        %1721 = vmatprep.subr.mxu0 0.0
        %1722 = vmatpush1.msra.mxu0 0.0
        %1723 = vmatprep.subr.mxu0 0.0
        %1724 = vmatpush1.msra.mxu0 0.0
        %1725 = vmatprep.subr.mxu0 0.0
        %1726 = vmatpush1.msra.mxu0 0.0
        %1727 = vmatprep.subr.mxu0 0.0
        %1728 = vmatpush1.msra.mxu0 0.0
        %1729 = vmatprep.subr.mxu0 0.0
        %1730 = vmatpush1.msra.mxu0 0.0
        %1731 = vmatprep.subr.mxu0 0.0
        %1732 = vmatpush1.msra.mxu0 0.0
        %1733 = vmatprep.subr.mxu0 0.0
        %1734 = vmatpush1.msra.mxu0 0.0
        %1735 = vmatprep.subr.mxu0 0.0
        %1736 = vmatpush1.msra.mxu0 0.0
        %1737 = vmatprep.subr.mxu0 0.0
        %1738 = vmatpush1.msra.mxu0 0.0
        %1739 = vmatprep.subr.mxu0 0.0
        %1740 = vmatpush1.msra.mxu0 0.0
        %1741 = vmatprep.subr.mxu0 0.0
        %1742 = vmatpush1.msra.mxu0 0.0
        %1743 = vmatprep.subr.mxu0 0.0
        %1744 = vmatpush1.msra.mxu0 0.0
        %1745 = vmatprep.subr.mxu0 0.0
        %1746 = vmatpush1.msra.mxu0 0.0
        %1747 = vmatprep.subr.mxu0 0.0
        %1748 = vmatpush1.msra.mxu0 0.0
        %1749 = vmatprep.subr.mxu0 0.0
        %1750 = vmatpush1.msra.mxu0 0.0
        %1751 = vmatprep.mubr.f32.mxu0 0.0
        %1752 = vmatmul.mubr.f32.gmra.mrb[0].mxu0 %v1685
        %v1753 = vpop.f32.mrb[0].mxu0
        %v1754 = vadd.f32 0.0, %v1753
        %v1755 = vpop.f32.mrb[0].mxu0
        %1756 = vdwg.mxu0
        %s1757 = scalar_lea.vmem %s4, 64
        %v1758 = vld [vmem:[%s1757] sm:$0xff]
        %v1759 = vld [vmem:[%s1757 + $0x8] sm:$0xff]
        %v1760 = vld [vmem:[%s1757 + $0x10] sm:$0xff]
        %v1761 = vld [vmem:[%s1757 + $0x18] sm:$0xff]
        %v1763 = vsel %vm592, %v1754, 0
        %1765 = vmatprep.subr.mxu0 0.0
        %1766 = vmatpush1.msra.mxu0 %v1758
        %1767 = vmatprep.subr.mxu0 0.0
        %1768 = vmatpush1.msra.mxu0 %v1759
        %1769 = vmatprep.subr.mxu0 0.0
        %1770 = vmatpush1.msra.mxu0 %v1760
        %1771 = vmatprep.subr.mxu0 0.0
        %1772 = vmatpush1.msra.mxu0 %v1761
        %1773 = vmatprep.subr.mxu0 0.0
        %1774 = vmatpush1.msra.mxu0 0.0
        %1775 = vmatprep.subr.mxu0 0.0
        %1776 = vmatpush1.msra.mxu0 0.0
        %1777 = vmatprep.subr.mxu0 0.0
        %1778 = vmatpush1.msra.mxu0 0.0
        %1779 = vmatprep.subr.mxu0 0.0
        %1780 = vmatpush1.msra.mxu0 0.0
        %1781 = vmatprep.subr.mxu0 0.0
        %1782 = vmatpush1.msra.mxu0 0.0
        %1783 = vmatprep.subr.mxu0 0.0
        %1784 = vmatpush1.msra.mxu0 0.0
        %1785 = vmatprep.subr.mxu0 0.0
        %1786 = vmatpush1.msra.mxu0 0.0
        %1787 = vmatprep.subr.mxu0 0.0
        %1788 = vmatpush1.msra.mxu0 0.0
        %1789 = vmatprep.subr.mxu0 0.0
        %1790 = vmatpush1.msra.mxu0 0.0
        %1791 = vmatprep.subr.mxu0 0.0
        %1792 = vmatpush1.msra.mxu0 0.0
        %1793 = vmatprep.subr.mxu0 0.0
        %1794 = vmatpush1.msra.mxu0 0.0
        %1795 = vmatprep.subr.mxu0 0.0
        %1796 = vmatpush1.msra.mxu0 0.0
        %1797 = vmatprep.subr.mxu0 0.0
        %1798 = vmatpush1.msra.mxu0 0.0
        %1799 = vmatprep.subr.mxu0 0.0
        %1800 = vmatpush1.msra.mxu0 0.0
        %1801 = vmatprep.subr.mxu0 0.0
        %1802 = vmatpush1.msra.mxu0 0.0
        %1803 = vmatprep.subr.mxu0 0.0
        %1804 = vmatpush1.msra.mxu0 0.0
        %1805 = vmatprep.subr.mxu0 0.0
        %1806 = vmatpush1.msra.mxu0 0.0
        %1807 = vmatprep.subr.mxu0 0.0
        %1808 = vmatpush1.msra.mxu0 0.0
        %1809 = vmatprep.subr.mxu0 0.0
        %1810 = vmatpush1.msra.mxu0 0.0
        %1811 = vmatprep.subr.mxu0 0.0
        %1812 = vmatpush1.msra.mxu0 0.0
        %1813 = vmatprep.subr.mxu0 0.0
        %1814 = vmatpush1.msra.mxu0 0.0
        %1815 = vmatprep.subr.mxu0 0.0
        %1816 = vmatpush1.msra.mxu0 0.0
        %1817 = vmatprep.subr.mxu0 0.0
        %1818 = vmatpush1.msra.mxu0 0.0
        %1819 = vmatprep.subr.mxu0 0.0
        %1820 = vmatpush1.msra.mxu0 0.0
        %1821 = vmatprep.subr.mxu0 0.0
        %1822 = vmatpush1.msra.mxu0 0.0
        %1823 = vmatprep.subr.mxu0 0.0
        %1824 = vmatpush1.msra.mxu0 0.0
        %1825 = vmatprep.subr.mxu0 0.0
        %1826 = vmatpush1.msra.mxu0 0.0
        %1827 = vmatprep.subr.mxu0 0.0
        %1828 = vmatpush1.msra.mxu0 0.0
        %1829 = vmatprep.mubr.f32.mxu0 0.0
        %1830 = vmatmul.mubr.f32.gmra.mrb[0].mxu0 %v1763
        %v1831 = vpop.f32.mrb[0].mxu0
        %v1832 = vadd.f32 0.0, %v1831
        %v1833 = vpop.f32.mrb[0].mxu0
        %1834 = vdwg.mxu0
        %v1835 = vadd.f32 %v1331, %v1832
        %s1836 = scalar_lea.vmem %s1, 384
        %v1837 = vld [vmem:[%s1836] sm:$0xff]
        %v1838 = vld [vmem:[%s1836 + $0x8] sm:$0xff]
        %v1839 = vld [vmem:[%s1836 + $0x10] sm:$0xff]
        %v1840 = vld [vmem:[%s1836 + $0x18] sm:$0xff]
        %v1841 = vld [vmem:[%s1836 + $0x20] sm:$0xff]
        %v1842 = vld [vmem:[%s1836 + $0x28] sm:$0xff]
        %v1843 = vld [vmem:[%s1836 + $0x30] sm:$0xff]
        %v1844 = vld [vmem:[%s1836 + $0x38] sm:$0xff]
        %v1845 = vld [vmem:[%s1836 + $0x40] sm:$0xff]
        %v1846 = vld [vmem:[%s1836 + $0x48] sm:$0xff]
        %v1847 = vld [vmem:[%s1836 + $0x50] sm:$0xff]
        %v1848 = vld [vmem:[%s1836 + $0x58] sm:$0xff]
        %v1849 = vld [vmem:[%s1836 + $0x60] sm:$0xff]
        %v1850 = vld [vmem:[%s1836 + $0x68] sm:$0xff]
        %v1851 = vld [vmem:[%s1836 + $0x70] sm:$0xff]
        %v1852 = vld [vmem:[%s1836 + $0x78] sm:$0xff]
        %1853 = vmatprep.subr.mxu0 0.0
        %1854 = vmatpush1.msra.mxu0 %v1837
        %1855 = vmatprep.subr.mxu0 0.0
        %1856 = vmatpush1.msra.mxu0 %v1838
        %1857 = vmatprep.subr.mxu0 0.0
        %1858 = vmatpush1.msra.mxu0 %v1839
        %1859 = vmatprep.subr.mxu0 0.0
        %1860 = vmatpush1.msra.mxu0 %v1840
        %1861 = vmatprep.subr.mxu0 0.0
        %1862 = vmatpush1.msra.mxu0 %v1841
        %1863 = vmatprep.subr.mxu0 0.0
        %1864 = vmatpush1.msra.mxu0 %v1842
        %1865 = vmatprep.subr.mxu0 0.0
        %1866 = vmatpush1.msra.mxu0 %v1843
        %1867 = vmatprep.subr.mxu0 0.0
        %1868 = vmatpush1.msra.mxu0 %v1844
        %1869 = vmatprep.subr.mxu0 0.0
        %1870 = vmatpush1.msra.mxu0 %v1845
        %1871 = vmatprep.subr.mxu0 0.0
        %1872 = vmatpush1.msra.mxu0 %v1846
        %1873 = vmatprep.subr.mxu0 0.0
        %1874 = vmatpush1.msra.mxu0 %v1847
        %1875 = vmatprep.subr.mxu0 0.0
        %1876 = vmatpush1.msra.mxu0 %v1848
        %1877 = vmatprep.subr.mxu0 0.0
        %1878 = vmatpush1.msra.mxu0 %v1849
        %1879 = vmatprep.subr.mxu0 0.0
        %1880 = vmatpush1.msra.mxu0 %v1850
        %1881 = vmatprep.subr.mxu0 0.0
        %1882 = vmatpush1.msra.mxu0 %v1851
        %1883 = vmatprep.subr.mxu0 0.0
        %1884 = vmatpush1.msra.mxu0 %v1852
        %1885 = vmatprep.subr.mxu0 0.0
        %1886 = vmatpush1.msra.mxu0 0.0
        %1887 = vmatprep.subr.mxu0 0.0
        %1888 = vmatpush1.msra.mxu0 0.0
        %1889 = vmatprep.subr.mxu0 0.0
        %1890 = vmatpush1.msra.mxu0 0.0
        %1891 = vmatprep.subr.mxu0 0.0
        %1892 = vmatpush1.msra.mxu0 0.0
        %1893 = vmatprep.subr.mxu0 0.0
        %1894 = vmatpush1.msra.mxu0 0.0
        %1895 = vmatprep.subr.mxu0 0.0
        %1896 = vmatpush1.msra.mxu0 0.0
        %1897 = vmatprep.subr.mxu0 0.0
        %1898 = vmatpush1.msra.mxu0 0.0
        %1899 = vmatprep.subr.mxu0 0.0
        %1900 = vmatpush1.msra.mxu0 0.0
        %1901 = vmatprep.subr.mxu0 0.0
        %1902 = vmatpush1.msra.mxu0 0.0
        %1903 = vmatprep.subr.mxu0 0.0
        %1904 = vmatpush1.msra.mxu0 0.0
        %1905 = vmatprep.subr.mxu0 0.0
        %1906 = vmatpush1.msra.mxu0 0.0
        %1907 = vmatprep.subr.mxu0 0.0
        %1908 = vmatpush1.msra.mxu0 0.0
        %1909 = vmatprep.subr.mxu0 0.0
        %1910 = vmatpush1.msra.mxu0 0.0
        %1911 = vmatprep.subr.mxu0 0.0
        %1912 = vmatpush1.msra.mxu0 0.0
        %1913 = vmatprep.subr.mxu0 0.0
        %1914 = vmatpush1.msra.mxu0 0.0
        %1915 = vmatprep.subr.mxu0 0.0
        %1916 = vmatpush1.msra.mxu0 0.0
        %1917 = vmatprep.mubr.f32.mxu0 0.0
        %1918 = vmatmul.mubr.f32.gmra.mrb[0].mxu0 %v328
        %v1919 = vpop.f32.mrb[0].mxu0
        %v1920 = vadd.f32 0.0, %v1919
        %v1921 = vpop.f32.mrb[0].mxu0
        %1922 = vdwg.mxu0
        %s1923 = scalar_lea.vmem %s2, 384
        %v1924 = vld [vmem:[%s1923] sm:$0xff]
        %v1925 = vld [vmem:[%s1923 + $0x8] sm:$0xff]
        %v1926 = vld [vmem:[%s1923 + $0x10] sm:$0xff]
        %v1927 = vld [vmem:[%s1923 + $0x18] sm:$0xff]
        %v1928 = vld [vmem:[%s1923 + $0x20] sm:$0xff]
        %v1929 = vld [vmem:[%s1923 + $0x28] sm:$0xff]
        %v1930 = vld [vmem:[%s1923 + $0x30] sm:$0xff]
        %v1931 = vld [vmem:[%s1923 + $0x38] sm:$0xff]
        %v1932 = vld [vmem:[%s1923 + $0x40] sm:$0xff]
        %v1933 = vld [vmem:[%s1923 + $0x48] sm:$0xff]
        %v1934 = vld [vmem:[%s1923 + $0x50] sm:$0xff]
        %v1935 = vld [vmem:[%s1923 + $0x58] sm:$0xff]
        %v1936 = vld [vmem:[%s1923 + $0x60] sm:$0xff]
        %v1937 = vld [vmem:[%s1923 + $0x68] sm:$0xff]
        %v1938 = vld [vmem:[%s1923 + $0x70] sm:$0xff]
        %v1939 = vld [vmem:[%s1923 + $0x78] sm:$0xff]
        %1940 = vmatprep.subr.mxu0 0.0
        %1941 = vmatpush1.msra.mxu0 %v1924
        %1942 = vmatprep.subr.mxu0 0.0
        %1943 = vmatpush1.msra.mxu0 %v1925
        %1944 = vmatprep.subr.mxu0 0.0
        %1945 = vmatpush1.msra.mxu0 %v1926
        %1946 = vmatprep.subr.mxu0 0.0
        %1947 = vmatpush1.msra.mxu0 %v1927
        %1948 = vmatprep.subr.mxu0 0.0
        %1949 = vmatpush1.msra.mxu0 %v1928
        %1950 = vmatprep.subr.mxu0 0.0
        %1951 = vmatpush1.msra.mxu0 %v1929
        %1952 = vmatprep.subr.mxu0 0.0
        %1953 = vmatpush1.msra.mxu0 %v1930
        %1954 = vmatprep.subr.mxu0 0.0
        %1955 = vmatpush1.msra.mxu0 %v1931
        %1956 = vmatprep.subr.mxu0 0.0
        %1957 = vmatpush1.msra.mxu0 %v1932
        %1958 = vmatprep.subr.mxu0 0.0
        %1959 = vmatpush1.msra.mxu0 %v1933
        %1960 = vmatprep.subr.mxu0 0.0
        %1961 = vmatpush1.msra.mxu0 %v1934
        %1962 = vmatprep.subr.mxu0 0.0
        %1963 = vmatpush1.msra.mxu0 %v1935
        %1964 = vmatprep.subr.mxu0 0.0
        %1965 = vmatpush1.msra.mxu0 %v1936
        %1966 = vmatprep.subr.mxu0 0.0
        %1967 = vmatpush1.msra.mxu0 %v1937
        %1968 = vmatprep.subr.mxu0 0.0
        %1969 = vmatpush1.msra.mxu0 %v1938
        %1970 = vmatprep.subr.mxu0 0.0
        %1971 = vmatpush1.msra.mxu0 %v1939
        %1972 = vmatprep.subr.mxu0 0.0
        %1973 = vmatpush1.msra.mxu0 0.0
        %1974 = vmatprep.subr.mxu0 0.0
        %1975 = vmatpush1.msra.mxu0 0.0
        %1976 = vmatprep.subr.mxu0 0.0
        %1977 = vmatpush1.msra.mxu0 0.0
        %1978 = vmatprep.subr.mxu0 0.0
        %1979 = vmatpush1.msra.mxu0 0.0
        %1980 = vmatprep.subr.mxu0 0.0
        %1981 = vmatpush1.msra.mxu0 0.0
        %1982 = vmatprep.subr.mxu0 0.0
        %1983 = vmatpush1.msra.mxu0 0.0
        %1984 = vmatprep.subr.mxu0 0.0
        %1985 = vmatpush1.msra.mxu0 0.0
        %1986 = vmatprep.subr.mxu0 0.0
        %1987 = vmatpush1.msra.mxu0 0.0
        %1988 = vmatprep.subr.mxu0 0.0
        %1989 = vmatpush1.msra.mxu0 0.0
        %1990 = vmatprep.subr.mxu0 0.0
        %1991 = vmatpush1.msra.mxu0 0.0
        %1992 = vmatprep.subr.mxu0 0.0
        %1993 = vmatpush1.msra.mxu0 0.0
        %1994 = vmatprep.subr.mxu0 0.0
        %1995 = vmatpush1.msra.mxu0 0.0
        %1996 = vmatprep.subr.mxu0 0.0
        %1997 = vmatpush1.msra.mxu0 0.0
        %1998 = vmatprep.subr.mxu0 0.0
        %1999 = vmatpush1.msra.mxu0 0.0
        %2000 = vmatprep.subr.mxu0 0.0
        %2001 = vmatpush1.msra.mxu0 0.0
        %2002 = vmatprep.subr.mxu0 0.0
        %2003 = vmatpush1.msra.mxu0 0.0
        %2004 = vmatprep.mubr.f32.mxu0 0.0
        %2005 = vmatmul.mubr.f32.gmra.mrb[0].mxu0 %v328
        %v2006 = vpop.f32.mrb[0].mxu0
        %v2007 = vadd.f32 0.0, %v2006
        %v2008 = vpop.f32.mrb[0].mxu0
        %2009 = vdwg.mxu0
        %s2010 = scalar_lea.vmem %s3, 384
        %v2011 = vld [vmem:[%s2010] sm:$0xff]
        %v2012 = vld [vmem:[%s2010 + $0x8] sm:$0xff]
        %v2013 = vld [vmem:[%s2010 + $0x10] sm:$0xff]
        %v2014 = vld [vmem:[%s2010 + $0x18] sm:$0xff]
        %v2015 = vld [vmem:[%s2010 + $0x20] sm:$0xff]
        %v2016 = vld [vmem:[%s2010 + $0x28] sm:$0xff]
        %v2017 = vld [vmem:[%s2010 + $0x30] sm:$0xff]
        %v2018 = vld [vmem:[%s2010 + $0x38] sm:$0xff]
        %v2019 = vld [vmem:[%s2010 + $0x40] sm:$0xff]
        %v2020 = vld [vmem:[%s2010 + $0x48] sm:$0xff]
        %v2021 = vld [vmem:[%s2010 + $0x50] sm:$0xff]
        %v2022 = vld [vmem:[%s2010 + $0x58] sm:$0xff]
        %v2023 = vld [vmem:[%s2010 + $0x60] sm:$0xff]
        %v2024 = vld [vmem:[%s2010 + $0x68] sm:$0xff]
        %v2025 = vld [vmem:[%s2010 + $0x70] sm:$0xff]
        %v2026 = vld [vmem:[%s2010 + $0x78] sm:$0xff]
        %2027 = vmatprep.subr.mxu0 0.0
        %2028 = vmatpush1.msra.mxu0 %v2011
        %2029 = vmatprep.subr.mxu0 0.0
        %2030 = vmatpush1.msra.mxu0 %v2012
        %2031 = vmatprep.subr.mxu0 0.0
        %2032 = vmatpush1.msra.mxu0 %v2013
        %2033 = vmatprep.subr.mxu0 0.0
        %2034 = vmatpush1.msra.mxu0 %v2014
        %2035 = vmatprep.subr.mxu0 0.0
        %2036 = vmatpush1.msra.mxu0 %v2015
        %2037 = vmatprep.subr.mxu0 0.0
        %2038 = vmatpush1.msra.mxu0 %v2016
        %2039 = vmatprep.subr.mxu0 0.0
        %2040 = vmatpush1.msra.mxu0 %v2017
        %2041 = vmatprep.subr.mxu0 0.0
        %2042 = vmatpush1.msra.mxu0 %v2018
        %2043 = vmatprep.subr.mxu0 0.0
        %2044 = vmatpush1.msra.mxu0 %v2019
        %2045 = vmatprep.subr.mxu0 0.0
        %2046 = vmatpush1.msra.mxu0 %v2020
        %2047 = vmatprep.subr.mxu0 0.0
        %2048 = vmatpush1.msra.mxu0 %v2021
        %2049 = vmatprep.subr.mxu0 0.0
        %2050 = vmatpush1.msra.mxu0 %v2022
        %2051 = vmatprep.subr.mxu0 0.0
        %2052 = vmatpush1.msra.mxu0 %v2023
        %2053 = vmatprep.subr.mxu0 0.0
        %2054 = vmatpush1.msra.mxu0 %v2024
        %2055 = vmatprep.subr.mxu0 0.0
        %2056 = vmatpush1.msra.mxu0 %v2025
        %2057 = vmatprep.subr.mxu0 0.0
        %2058 = vmatpush1.msra.mxu0 %v2026
        %2059 = vmatprep.subr.mxu0 0.0
        %2060 = vmatpush1.msra.mxu0 0.0
        %2061 = vmatprep.subr.mxu0 0.0
        %2062 = vmatpush1.msra.mxu0 0.0
        %2063 = vmatprep.subr.mxu0 0.0
        %2064 = vmatpush1.msra.mxu0 0.0
        %2065 = vmatprep.subr.mxu0 0.0
        %2066 = vmatpush1.msra.mxu0 0.0
        %2067 = vmatprep.subr.mxu0 0.0
        %2068 = vmatpush1.msra.mxu0 0.0
        %2069 = vmatprep.subr.mxu0 0.0
        %2070 = vmatpush1.msra.mxu0 0.0
        %2071 = vmatprep.subr.mxu0 0.0
        %2072 = vmatpush1.msra.mxu0 0.0
        %2073 = vmatprep.subr.mxu0 0.0
        %2074 = vmatpush1.msra.mxu0 0.0
        %2075 = vmatprep.subr.mxu0 0.0
        %2076 = vmatpush1.msra.mxu0 0.0
        %2077 = vmatprep.subr.mxu0 0.0
        %2078 = vmatpush1.msra.mxu0 0.0
        %2079 = vmatprep.subr.mxu0 0.0
        %2080 = vmatpush1.msra.mxu0 0.0
        %2081 = vmatprep.subr.mxu0 0.0
        %2082 = vmatpush1.msra.mxu0 0.0
        %2083 = vmatprep.subr.mxu0 0.0
        %2084 = vmatpush1.msra.mxu0 0.0
        %2085 = vmatprep.subr.mxu0 0.0
        %2086 = vmatpush1.msra.mxu0 0.0
        %2087 = vmatprep.subr.mxu0 0.0
        %2088 = vmatpush1.msra.mxu0 0.0
        %2089 = vmatprep.subr.mxu0 0.0
        %2090 = vmatpush1.msra.mxu0 0.0
        %2091 = vmatprep.mubr.f32.mxu0 0.0
        %2092 = vmatmul.mubr.f32.gmra.mrb[0].mxu0 %v328
        %v2093 = vpop.f32.mrb[0].mxu0
        %v2094 = vadd.f32 0.0, %v2093
        %v2095 = vpop.f32.mrb[0].mxu0
        %2096 = vdwg.mxu0
        %v2098 = vsel %vm592, %v1920, 0
        %v2101 = vsel %vm592, %v2007, 0
        %2103 = vmatprep.subr.mxu0 0.0
        %2104 = vmatpush1.xpose.msra.mxu0 %v2101
        %2105 = vmatprep.subr.mxu0 0.0
        %2106 = vmatpush1.xpose.msra.mxu0 0.0
        %2107 = vmatprep.subr.mxu0 0.0
        %2108 = vmatpush1.xpose.msra.mxu0 0.0
        %2109 = vmatprep.subr.mxu0 0.0
        %2110 = vmatpush1.xpose.msra.mxu0 0.0
        %2111 = vmatprep.subr.mxu0 0.0
        %2112 = vmatpush1.xpose.msra.mxu0 0.0
        %2113 = vmatprep.subr.mxu0 0.0
        %2114 = vmatpush1.xpose.msra.mxu0 0.0
        %2115 = vmatprep.subr.mxu0 0.0
        %2116 = vmatpush1.xpose.msra.mxu0 0.0
        %2117 = vmatprep.subr.mxu0 0.0
        %2118 = vmatpush1.xpose.msra.mxu0 0.0
        %2119 = vmatprep.subr.mxu0 0.0
        %2120 = vmatpush1.xpose.msra.mxu0 0.0
        %2121 = vmatprep.subr.mxu0 0.0
        %2122 = vmatpush1.xpose.msra.mxu0 0.0
        %2123 = vmatprep.subr.mxu0 0.0
        %2124 = vmatpush1.xpose.msra.mxu0 0.0
        %2125 = vmatprep.subr.mxu0 0.0
        %2126 = vmatpush1.xpose.msra.mxu0 0.0
        %2127 = vmatprep.subr.mxu0 0.0
        %2128 = vmatpush1.xpose.msra.mxu0 0.0
        %2129 = vmatprep.subr.mxu0 0.0
        %2130 = vmatpush1.xpose.msra.mxu0 0.0
        %2131 = vmatprep.subr.mxu0 0.0
        %2132 = vmatpush1.xpose.msra.mxu0 0.0
        %2133 = vmatprep.subr.mxu0 0.0
        %2134 = vmatpush1.xpose.msra.mxu0 0.0
        %2135 = vmatprep.subr.mxu0 0.0
        %2136 = vmatpush1.xpose.msra.mxu0 0.0
        %2137 = vmatprep.subr.mxu0 0.0
        %2138 = vmatpush1.xpose.msra.mxu0 0.0
        %2139 = vmatprep.subr.mxu0 0.0
        %2140 = vmatpush1.xpose.msra.mxu0 0.0
        %2141 = vmatprep.subr.mxu0 0.0
        %2142 = vmatpush1.xpose.msra.mxu0 0.0
        %2143 = vmatprep.subr.mxu0 0.0
        %2144 = vmatpush1.xpose.msra.mxu0 0.0
        %2145 = vmatprep.subr.mxu0 0.0
        %2146 = vmatpush1.xpose.msra.mxu0 0.0
        %2147 = vmatprep.subr.mxu0 0.0
        %2148 = vmatpush1.xpose.msra.mxu0 0.0
        %2149 = vmatprep.subr.mxu0 0.0
        %2150 = vmatpush1.xpose.msra.mxu0 0.0
        %2151 = vmatprep.subr.mxu0 0.0
        %2152 = vmatpush1.xpose.msra.mxu0 0.0
        %2153 = vmatprep.subr.mxu0 0.0
        %2154 = vmatpush1.xpose.msra.mxu0 0.0
        %2155 = vmatprep.subr.mxu0 0.0
        %2156 = vmatpush1.xpose.msra.mxu0 0.0
        %2157 = vmatprep.subr.mxu0 0.0
        %2158 = vmatpush1.xpose.msra.mxu0 0.0
        %2159 = vmatprep.subr.mxu0 0.0
        %2160 = vmatpush1.xpose.msra.mxu0 0.0
        %2161 = vmatprep.subr.mxu0 0.0
        %2162 = vmatpush1.xpose.msra.mxu0 0.0
        %2163 = vmatprep.subr.mxu0 0.0
        %2164 = vmatpush1.xpose.msra.mxu0 0.0
        %2165 = vmatprep.subr.mxu0 0.0
        %2166 = vmatpush1.xpose.msra.mxu0 0.0
        %2167 = vmatprep.mubr.f32.mxu0 0.0
        %2168 = vmatmul.mubr.f32.gmra.mrb[0].mxu0 %v2098
        %v2169 = vpop.f32.mrb[0].mxu0
        %v2170 = vadd.f32 0.0, %v2169
        %v2171 = vpop.f32.mrb[0].mxu0
        %2172 = vdwg.mxu0
        %v2173 = vmul.f32 %v2170, 0.17677669
        %v2174 = vsel %vm333, %v2173, -1.7677669e+09
        %v2175 = vsel %vm671, %v2174, -inf
        %2176 = vmax.xlane.f32.xlu0 %v2175
        %v2177 = vpop.xlane.xlu0 %2176
        %v2178 = vsub.f32 %v2174, %v2177
        %v2179 = vmul.f32 %v2178, 1.442695
        %v2180 = vpow.pop %v2179
        %v2181 = vsel %vm671, %v2180, 0.0
        %2182 = vadd.xlane.f32.xlu0 %v2181
        %v2183 = vpop.xlane.xlu0 %2182
        %v2184 = vrcp.pop %v2183
        %v2185 = vmul.f32 %v2180, %v2184
        %v2187 = vsel %vm671, %v2185, 0
        %2189 = vmatprep.subr.mxu0 0.0
        %2190 = vmatpush1.msra.mxu0 %v2094
        %2191 = vmatprep.subr.mxu0 0.0
        %2192 = vmatpush1.msra.mxu0 0.0
        %2193 = vmatprep.subr.mxu0 0.0
        %2194 = vmatpush1.msra.mxu0 0.0
        %2195 = vmatprep.subr.mxu0 0.0
        %2196 = vmatpush1.msra.mxu0 0.0
        %2197 = vmatprep.subr.mxu0 0.0
        %2198 = vmatpush1.msra.mxu0 0.0
        %2199 = vmatprep.subr.mxu0 0.0
        %2200 = vmatpush1.msra.mxu0 0.0
        %2201 = vmatprep.subr.mxu0 0.0
        %2202 = vmatpush1.msra.mxu0 0.0
        %2203 = vmatprep.subr.mxu0 0.0
        %2204 = vmatpush1.msra.mxu0 0.0
        %2205 = vmatprep.subr.mxu0 0.0
        %2206 = vmatpush1.msra.mxu0 0.0
        %2207 = vmatprep.subr.mxu0 0.0
        %2208 = vmatpush1.msra.mxu0 0.0
        %2209 = vmatprep.subr.mxu0 0.0
        %2210 = vmatpush1.msra.mxu0 0.0
        %2211 = vmatprep.subr.mxu0 0.0
        %2212 = vmatpush1.msra.mxu0 0.0
        %2213 = vmatprep.subr.mxu0 0.0
        %2214 = vmatpush1.msra.mxu0 0.0
        %2215 = vmatprep.subr.mxu0 0.0
        %2216 = vmatpush1.msra.mxu0 0.0
        %2217 = vmatprep.subr.mxu0 0.0
        %2218 = vmatpush1.msra.mxu0 0.0
        %2219 = vmatprep.subr.mxu0 0.0
        %2220 = vmatpush1.msra.mxu0 0.0
        %2221 = vmatprep.subr.mxu0 0.0
        %2222 = vmatpush1.msra.mxu0 0.0
        %2223 = vmatprep.subr.mxu0 0.0
        %2224 = vmatpush1.msra.mxu0 0.0
        %2225 = vmatprep.subr.mxu0 0.0
        %2226 = vmatpush1.msra.mxu0 0.0
        %2227 = vmatprep.subr.mxu0 0.0
        %2228 = vmatpush1.msra.mxu0 0.0
        %2229 = vmatprep.subr.mxu0 0.0
        %2230 = vmatpush1.msra.mxu0 0.0
        %2231 = vmatprep.subr.mxu0 0.0
        %2232 = vmatpush1.msra.mxu0 0.0
        %2233 = vmatprep.subr.mxu0 0.0
        %2234 = vmatpush1.msra.mxu0 0.0
        %2235 = vmatprep.subr.mxu0 0.0
        %2236 = vmatpush1.msra.mxu0 0.0
        %2237 = vmatprep.subr.mxu0 0.0
        %2238 = vmatpush1.msra.mxu0 0.0
        %2239 = vmatprep.subr.mxu0 0.0
        %2240 = vmatpush1.msra.mxu0 0.0
        %2241 = vmatprep.subr.mxu0 0.0
        %2242 = vmatpush1.msra.mxu0 0.0
        %2243 = vmatprep.subr.mxu0 0.0
        %2244 = vmatpush1.msra.mxu0 0.0
        %2245 = vmatprep.subr.mxu0 0.0
        %2246 = vmatpush1.msra.mxu0 0.0
        %2247 = vmatprep.subr.mxu0 0.0
        %2248 = vmatpush1.msra.mxu0 0.0
        %2249 = vmatprep.subr.mxu0 0.0
        %2250 = vmatpush1.msra.mxu0 0.0
        %2251 = vmatprep.subr.mxu0 0.0
        %2252 = vmatpush1.msra.mxu0 0.0
        %2253 = vmatprep.mubr.f32.mxu0 0.0
        %2254 = vmatmul.mubr.f32.gmra.mrb[0].mxu0 %v2187
        %v2255 = vpop.f32.mrb[0].mxu0
        %v2256 = vadd.f32 0.0, %v2255
        %v2257 = vpop.f32.mrb[0].mxu0
        %2258 = vdwg.mxu0
        %s2259 = scalar_lea.vmem %s4, 96
        %v2260 = vld [vmem:[%s2259] sm:$0xff]
        %v2261 = vld [vmem:[%s2259 + $0x8] sm:$0xff]
        %v2262 = vld [vmem:[%s2259 + $0x10] sm:$0xff]
        %v2263 = vld [vmem:[%s2259 + $0x18] sm:$0xff]
        %v2265 = vsel %vm592, %v2256, 0
        %2267 = vmatprep.subr.mxu0 0.0
        %2268 = vmatpush1.msra.mxu0 %v2260
        %2269 = vmatprep.subr.mxu0 0.0
        %2270 = vmatpush1.msra.mxu0 %v2261
        %2271 = vmatprep.subr.mxu0 0.0
        %2272 = vmatpush1.msra.mxu0 %v2262
        %2273 = vmatprep.subr.mxu0 0.0
        %2274 = vmatpush1.msra.mxu0 %v2263
        %2275 = vmatprep.subr.mxu0 0.0
        %2276 = vmatpush1.msra.mxu0 0.0
        %2277 = vmatprep.subr.mxu0 0.0
        %2278 = vmatpush1.msra.mxu0 0.0
        %2279 = vmatprep.subr.mxu0 0.0
        %2280 = vmatpush1.msra.mxu0 0.0
        %2281 = vmatprep.subr.mxu0 0.0
        %2282 = vmatpush1.msra.mxu0 0.0
        %2283 = vmatprep.subr.mxu0 0.0
        %2284 = vmatpush1.msra.mxu0 0.0
        %2285 = vmatprep.subr.mxu0 0.0
        %2286 = vmatpush1.msra.mxu0 0.0
        %2287 = vmatprep.subr.mxu0 0.0
        %2288 = vmatpush1.msra.mxu0 0.0
        %2289 = vmatprep.subr.mxu0 0.0
        %2290 = vmatpush1.msra.mxu0 0.0
        %2291 = vmatprep.subr.mxu0 0.0
        %2292 = vmatpush1.msra.mxu0 0.0
        %2293 = vmatprep.subr.mxu0 0.0
        %2294 = vmatpush1.msra.mxu0 0.0
        %2295 = vmatprep.subr.mxu0 0.0
        %2296 = vmatpush1.msra.mxu0 0.0
        %2297 = vmatprep.subr.mxu0 0.0
        %2298 = vmatpush1.msra.mxu0 0.0
        %2299 = vmatprep.subr.mxu0 0.0
        %2300 = vmatpush1.msra.mxu0 0.0
        %2301 = vmatprep.subr.mxu0 0.0
        %2302 = vmatpush1.msra.mxu0 0.0
        %2303 = vmatprep.subr.mxu0 0.0
        %2304 = vmatpush1.msra.mxu0 0.0
        %2305 = vmatprep.subr.mxu0 0.0
        %2306 = vmatpush1.msra.mxu0 0.0
        %2307 = vmatprep.subr.mxu0 0.0
        %2308 = vmatpush1.msra.mxu0 0.0
        %2309 = vmatprep.subr.mxu0 0.0
        %2310 = vmatpush1.msra.mxu0 0.0
        %2311 = vmatprep.subr.mxu0 0.0
        %2312 = vmatpush1.msra.mxu0 0.0
        %2313 = vmatprep.subr.mxu0 0.0
        %2314 = vmatpush1.msra.mxu0 0.0
        %2315 = vmatprep.subr.mxu0 0.0
        %2316 = vmatpush1.msra.mxu0 0.0
        %2317 = vmatprep.subr.mxu0 0.0
        %2318 = vmatpush1.msra.mxu0 0.0
        %2319 = vmatprep.subr.mxu0 0.0
        %2320 = vmatpush1.msra.mxu0 0.0
        %2321 = vmatprep.subr.mxu0 0.0
        %2322 = vmatpush1.msra.mxu0 0.0
        %2323 = vmatprep.subr.mxu0 0.0
        %2324 = vmatpush1.msra.mxu0 0.0
        %2325 = vmatprep.subr.mxu0 0.0
        %2326 = vmatpush1.msra.mxu0 0.0
        %2327 = vmatprep.subr.mxu0 0.0
        %2328 = vmatpush1.msra.mxu0 0.0
        %2329 = vmatprep.subr.mxu0 0.0
        %2330 = vmatpush1.msra.mxu0 0.0
        %2331 = vmatprep.mubr.f32.mxu0 0.0
        %2332 = vmatmul.mubr.f32.gmra.mrb[0].mxu0 %v2265
        %v2333 = vpop.f32.mrb[0].mxu0
        %v2334 = vadd.f32 0.0, %v2333
        %v2335 = vpop.f32.mrb[0].mxu0
        %2336 = vdwg.mxu0
        %v2337 = vadd.f32 %v1835, %v2334
        %v2338 = vadd.f32 %v328, %v2337
        %v2339 = vld [vmem:[%s5] sm:$0xff]
        %v2340 = vld [vmem:[%s5 + $0x8] sm:$0xff]
        %v2341 = vld [vmem:[%s5 + $0x10] sm:$0xff]
        %v2342 = vld [vmem:[%s5 + $0x18] sm:$0xff]
        %v2343 = vld [vmem:[%s5 + $0x20] sm:$0xff]
        %v2344 = vld [vmem:[%s5 + $0x28] sm:$0xff]
        %v2345 = vld [vmem:[%s5 + $0x30] sm:$0xff]
        %v2346 = vld [vmem:[%s5 + $0x38] sm:$0xff]
        %v2347 = vld [vmem:[%s5 + $0x40] sm:$0xff]
        %v2348 = vld [vmem:[%s5 + $0x48] sm:$0xff]
        %v2349 = vld [vmem:[%s5 + $0x50] sm:$0xff]
        %v2350 = vld [vmem:[%s5 + $0x58] sm:$0xff]
        %v2351 = vld [vmem:[%s5 + $0x60] sm:$0xff]
        %v2352 = vld [vmem:[%s5 + $0x68] sm:$0xff]
        %v2353 = vld [vmem:[%s5 + $0x70] sm:$0xff]
        %v2354 = vld [vmem:[%s5 + $0x78] sm:$0xff]
        %v2355 = vld [vmem:[%s5 + $0x80] sm:$0xff]
        %v2356 = vld [vmem:[%s5 + $0x88] sm:$0xff]
        %v2357 = vld [vmem:[%s5 + $0x90] sm:$0xff]
        %v2358 = vld [vmem:[%s5 + $0x98] sm:$0xff]
        %v2359 = vld [vmem:[%s5 + $0xa0] sm:$0xff]
        %v2360 = vld [vmem:[%s5 + $0xa8] sm:$0xff]
        %v2361 = vld [vmem:[%s5 + $0xb0] sm:$0xff]
        %v2362 = vld [vmem:[%s5 + $0xb8] sm:$0xff]
        %v2363 = vld [vmem:[%s5 + $0xc0] sm:$0xff]
        %v2364 = vld [vmem:[%s5 + $0xc8] sm:$0xff]
        %v2365 = vld [vmem:[%s5 + $0xd0] sm:$0xff]
        %v2366 = vld [vmem:[%s5 + $0xd8] sm:$0xff]
        %v2367 = vld [vmem:[%s5 + $0xe0] sm:$0xff]
        %v2368 = vld [vmem:[%s5 + $0xe8] sm:$0xff]
        %v2369 = vld [vmem:[%s5 + $0xf0] sm:$0xff]
        %v2370 = vld [vmem:[%s5 + $0xf8] sm:$0xff]
        %v2371 = vld [vmem:[%s5 + $0x100] sm:$0xff]
        %v2372 = vld [vmem:[%s5 + $0x108] sm:$0xff]
        %v2373 = vld [vmem:[%s5 + $0x110] sm:$0xff]
        %v2374 = vld [vmem:[%s5 + $0x118] sm:$0xff]
        %v2375 = vld [vmem:[%s5 + $0x120] sm:$0xff]
        %v2376 = vld [vmem:[%s5 + $0x128] sm:$0xff]
        %v2377 = vld [vmem:[%s5 + $0x130] sm:$0xff]
        %v2378 = vld [vmem:[%s5 + $0x138] sm:$0xff]
        %v2379 = vld [vmem:[%s5 + $0x140] sm:$0xff]
        %v2380 = vld [vmem:[%s5 + $0x148] sm:$0xff]
        %v2381 = vld [vmem:[%s5 + $0x150] sm:$0xff]
        %v2382 = vld [vmem:[%s5 + $0x158] sm:$0xff]
        %v2383 = vld [vmem:[%s5 + $0x160] sm:$0xff]
        %v2384 = vld [vmem:[%s5 + $0x168] sm:$0xff]
        %v2385 = vld [vmem:[%s5 + $0x170] sm:$0xff]
        %v2386 = vld [vmem:[%s5 + $0x178] sm:$0xff]
        %v2387 = vld [vmem:[%s5 + $0x180] sm:$0xff]
        %v2388 = vld [vmem:[%s5 + $0x188] sm:$0xff]
        %v2389 = vld [vmem:[%s5 + $0x190] sm:$0xff]
        %v2390 = vld [vmem:[%s5 + $0x198] sm:$0xff]
        %v2391 = vld [vmem:[%s5 + $0x1a0] sm:$0xff]
        %v2392 = vld [vmem:[%s5 + $0x1a8] sm:$0xff]
        %v2393 = vld [vmem:[%s5 + $0x1b0] sm:$0xff]
        %v2394 = vld [vmem:[%s5 + $0x1b8] sm:$0xff]
        %v2395 = vld [vmem:[%s5 + $0x1c0] sm:$0xff]
        %v2396 = vld [vmem:[%s5 + $0x1c8] sm:$0xff]
        %v2397 = vld [vmem:[%s5 + $0x1d0] sm:$0xff]
        %v2398 = vld [vmem:[%s5 + $0x1d8] sm:$0xff]
        %v2399 = vld [vmem:[%s5 + $0x1e0] sm:$0xff]
        %v2400 = vld [vmem:[%s5 + $0x1e8] sm:$0xff]
        %v2401 = vld [vmem:[%s5 + $0x1f0] sm:$0xff]
        %v2402 = vld [vmem:[%s5 + $0x1f8] sm:$0xff]
        %v2403 = vld [vmem:[%s6] sm:$0xf]
        %v2405 = vlaneseq
        %v2406 = vshrl.u32 %v2405, 7
        %v2407 = vsub.s32 0, %v2406
        %v2408 = vrot.slane %v2403, %v2407
        %v2409 = vlaneseq
        %v2410 = vshrl.u32 %v2409, 7
        %v2411 = vsub.s32 1, %v2410
        %v2412 = vrot.slane %v2403, %v2411
        %v2413 = vlaneseq
        %v2414 = vshrl.u32 %v2413, 7
        %v2415 = vsub.s32 2, %v2414
        %v2416 = vrot.slane %v2403, %v2415
        %v2417 = vlaneseq
        %v2418 = vshrl.u32 %v2417, 7
        %v2419 = vsub.s32 3, %v2418
        %v2420 = vrot.slane %v2403, %v2419
        %2425 = vmatprep.subr.mxu0 %v2340
        %2426 = vmatpush1.msra.mxu0 %v2339
        %2427 = vmatprep.subr.mxu0 %v2344
        %2428 = vmatpush1.msra.mxu0 %v2343
        %2429 = vmatprep.subr.mxu0 %v2348
        %2430 = vmatpush1.msra.mxu0 %v2347
        %2431 = vmatprep.subr.mxu0 %v2352
        %2432 = vmatpush1.msra.mxu0 %v2351
        %2433 = vmatprep.subr.mxu0 %v2356
        %2434 = vmatpush1.msra.mxu0 %v2355
        %2435 = vmatprep.subr.mxu0 %v2360
        %2436 = vmatpush1.msra.mxu0 %v2359
        %2437 = vmatprep.subr.mxu0 %v2364
        %2438 = vmatpush1.msra.mxu0 %v2363
        %2439 = vmatprep.subr.mxu0 %v2368
        %2440 = vmatpush1.msra.mxu0 %v2367
        %2441 = vmatprep.subr.mxu0 %v2372
        %2442 = vmatpush1.msra.mxu0 %v2371
        %2443 = vmatprep.subr.mxu0 %v2376
        %2444 = vmatpush1.msra.mxu0 %v2375
        %2445 = vmatprep.subr.mxu0 %v2380
        %2446 = vmatpush1.msra.mxu0 %v2379
        %2447 = vmatprep.subr.mxu0 %v2384
        %2448 = vmatpush1.msra.mxu0 %v2383
        %2449 = vmatprep.subr.mxu0 %v2388
        %2450 = vmatpush1.msra.mxu0 %v2387
        %2451 = vmatprep.subr.mxu0 %v2392
        %2452 = vmatpush1.msra.mxu0 %v2391
        %2453 = vmatprep.subr.mxu0 %v2396
        %2454 = vmatpush1.msra.mxu0 %v2395
        %2455 = vmatprep.subr.mxu0 %v2400
        %2456 = vmatpush1.msra.mxu0 %v2399
        %2457 = vmatprep.subr.mxu0 0.0
        %2458 = vmatpush1.msra.mxu0 0.0
        %2459 = vmatprep.subr.mxu0 0.0
        %2460 = vmatpush1.msra.mxu0 0.0
        %2461 = vmatprep.subr.mxu0 0.0
        %2462 = vmatpush1.msra.mxu0 0.0
        %2463 = vmatprep.subr.mxu0 0.0
        %2464 = vmatpush1.msra.mxu0 0.0
        %2465 = vmatprep.subr.mxu0 0.0
        %2466 = vmatpush1.msra.mxu0 0.0
        %2467 = vmatprep.subr.mxu0 0.0
        %2468 = vmatpush1.msra.mxu0 0.0
        %2469 = vmatprep.subr.mxu0 0.0
        %2470 = vmatpush1.msra.mxu0 0.0
        %2471 = vmatprep.subr.mxu0 0.0
        %2472 = vmatpush1.msra.mxu0 0.0
        %2473 = vmatprep.subr.mxu0 0.0
        %2474 = vmatpush1.msra.mxu0 0.0
        %2475 = vmatprep.subr.mxu0 0.0
        %2476 = vmatpush1.msra.mxu0 0.0
        %2477 = vmatprep.subr.mxu0 0.0
        %2478 = vmatpush1.msra.mxu0 0.0
        %2479 = vmatprep.subr.mxu0 0.0
        %2480 = vmatpush1.msra.mxu0 0.0
        %2481 = vmatprep.subr.mxu0 0.0
        %2482 = vmatpush1.msra.mxu0 0.0
        %2483 = vmatprep.subr.mxu0 0.0
        %2484 = vmatpush1.msra.mxu0 0.0
        %2485 = vmatprep.subr.mxu0 0.0
        %2486 = vmatpush1.msra.mxu0 0.0
        %2487 = vmatprep.subr.mxu0 0.0
        %2488 = vmatpush1.msra.mxu0 0.0
        %2489 = vmatprep.mubr.f32.mxu0 0.0
        %2490 = vmatmul.mubr.f32.gmra.mrb[0].mxu0 %v2338
        %v2491 = vpop.f32.mrb[0].mxu0
        %v2492 = vadd.f32 %v2408, %v2491
        %v2493 = vpop.f32.mrb[0].mxu0
        %v2494 = vadd.f32 %v2412, %v2493
        %2495 = vdwg.mxu0
        %2496 = vmatprep.subr.mxu0 %v2342
        %2497 = vmatpush1.msra.mxu0 %v2341
        %2498 = vmatprep.subr.mxu0 %v2346
        %2499 = vmatpush1.msra.mxu0 %v2345
        %2500 = vmatprep.subr.mxu0 %v2350
        %2501 = vmatpush1.msra.mxu0 %v2349
        %2502 = vmatprep.subr.mxu0 %v2354
        %2503 = vmatpush1.msra.mxu0 %v2353
        %2504 = vmatprep.subr.mxu0 %v2358
        %2505 = vmatpush1.msra.mxu0 %v2357
        %2506 = vmatprep.subr.mxu0 %v2362
        %2507 = vmatpush1.msra.mxu0 %v2361
        %2508 = vmatprep.subr.mxu0 %v2366
        %2509 = vmatpush1.msra.mxu0 %v2365
        %2510 = vmatprep.subr.mxu0 %v2370
        %2511 = vmatpush1.msra.mxu0 %v2369
        %2512 = vmatprep.subr.mxu0 %v2374
        %2513 = vmatpush1.msra.mxu0 %v2373
        %2514 = vmatprep.subr.mxu0 %v2378
        %2515 = vmatpush1.msra.mxu0 %v2377
        %2516 = vmatprep.subr.mxu0 %v2382
        %2517 = vmatpush1.msra.mxu0 %v2381
        %2518 = vmatprep.subr.mxu0 %v2386
        %2519 = vmatpush1.msra.mxu0 %v2385
        %2520 = vmatprep.subr.mxu0 %v2390
        %2521 = vmatpush1.msra.mxu0 %v2389
        %2522 = vmatprep.subr.mxu0 %v2394
        %2523 = vmatpush1.msra.mxu0 %v2393
        %2524 = vmatprep.subr.mxu0 %v2398
        %2525 = vmatpush1.msra.mxu0 %v2397
        %2526 = vmatprep.subr.mxu0 %v2402
        %2527 = vmatpush1.msra.mxu0 %v2401
        %2528 = vmatprep.subr.mxu0 0.0
        %2529 = vmatpush1.msra.mxu0 0.0
        %2530 = vmatprep.subr.mxu0 0.0
        %2531 = vmatpush1.msra.mxu0 0.0
        %2532 = vmatprep.subr.mxu0 0.0
        %2533 = vmatpush1.msra.mxu0 0.0
        %2534 = vmatprep.subr.mxu0 0.0
        %2535 = vmatpush1.msra.mxu0 0.0
        %2536 = vmatprep.subr.mxu0 0.0
        %2537 = vmatpush1.msra.mxu0 0.0
        %2538 = vmatprep.subr.mxu0 0.0
        %2539 = vmatpush1.msra.mxu0 0.0
        %2540 = vmatprep.subr.mxu0 0.0
        %2541 = vmatpush1.msra.mxu0 0.0
        %2542 = vmatprep.subr.mxu0 0.0
        %2543 = vmatpush1.msra.mxu0 0.0
        %2544 = vmatprep.subr.mxu0 0.0
        %2545 = vmatpush1.msra.mxu0 0.0
        %2546 = vmatprep.subr.mxu0 0.0
        %2547 = vmatpush1.msra.mxu0 0.0
        %2548 = vmatprep.subr.mxu0 0.0
        %2549 = vmatpush1.msra.mxu0 0.0
        %2550 = vmatprep.subr.mxu0 0.0
        %2551 = vmatpush1.msra.mxu0 0.0
        %2552 = vmatprep.subr.mxu0 0.0
        %2553 = vmatpush1.msra.mxu0 0.0
        %2554 = vmatprep.subr.mxu0 0.0
        %2555 = vmatpush1.msra.mxu0 0.0
        %2556 = vmatprep.subr.mxu0 0.0
        %2557 = vmatpush1.msra.mxu0 0.0
        %2558 = vmatprep.subr.mxu0 0.0
        %2559 = vmatpush1.msra.mxu0 0.0
        %2560 = vmatprep.mubr.f32.mxu0 0.0
        %2561 = vmatmul.mubr.f32.gmra.mrb[0].mxu0 %v2338
        %v2562 = vpop.f32.mrb[0].mxu0
        %v2563 = vadd.f32 %v2416, %v2562
        %v2564 = vpop.f32.mrb[0].mxu0
        %v2565 = vadd.f32 %v2420, %v2564
        %2566 = vdwg.mxu0
        %v2567 = vmax.f32 %v2492, 0.0
        %v2568 = vmax.f32 %v2494, 0.0
        %v2569 = vmax.f32 %v2563, 0.0
        %v2570 = vmax.f32 %v2565, 0.0
        %v2571 = vld [vmem:[%s7] sm:$0xff]
        %v2572 = vld [vmem:[%s7 + $0x8] sm:$0xff]
        %v2573 = vld [vmem:[%s7 + $0x10] sm:$0xff]
        %v2574 = vld [vmem:[%s7 + $0x18] sm:$0xff]
        %v2575 = vld [vmem:[%s7 + $0x20] sm:$0xff]
        %v2576 = vld [vmem:[%s7 + $0x28] sm:$0xff]
        %v2577 = vld [vmem:[%s7 + $0x30] sm:$0xff]
        %v2578 = vld [vmem:[%s7 + $0x38] sm:$0xff]
        %v2579 = vld [vmem:[%s7 + $0x40] sm:$0xff]
        %v2580 = vld [vmem:[%s7 + $0x48] sm:$0xff]
        %v2581 = vld [vmem:[%s7 + $0x50] sm:$0xff]
        %v2582 = vld [vmem:[%s7 + $0x58] sm:$0xff]
        %v2583 = vld [vmem:[%s7 + $0x60] sm:$0xff]
        %v2584 = vld [vmem:[%s7 + $0x68] sm:$0xff]
        %v2585 = vld [vmem:[%s7 + $0x70] sm:$0xff]
        %v2586 = vld [vmem:[%s7 + $0x78] sm:$0xff]
        %v2587 = vld [vmem:[%s7 + $0x80] sm:$0xff]
        %v2588 = vld [vmem:[%s7 + $0x88] sm:$0xff]
        %v2589 = vld [vmem:[%s7 + $0x90] sm:$0xff]
        %v2590 = vld [vmem:[%s7 + $0x98] sm:$0xff]
        %v2591 = vld [vmem:[%s7 + $0xa0] sm:$0xff]
        %v2592 = vld [vmem:[%s7 + $0xa8] sm:$0xff]
        %v2593 = vld [vmem:[%s7 + $0xb0] sm:$0xff]
        %v2594 = vld [vmem:[%s7 + $0xb8] sm:$0xff]
        %v2595 = vld [vmem:[%s7 + $0xc0] sm:$0xff]
        %v2596 = vld [vmem:[%s7 + $0xc8] sm:$0xff]
        %v2597 = vld [vmem:[%s7 + $0xd0] sm:$0xff]
        %v2598 = vld [vmem:[%s7 + $0xd8] sm:$0xff]
        %v2599 = vld [vmem:[%s7 + $0xe0] sm:$0xff]
        %v2600 = vld [vmem:[%s7 + $0xe8] sm:$0xff]
        %v2601 = vld [vmem:[%s7 + $0xf0] sm:$0xff]
        %v2602 = vld [vmem:[%s7 + $0xf8] sm:$0xff]
        %v2603 = vld [vmem:[%s7 + $0x100] sm:$0xff]
        %v2604 = vld [vmem:[%s7 + $0x108] sm:$0xff]
        %v2605 = vld [vmem:[%s7 + $0x110] sm:$0xff]
        %v2606 = vld [vmem:[%s7 + $0x118] sm:$0xff]
        %v2607 = vld [vmem:[%s7 + $0x120] sm:$0xff]
        %v2608 = vld [vmem:[%s7 + $0x128] sm:$0xff]
        %v2609 = vld [vmem:[%s7 + $0x130] sm:$0xff]
        %v2610 = vld [vmem:[%s7 + $0x138] sm:$0xff]
        %v2611 = vld [vmem:[%s7 + $0x140] sm:$0xff]
        %v2612 = vld [vmem:[%s7 + $0x148] sm:$0xff]
        %v2613 = vld [vmem:[%s7 + $0x150] sm:$0xff]
        %v2614 = vld [vmem:[%s7 + $0x158] sm:$0xff]
        %v2615 = vld [vmem:[%s7 + $0x160] sm:$0xff]
        %v2616 = vld [vmem:[%s7 + $0x168] sm:$0xff]
        %v2617 = vld [vmem:[%s7 + $0x170] sm:$0xff]
        %v2618 = vld [vmem:[%s7 + $0x178] sm:$0xff]
        %v2619 = vld [vmem:[%s7 + $0x180] sm:$0xff]
        %v2620 = vld [vmem:[%s7 + $0x188] sm:$0xff]
        %v2621 = vld [vmem:[%s7 + $0x190] sm:$0xff]
        %v2622 = vld [vmem:[%s7 + $0x198] sm:$0xff]
        %v2623 = vld [vmem:[%s7 + $0x1a0] sm:$0xff]
        %v2624 = vld [vmem:[%s7 + $0x1a8] sm:$0xff]
        %v2625 = vld [vmem:[%s7 + $0x1b0] sm:$0xff]
        %v2626 = vld [vmem:[%s7 + $0x1b8] sm:$0xff]
        %v2627 = vld [vmem:[%s7 + $0x1c0] sm:$0xff]
        %v2628 = vld [vmem:[%s7 + $0x1c8] sm:$0xff]
        %v2629 = vld [vmem:[%s7 + $0x1d0] sm:$0xff]
        %v2630 = vld [vmem:[%s7 + $0x1d8] sm:$0xff]
        %v2631 = vld [vmem:[%s7 + $0x1e0] sm:$0xff]
        %v2632 = vld [vmem:[%s7 + $0x1e8] sm:$0xff]
        %v2633 = vld [vmem:[%s7 + $0x1f0] sm:$0xff]
        %v2634 = vld [vmem:[%s7 + $0x1f8] sm:$0xff]
        %v2635 = vld [vmem:[%s8] sm:$0x1]
        %v2637 = vlaneseq
        %v2638 = vshrl.u32 %v2637, 7
        %v2639 = vsub.s32 0, %v2638
        %v2640 = vrot.slane %v2635, %v2639
        %2642 = vmatprep.subr.mxu0 0.0
        %2643 = vmatpush1.msra.mxu0 %v2571
        %2644 = vmatprep.subr.mxu0 0.0
        %2645 = vmatpush1.msra.mxu0 %v2572
        %2646 = vmatprep.subr.mxu0 0.0
        %2647 = vmatpush1.msra.mxu0 %v2573
        %2648 = vmatprep.subr.mxu0 0.0
        %2649 = vmatpush1.msra.mxu0 %v2574
        %2650 = vmatprep.subr.mxu0 0.0
        %2651 = vmatpush1.msra.mxu0 %v2575
        %2652 = vmatprep.subr.mxu0 0.0
        %2653 = vmatpush1.msra.mxu0 %v2576
        %2654 = vmatprep.subr.mxu0 0.0
        %2655 = vmatpush1.msra.mxu0 %v2577
        %2656 = vmatprep.subr.mxu0 0.0
        %2657 = vmatpush1.msra.mxu0 %v2578
        %2658 = vmatprep.subr.mxu0 0.0
        %2659 = vmatpush1.msra.mxu0 %v2579
        %2660 = vmatprep.subr.mxu0 0.0
        %2661 = vmatpush1.msra.mxu0 %v2580
        %2662 = vmatprep.subr.mxu0 0.0
        %2663 = vmatpush1.msra.mxu0 %v2581
        %2664 = vmatprep.subr.mxu0 0.0
        %2665 = vmatpush1.msra.mxu0 %v2582
        %2666 = vmatprep.subr.mxu0 0.0
        %2667 = vmatpush1.msra.mxu0 %v2583
        %2668 = vmatprep.subr.mxu0 0.0
        %2669 = vmatpush1.msra.mxu0 %v2584
        %2670 = vmatprep.subr.mxu0 0.0
        %2671 = vmatpush1.msra.mxu0 %v2585
        %2672 = vmatprep.subr.mxu0 0.0
        %2673 = vmatpush1.msra.mxu0 %v2586
        %2674 = vmatprep.subr.mxu0 0.0
        %2675 = vmatpush1.msra.mxu0 %v2587
        %2676 = vmatprep.subr.mxu0 0.0
        %2677 = vmatpush1.msra.mxu0 %v2588
        %2678 = vmatprep.subr.mxu0 0.0
        %2679 = vmatpush1.msra.mxu0 %v2589
        %2680 = vmatprep.subr.mxu0 0.0
        %2681 = vmatpush1.msra.mxu0 %v2590
        %2682 = vmatprep.subr.mxu0 0.0
        %2683 = vmatpush1.msra.mxu0 %v2591
        %2684 = vmatprep.subr.mxu0 0.0
        %2685 = vmatpush1.msra.mxu0 %v2592
        %2686 = vmatprep.subr.mxu0 0.0
        %2687 = vmatpush1.msra.mxu0 %v2593
        %2688 = vmatprep.subr.mxu0 0.0
        %2689 = vmatpush1.msra.mxu0 %v2594
        %2690 = vmatprep.subr.mxu0 0.0
        %2691 = vmatpush1.msra.mxu0 %v2595
        %2692 = vmatprep.subr.mxu0 0.0
        %2693 = vmatpush1.msra.mxu0 %v2596
        %2694 = vmatprep.subr.mxu0 0.0
        %2695 = vmatpush1.msra.mxu0 %v2597
        %2696 = vmatprep.subr.mxu0 0.0
        %2697 = vmatpush1.msra.mxu0 %v2598
        %2698 = vmatprep.subr.mxu0 0.0
        %2699 = vmatpush1.msra.mxu0 %v2599
        %2700 = vmatprep.subr.mxu0 0.0
        %2701 = vmatpush1.msra.mxu0 %v2600
        %2702 = vmatprep.subr.mxu0 0.0
        %2703 = vmatpush1.msra.mxu0 %v2601
        %2704 = vmatprep.subr.mxu0 0.0
        %2705 = vmatpush1.msra.mxu0 %v2602
        %2706 = vmatprep.mubr.f32.mxu0 %v2568
        %2707 = vmatmul.mubr.f32.gmra.mrb[0].mxu0 %v2567
        %v2708 = vpop.f32.mrb[0].mxu0
        %v2709 = vadd.f32 %v2640, %v2708
        %v2710 = vpop.f32.mrb[0].mxu0
        %2711 = vdwg.mxu0
        %2712 = vmatprep.subr.mxu0 0.0
        %2713 = vmatpush1.msra.mxu0 %v2603
        %2714 = vmatprep.subr.mxu0 0.0
        %2715 = vmatpush1.msra.mxu0 %v2604
        %2716 = vmatprep.subr.mxu0 0.0
        %2717 = vmatpush1.msra.mxu0 %v2605
        %2718 = vmatprep.subr.mxu0 0.0
        %2719 = vmatpush1.msra.mxu0 %v2606
        %2720 = vmatprep.subr.mxu0 0.0
        %2721 = vmatpush1.msra.mxu0 %v2607
        %2722 = vmatprep.subr.mxu0 0.0
        %2723 = vmatpush1.msra.mxu0 %v2608
        %2724 = vmatprep.subr.mxu0 0.0
        %2725 = vmatpush1.msra.mxu0 %v2609
        %2726 = vmatprep.subr.mxu0 0.0
        %2727 = vmatpush1.msra.mxu0 %v2610
        %2728 = vmatprep.subr.mxu0 0.0
        %2729 = vmatpush1.msra.mxu0 %v2611
        %2730 = vmatprep.subr.mxu0 0.0
        %2731 = vmatpush1.msra.mxu0 %v2612
        %2732 = vmatprep.subr.mxu0 0.0
        %2733 = vmatpush1.msra.mxu0 %v2613
        %2734 = vmatprep.subr.mxu0 0.0
        %2735 = vmatpush1.msra.mxu0 %v2614
        %2736 = vmatprep.subr.mxu0 0.0
        %2737 = vmatpush1.msra.mxu0 %v2615
        %2738 = vmatprep.subr.mxu0 0.0
        %2739 = vmatpush1.msra.mxu0 %v2616
        %2740 = vmatprep.subr.mxu0 0.0
        %2741 = vmatpush1.msra.mxu0 %v2617
        %2742 = vmatprep.subr.mxu0 0.0
        %2743 = vmatpush1.msra.mxu0 %v2618
        %2744 = vmatprep.subr.mxu0 0.0
        %2745 = vmatpush1.msra.mxu0 %v2619
        %2746 = vmatprep.subr.mxu0 0.0
        %2747 = vmatpush1.msra.mxu0 %v2620
        %2748 = vmatprep.subr.mxu0 0.0
        %2749 = vmatpush1.msra.mxu0 %v2621
        %2750 = vmatprep.subr.mxu0 0.0
        %2751 = vmatpush1.msra.mxu0 %v2622
        %2752 = vmatprep.subr.mxu0 0.0
        %2753 = vmatpush1.msra.mxu0 %v2623
        %2754 = vmatprep.subr.mxu0 0.0
        %2755 = vmatpush1.msra.mxu0 %v2624
        %2756 = vmatprep.subr.mxu0 0.0
        %2757 = vmatpush1.msra.mxu0 %v2625
        %2758 = vmatprep.subr.mxu0 0.0
        %2759 = vmatpush1.msra.mxu0 %v2626
        %2760 = vmatprep.subr.mxu0 0.0
        %2761 = vmatpush1.msra.mxu0 %v2627
        %2762 = vmatprep.subr.mxu0 0.0
        %2763 = vmatpush1.msra.mxu0 %v2628
        %2764 = vmatprep.subr.mxu0 0.0
        %2765 = vmatpush1.msra.mxu0 %v2629
        %2766 = vmatprep.subr.mxu0 0.0
        %2767 = vmatpush1.msra.mxu0 %v2630
        %2768 = vmatprep.subr.mxu0 0.0
        %2769 = vmatpush1.msra.mxu0 %v2631
        %2770 = vmatprep.subr.mxu0 0.0
        %2771 = vmatpush1.msra.mxu0 %v2632
        %2772 = vmatprep.subr.mxu0 0.0
        %2773 = vmatpush1.msra.mxu0 %v2633
        %2774 = vmatprep.subr.mxu0 0.0
        %2775 = vmatpush1.msra.mxu0 %v2634
        %2776 = vmatprep.mubr.f32.mxu0 %v2570
        %2777 = vmatmul.mubr.f32.gmra.mrb[0].mxu0 %v2569
        %v2778 = vpop.f32.mrb[0].mxu0
        %v2779 = vadd.f32 %v2709, %v2778
        %v2780 = vpop.f32.mrb[0].mxu0
        %2781 = vdwg.mxu0
        %v2782 = vadd.f32 %v2338, %v2779
        %2783 = vst [vmem:[%s323] sm:$0xff] %v2782
        %s2784 = sand.u32 %s225, 1
        %s2785 = scalar_lea.sflag [#allocation3], %s2784
        %s2786 = sand.u32 %s225, 1
        %s2787 = smul.addr %s2786, 8
        %s2788 = scalar_lea.vmem [#allocation2], %s2787
        // Predicated region
        $region57: #{tpu_custom_call.1} parent=55 // pred_check
          %p2789 = pneg %p235
        $region58: #{tpu_custom_call.1} parent=55 // pred_check_branch
          %2791 = sbr.rel (%p2789) target = $region60
        $region59: #{tpu_custom_call.1} parent=55 // pred_region
          %s2793 = ssub.s32 128, 128
          %2794 = vsyncadd %s2785, %s2793
          %s2795 = smul.addr %s23, 128
          %s2796 = scalar_lea.hbm %s9, %s2795
          %s2798 = sshll.u32 %s2788, 4
          %s2799 = int_to_ptr.vmem [resolvable:$true] %s2798
          %2801 = dma.vmem_to_hbm [thread:$0]  %s2799, 128, %s2796, %s2785
        $region60: #{tpu_custom_call.1} parent=55 // pred_fallthru
          _
      $region56: #{tpu_custom_call.1} parent=5 // pred_fallthru
        _
      %p2802 = scmp.le.s32.totalorder 2, %s18
      // Predicated region
      $region61: #{tpu_custom_call.1} parent=5 // pred_check
        %p2803 = pneg %p2802
      $region62: #{tpu_custom_call.1} parent=5 // pred_check_branch
        %2805 = sbr.rel (%p2803) target = $region64
      $region63: #{tpu_custom_call.1} parent=5 // pred_region
        %s2806 = ssub.s32 %s18, 2
        // Predicated region
        $region65: #{tpu_custom_call.1} parent=63 // pred_check
          %p2807 = pneg %p241
        $region66: #{tpu_custom_call.1} parent=63 // pred_check_branch
          %2809 = sbr.rel (%p2807) target = $region68
        $region67: #{tpu_custom_call.1} parent=63 // pred_region
          %s2810 = sand.u32 %s226, 1
          %s2811 = scalar_lea.sflag [#allocation3], %s2810
          %s2812 = sand.u32 %s226, 1
          %s2813 = smul.addr %s2812, 8
          %s2814 = scalar_lea.vmem [#allocation2], %s2813
          %2815 = dma.done %s2811, 128
        $region68: #{tpu_custom_call.1} parent=63 // pred_fallthru
          _
      $region64: #{tpu_custom_call.1} parent=5 // pred_fallthru
        _
    $region6: #{tpu_custom_call.1} parent=1 // loop_footer
      %s22 = sadd.s32 1, %s18
    $region7: #{tpu_custom_call.1} parent=1 // loop_footer_branch
      %17 = sbr.rel target = $region3
    $region8: #{tpu_custom_call.1} parent=1 // loop_exit
      _
    %2816 = vsyncpa [#allocation3], 1
    %s2817 = scalar_lea.sflag [#allocation3], 1
    %2818 = vsyncpa %s2817, 1

</llo_original>
